<compile_context>
chip_gen: v7x
topology: tpu7x:2x2x1
jax: 0.10.0
libtpu: 0.0.40
codegen_flags: <defaults>
</compile_context>

<pallas_src>
import jax
import jax.numpy as jnp
from jax.experimental import pallas as pl
from jax.experimental.pallas import tpu as pltpu

INPUT_SIZE = 21
HIDDEN_SIZE = 50
NUM_LAYERS = 3
NUM_CLASS = 1
SEQ_CHANNELS = 5          # BatchNorm1d channels == LSTM sequence length
BN_EPS = 1e-5

NUM_GATES = 4
GATE_PAD = 128            # each gate padded to a full 128-lane vreg
HIDDEN_PAD = 128          # hidden state padded to 128 lanes (extra lanes stay 0)
OUT_PAD = 128             # lane-dense output width (real columns = T)

# Destination gate blocks take source gates in order (i, f, o, g) so the three
# sigmoids are one contiguous slice.  PyTorch source order is (i, f, g, o).
GATE_SRC_ORDER = (0, 1, 3, 2)


def rnn_kernel(x_ref, ablk_ref, gamma_ref, beta_ref,
               wi0_ref, wh0_ref, b0_ref,
               wi1_hbm, wh1_hbm, b1_ref,
               wi2_hbm, wh2_hbm, b2_ref,
               wbig_hbm, bfc_ref,
               out_ref,
               wi1_buf, wh1_buf, wi2_buf, wh2_buf, wbig_buf, dma_sem):
    """Whole forward pass in one invocation (no grid, everything VMEM-resident).

    x_ref:     [T*BP, I]   time-major flattened input (row = t*BP + b, pad rows 0)
    ablk_ref:  [T*BP, T*BP] block-averaging matrix (zero cols for pad rows)
    gamma/beta:[T*BP, 1]   BN affine params repeated per row
    wi0/wh0/b0: layer-0 weights, auto-DMA'd to VMEM
    wi1/wh1/wi2/wh2/wbig: HBM refs (pl.ANY), manually DMA'd into *_buf scratch
    b*:        [1, 4*128] f32   (b_ih + b_hh, zero in padded columns)
    wbig:      [T*128, 128] bf16  block-column fused FC weight
    bfc:       [1, 128] f32
    out_ref:   [BP, 128] f32  (real data in [:B, :T])
    """
    BP = out_ref.shape[0]
    T = SEQ_CHANNELS
    GP = GATE_PAD

    # ---- Kick off later-layer / FC weight DMAs; overlap with BN + layer 0 ----
    cp_wi1 = pltpu.make_async_copy(wi1_hbm, wi1_buf, dma_sem.at[0])
    cp_wh1 = pltpu.make_async_copy(wh1_hbm, wh1_buf, dma_sem.at[1])
    cp_wi2 = pltpu.make_async_copy(wi2_hbm, wi2_buf, dma_sem.at[2])
    cp_wh2 = pltpu.make_async_copy(wh2_hbm, wh2_buf, dma_sem.at[3])
    cp_wbig = pltpu.make_async_copy(wbig_hbm, wbig_buf, dma_sem.at[4])
    for cp in (cp_wi1, cp_wh1, cp_wi2, cp_wh2, cp_wbig):
        cp.start()

    # ---------------- BatchNorm1d (training-mode batch stats) ----------------
    x = x_ref[...]                                            # [T*BP, I] f32
    m1 = jnp.mean(x, axis=1, keepdims=True)                   # per-row mean
    m2 = jnp.mean(x * x, axis=1, keepdims=True)               # per-row E[x^2]
    # Single broadcast matmul: per-channel mean / E[x^2] spread onto all rows.
    stats = jnp.dot(ablk_ref[...], jnp.concatenate([m1, m2], axis=1),
                    preferred_element_type=jnp.float32)       # [T*BP, 2]
    mean_r = stats[:, 0:1]
    var_r = jnp.maximum(stats[:, 1:2] - mean_r * mean_r, 0.0)  # biased variance
    inp = (x - mean_r) * (jax.lax.rsqrt(var_r + BN_EPS) * gamma_ref[...]) \
        + beta_ref[...]
    inp_bf = inp.astype(jnp.bfloat16)

    layer_cfg = (
        (wi0_ref, wh0_ref, b0_ref, ()),
        (wi1_buf, wh1_buf, b1_ref, (cp_wi1, cp_wh1)),
        (wi2_buf, wh2_buf, b2_ref, (cp_wi2, cp_wh2)),
    )

    # ---------------- Stacked LSTM, layer-major ------------------------------
    h_ts = []
    for l, (wi_r, wh_r, b_r, waits) in enumerate(layer_cfg):
        for cp in waits:                                      # weights ready?
            cp.wait()
        wi_l = wi_r[...]                                      # [in, 4*GP] bf16
        wh_l = wh_r[...]                                      # [HP, 4*GP] bf16
        b_l = b_r[...]                                        # [1, 4*GP] f32

        # Hoisted non-recurrent projection for all T steps + single bias bcast.
        proj = jnp.dot(inp_bf, wi_l,
                       preferred_element_type=jnp.float32) + b_l   # [T*BP, 4*GP]

        h = jnp.zeros((BP, HIDDEN_PAD), jnp.float32)
        c = jnp.zeros((BP, HIDDEN_PAD), jnp.float32)
        h_ts = []
        for t in range(T):
            # Only the recurrent matmul sits on the serial chain; the proj
            # slice is an (8,128)-tile-aligned view (rows t*BP .. t*BP+BP).
            gates = proj[t * BP:(t + 1) * BP, :] + jnp.dot(
                h.astype(jnp.bfloat16), wh_l,
                preferred_element_type=jnp.float32)           # [BP, 4*GP]
            # Packed gate order (i, f, o, g): one contiguous sigmoid, one tanh.
            sig = jax.nn.sigmoid(gates[:, 0:3 * GP])
            i_g = sig[:, 0 * GP:1 * GP]
            f_g = sig[:, 1 * GP:2 * GP]
            o_g = sig[:, 2 * GP:3 * GP]
            g_g = jnp.tanh(gates[:, 3 * GP:4 * GP])
            c = f_g * c + i_g * g_g
            h = o_g * jnp.tanh(c)
            h_ts.append(h)

        if l < NUM_LAYERS - 1:
            # Next layer's hoisted GEMM input: value concat of tile-aligned
            # blocks + one bf16 cast (no VMEM staging round-trip).
            inp_bf = jnp.concatenate(h_ts, axis=0).astype(jnp.bfloat16)

    # ---------------- Fused Linear(50->1) + Sigmoid over all time steps ------
    cp_wbig.wait()
    h_all = jnp.concatenate(h_ts, axis=1).astype(jnp.bfloat16)   # [BP, T*HP]
    y = jnp.dot(h_all, wbig_buf[...],
                preferred_element_type=jnp.float32) + bfc_ref[...]   # [BP, 128]
    out_ref[...] = jax.nn.sigmoid(y)        # lane-dense, unmasked store


@jax.jit
def rnn_forward(x, params):
    gamma, beta, lstm, wbig, bfc = params
    B, T, I = x.shape
    BP = ((B + 7) // 8) * 8                 # sublane-aligned rows per timestep

    # Layout plumbing in XLA (outside the kernel): time-major, 8-row padded
    # flattened input, per-row BN params, per-channel block-averaging matrix
    # whose columns for pad rows are zero (stats over real rows only).
    x_tm = jnp.transpose(x, (1, 0, 2))                        # [T, B, I]
    x_pad = jnp.pad(x_tm, ((0, 0), (0, BP - B), (0, 0)))      # [T, BP, I]
    x_cat = x_pad.reshape(T * BP, I)                          # row = t*BP + b

    rows = jnp.arange(T * BP, dtype=jnp.int32)
    ch = rows // BP
    real_col = (rows % BP) < B
    ablk = ((ch[:, None] == ch[None, :]) & real_col[None, :]
            ).astype(jnp.float32) / float(B)
    gamma_rows = jnp.repeat(gamma, BP).reshape(T * BP, 1)
    beta_rows = jnp.repeat(beta, BP).reshape(T * BP, 1)

    vmem = pl.BlockSpec(memory_space=pltpu.MemorySpace.VMEM)
    hbm = pl.BlockSpec(memory_space=pl.ANY)

    flat = [x_cat, ablk, gamma_rows, beta_rows]
    specs = [vmem, vmem, vmem, vmem]
    for l, (wi, wh, b) in enumerate(lstm):
        flat += [wi, wh, b]
        if l == 0:
            specs += [vmem, vmem, vmem]     # layer 0: auto-DMA (needed first)
        else:
            specs += [hbm, hbm, vmem]       # layers 1/2: manual overlapped DMA
    flat += [wbig, bfc]
    specs += [hbm, vmem]

    out2d = pl.pallas_call(
        rnn_kernel,
        out_shape=jax.ShapeDtypeStruct((BP, OUT_PAD), jnp.float32),
        in_specs=specs,
        out_specs=pl.BlockSpec(memory_space=pltpu.MemorySpace.VMEM),
        scratch_shapes=[
            pltpu.VMEM((HIDDEN_PAD, NUM_GATES * GATE_PAD), jnp.bfloat16),  # wi1
            pltpu.VMEM((HIDDEN_PAD, NUM_GATES * GATE_PAD), jnp.bfloat16),  # wh1
            pltpu.VMEM((HIDDEN_PAD, NUM_GATES * GATE_PAD), jnp.bfloat16),  # wi2
            pltpu.VMEM((HIDDEN_PAD, NUM_GATES * GATE_PAD), jnp.bfloat16),  # wh2
            pltpu.VMEM((T * HIDDEN_PAD, OUT_PAD), jnp.bfloat16),           # wbig
            pltpu.SemaphoreType.DMA((5,)),
        ],
    )(*flat)

    return out2d[:B, :T][..., None]                            # [B, T, 1]


def _pack_gate_cols(w_t):
    """[rows, 4*H] (src gate order i,f,g,o) -> [rows, 4*GATE_PAD] in packed
    gate order (i,f,o,g), zero-padded to 128 columns per gate."""
    rows = w_t.shape[0]
    out = jnp.zeros((rows, NUM_GATES * GATE_PAD), w_t.dtype)
    for dst, src in enumerate(GATE_SRC_ORDER):
        out = out.at[:, dst * GATE_PAD:dst * GATE_PAD + HIDDEN_SIZE].set(
            w_t[:, src * HIDDEN_SIZE:(src + 1) * HIDDEN_SIZE])
    return out


def _pad_rows(w, rows):
    return jnp.pad(w, ((0, rows - w.shape[0]), (0, 0)))


def init_params(key):
    """Deterministic parameter init mimicking PyTorch defaults, pre-packed
    into the lane-aligned padded layouts the kernel consumes."""
    bound = 1.0 / (HIDDEN_SIZE ** 0.5)
    keys = jax.random.split(key, 4 * NUM_LAYERS + 2)
    idx = 0
    lstm = []
    for l in range(NUM_LAYERS):
        in_dim = INPUT_SIZE if l == 0 else HIDDEN_SIZE
        w_ih = jax.random.uniform(keys[idx], (4 * HIDDEN_SIZE, in_dim),
                                  jnp.float32, -bound, bound); idx += 1
        w_hh = jax.random.uniform(keys[idx], (4 * HIDDEN_SIZE, HIDDEN_SIZE),
                                  jnp.float32, -bound, bound); idx += 1
        b_ih = jax.random.uniform(keys[idx], (4 * HIDDEN_SIZE,),
                                  jnp.float32, -bound, bound); idx += 1
        b_hh = jax.random.uniform(keys[idx], (4 * HIDDEN_SIZE,),
                                  jnp.float32, -bound, bound); idx += 1

        wi = _pack_gate_cols(jnp.transpose(w_ih))             # [in, 4*GP]
        if l > 0:
            wi = _pad_rows(wi, HIDDEN_PAD)                    # inputs are padded h
        wh = _pad_rows(_pack_gate_cols(jnp.transpose(w_hh)), HIDDEN_PAD)
        b = _pack_gate_cols((b_ih + b_hh)[None, :])           # [1, 4*GP], pad cols 0
        lstm.append((wi.astype(jnp.bfloat16), wh.astype(jnp.bfloat16), b))

    w_fc = jax.random.uniform(keys[idx], (NUM_CLASS, HIDDEN_SIZE),
                              jnp.float32, -bound, bound); idx += 1
    b_fc = jax.random.uniform(keys[idx], (NUM_CLASS,),
                              jnp.float32, -bound, bound); idx += 1

    # Block-column FC weight: out[b, t] = h_t[b, :] @ w_fc + b_fc, columns t
    # only in the first SEQ_CHANNELS of the 128-lane-dense output.
    wfc_col = jnp.zeros((HIDDEN_PAD,), jnp.float32).at[:HIDDEN_SIZE].set(w_fc[0])
    wbig = jnp.zeros((SEQ_CHANNELS * HIDDEN_PAD, OUT_PAD), jnp.float32)
    for t in range(SEQ_CHANNELS):
        wbig = wbig.at[t * HIDDEN_PAD:(t + 1) * HIDDEN_PAD, t].set(wfc_col)

    # BatchNorm1d(5, affine=True) defaults: weight = 1, bias = 0.
    gamma = jnp.ones((SEQ_CHANNELS,), jnp.float32)
    beta = jnp.zeros((SEQ_CHANNELS,), jnp.float32)

    bfc_full = jnp.full((1, OUT_PAD), b_fc[0], jnp.float32)

    return (gamma, beta, lstm, wbig.astype(jnp.bfloat16), bfc_full)


if __name__ == "__main__":
    key = jax.random.PRNGKey(0)
    kx, kp = jax.random.split(key)

    batch = 4
    x = jax.random.normal(kx, (batch, SEQ_CHANNELS, INPUT_SIZE), jnp.float32)
    params = init_params(kp)

    out = jax.block_until_ready(rnn_forward(x, params))

    assert out.shape == (batch, SEQ_CHANNELS, NUM_CLASS), out.shape
    assert bool(jnp.all(jnp.isfinite(out)))
    assert bool(jnp.all((out >= 0.0) & (out <= 1.0)))   # sigmoid output range
    print("KERNEL_OK")
</pallas_src>

<mosaic_0001>
module attributes {stable_mosaic.version = 11 : i64} {
  func.func @rnn_kernel(%arg0: memref<40x21xf32, #tpu.memory_space<vmem>>, %arg1: memref<40x40xf32, #tpu.memory_space<vmem>>, %arg2: memref<40x1xf32, #tpu.memory_space<vmem>>, %arg3: memref<40x1xf32, #tpu.memory_space<vmem>>, %arg4: memref<21x512xbf16, #tpu.memory_space<vmem>>, %arg5: memref<128x512xbf16, #tpu.memory_space<vmem>>, %arg6: memref<1x512xf32, #tpu.memory_space<vmem>>, %arg7: memref<128x512xbf16, #tpu.memory_space<any>>, %arg8: memref<128x512xbf16, #tpu.memory_space<any>>, %arg9: memref<1x512xf32, #tpu.memory_space<vmem>>, %arg10: memref<128x512xbf16, #tpu.memory_space<any>>, %arg11: memref<128x512xbf16, #tpu.memory_space<any>>, %arg12: memref<1x512xf32, #tpu.memory_space<vmem>>, %arg13: memref<640x128xbf16, #tpu.memory_space<any>>, %arg14: memref<1x128xf32, #tpu.memory_space<vmem>>, %arg15: memref<8x128xf32, #tpu.memory_space<vmem>>, %arg16: memref<128x512xbf16, #tpu.memory_space<vmem>>, %arg17: memref<128x512xbf16, #tpu.memory_space<vmem>>, %arg18: memref<128x512xbf16, #tpu.memory_space<vmem>>, %arg19: memref<128x512xbf16, #tpu.memory_space<vmem>>, %arg20: memref<640x128xbf16, #tpu.memory_space<vmem>>, %arg21: memref<5x!tpu.dma_semaphore, #tpu.memory_space<semaphore_mem>>) attributes {dimension_semantics = [], scalar_prefetch = 0 : i64, scratch_operands = 6 : i64, tpu.core_type = #tpu.core_type<tc>} {
    %c0_i32 = arith.constant 0 : i32
    %0 = tpu.memref_slice %arg21[%c0_i32] : memref<5x!tpu.dma_semaphore, #tpu.memory_space<semaphore_mem>> -> memref<1x!tpu.dma_semaphore, #tpu.memory_space<semaphore_mem>>
    %1 = tpu.memref_squeeze %0 : memref<1x!tpu.dma_semaphore, #tpu.memory_space<semaphore_mem>> -> memref<!tpu.dma_semaphore, #tpu.memory_space<semaphore_mem>>
    tpu.enqueue_dma source(%arg7 : memref<128x512xbf16, #tpu.memory_space<any>>) target(%arg16 : memref<128x512xbf16, #tpu.memory_space<vmem>>) target_semaphore(%1 : memref<!tpu.dma_semaphore, #tpu.memory_space<semaphore_mem>>)
    %c1_i32 = arith.constant 1 : i32
    %2 = tpu.memref_slice %arg21[%c1_i32] : memref<5x!tpu.dma_semaphore, #tpu.memory_space<semaphore_mem>> -> memref<1x!tpu.dma_semaphore, #tpu.memory_space<semaphore_mem>>
    %3 = tpu.memref_squeeze %2 : memref<1x!tpu.dma_semaphore, #tpu.memory_space<semaphore_mem>> -> memref<!tpu.dma_semaphore, #tpu.memory_space<semaphore_mem>>
    tpu.enqueue_dma source(%arg8 : memref<128x512xbf16, #tpu.memory_space<any>>) target(%arg17 : memref<128x512xbf16, #tpu.memory_space<vmem>>) target_semaphore(%3 : memref<!tpu.dma_semaphore, #tpu.memory_space<semaphore_mem>>)
    %c2_i32 = arith.constant 2 : i32
    %4 = tpu.memref_slice %arg21[%c2_i32] : memref<5x!tpu.dma_semaphore, #tpu.memory_space<semaphore_mem>> -> memref<1x!tpu.dma_semaphore, #tpu.memory_space<semaphore_mem>>
    %5 = tpu.memref_squeeze %4 : memref<1x!tpu.dma_semaphore, #tpu.memory_space<semaphore_mem>> -> memref<!tpu.dma_semaphore, #tpu.memory_space<semaphore_mem>>
    tpu.enqueue_dma source(%arg10 : memref<128x512xbf16, #tpu.memory_space<any>>) target(%arg18 : memref<128x512xbf16, #tpu.memory_space<vmem>>) target_semaphore(%5 : memref<!tpu.dma_semaphore, #tpu.memory_space<semaphore_mem>>)
    %c3_i32 = arith.constant 3 : i32
    %6 = tpu.memref_slice %arg21[%c3_i32] : memref<5x!tpu.dma_semaphore, #tpu.memory_space<semaphore_mem>> -> memref<1x!tpu.dma_semaphore, #tpu.memory_space<semaphore_mem>>
    %7 = tpu.memref_squeeze %6 : memref<1x!tpu.dma_semaphore, #tpu.memory_space<semaphore_mem>> -> memref<!tpu.dma_semaphore, #tpu.memory_space<semaphore_mem>>
    tpu.enqueue_dma source(%arg11 : memref<128x512xbf16, #tpu.memory_space<any>>) target(%arg19 : memref<128x512xbf16, #tpu.memory_space<vmem>>) target_semaphore(%7 : memref<!tpu.dma_semaphore, #tpu.memory_space<semaphore_mem>>)
    %c4_i32 = arith.constant 4 : i32
    %8 = tpu.memref_slice %arg21[%c4_i32] : memref<5x!tpu.dma_semaphore, #tpu.memory_space<semaphore_mem>> -> memref<1x!tpu.dma_semaphore, #tpu.memory_space<semaphore_mem>>
    %9 = tpu.memref_squeeze %8 : memref<1x!tpu.dma_semaphore, #tpu.memory_space<semaphore_mem>> -> memref<!tpu.dma_semaphore, #tpu.memory_space<semaphore_mem>>
    tpu.enqueue_dma source(%arg13 : memref<640x128xbf16, #tpu.memory_space<any>>) target(%arg20 : memref<640x128xbf16, #tpu.memory_space<vmem>>) target_semaphore(%9 : memref<!tpu.dma_semaphore, #tpu.memory_space<semaphore_mem>>)
    %c0 = arith.constant 0 : index
    %c0_0 = arith.constant 0 : index
    %10 = vector.load %arg0[%c0, %c0_0] : memref<40x21xf32, #tpu.memory_space<vmem>>, vector<40x21xf32>
    %cst = arith.constant dense<0.000000e+00> : vector<40xf32>
    %11 = vector.multi_reduction <add>, %10, %cst [1] : vector<40x21xf32> to vector<40xf32>
    %12 = vector.shape_cast %11 : vector<40xf32> to vector<40x1xf32>
    %cst_1 = arith.constant 2.100000e+01 : f32
    %13 = vector.broadcast %cst_1 : f32 to vector<40x1xf32>
    %14 = arith.divf %12, %13 : vector<40x1xf32>
    %15 = arith.mulf %10, %10 : vector<40x21xf32>
    %cst_2 = arith.constant dense<0.000000e+00> : vector<40xf32>
    %16 = vector.multi_reduction <add>, %15, %cst_2 [1] : vector<40x21xf32> to vector<40xf32>
    %17 = vector.shape_cast %16 : vector<40xf32> to vector<40x1xf32>
    %cst_3 = arith.constant 2.100000e+01 : f32
    %18 = vector.broadcast %cst_3 : f32 to vector<40x1xf32>
    %19 = arith.divf %17, %18 : vector<40x1xf32>
    %c0_4 = arith.constant 0 : index
    %c0_5 = arith.constant 0 : index
    %20 = vector.load %arg1[%c0_4, %c0_5] : memref<40x40xf32, #tpu.memory_space<vmem>>, vector<40x40xf32>
    %21 = tpu.concatenate %14, %19 in 1 : vector<40x1xf32>, vector<40x1xf32> -> vector<40x2xf32>
    %cst_6 = arith.constant dense<0.000000e+00> : vector<40x2xf32>
    %22 = tpu.matmul %20, %21, %cst_6 {dimension_numbers = #tpu.dot_dimension_numbers<[1], [0], [0], [1], [0, 0, 1, 1], [], []>} : vector<40x40xf32>, vector<40x2xf32>, vector<40x2xf32> -> vector<40x2xf32>
    %23 = vector.extract_strided_slice %22 {offsets = [0, 0], sizes = [40, 1], strides = [1, 1]} : vector<40x2xf32> to vector<40x1xf32>
    %24 = vector.extract_strided_slice %22 {offsets = [0, 1], sizes = [40, 1], strides = [1, 1]} : vector<40x2xf32> to vector<40x1xf32>
    %25 = arith.mulf %23, %23 : vector<40x1xf32>
    %26 = arith.subf %24, %25 : vector<40x1xf32>
    %cst_7 = arith.constant 0.000000e+00 : f32
    %27 = vector.broadcast %cst_7 : f32 to vector<40x1xf32>
    %28 = arith.maximumf %26, %27 : vector<40x1xf32>
    %29 = vector.broadcast %23 : vector<40x1xf32> to vector<40x21xf32>
    %30 = arith.subf %10, %29 : vector<40x21xf32>
    %cst_8 = arith.constant 9.99999974E-6 : f32
    %31 = vector.broadcast %cst_8 : f32 to vector<40x1xf32>
    %32 = arith.addf %28, %31 : vector<40x1xf32>
    %33 = math.rsqrt %32 : vector<40x1xf32>
    %c0_9 = arith.constant 0 : index
    %c0_10 = arith.constant 0 : index
    %34 = vector.load %arg2[%c0_9, %c0_10] : memref<40x1xf32, #tpu.memory_space<vmem>>, vector<40x1xf32>
    %35 = arith.mulf %33, %34 : vector<40x1xf32>
    %36 = vector.broadcast %35 : vector<40x1xf32> to vector<40x21xf32>
    %37 = arith.mulf %30, %36 : vector<40x21xf32>
    %c0_11 = arith.constant 0 : index
    %c0_12 = arith.constant 0 : index
    %38 = vector.load %arg3[%c0_11, %c0_12] : memref<40x1xf32, #tpu.memory_space<vmem>>, vector<40x1xf32>
    %39 = vector.broadcast %38 : vector<40x1xf32> to vector<40x21xf32>
    %40 = arith.addf %37, %39 : vector<40x21xf32>
    %41 = arith.truncf %40 : vector<40x21xf32> to vector<40x21xbf16>
    %c0_13 = arith.constant 0 : index
    %c0_14 = arith.constant 0 : index
    %42 = vector.load %arg4[%c0_13, %c0_14] : memref<21x512xbf16, #tpu.memory_space<vmem>>, vector<21x512xbf16>
    %c0_15 = arith.constant 0 : index
    %c0_16 = arith.constant 0 : index
    %43 = vector.load %arg5[%c0_15, %c0_16] : memref<128x512xbf16, #tpu.memory_space<vmem>>, vector<128x512xbf16>
    %c0_17 = arith.constant 0 : index
    %c0_18 = arith.constant 0 : index
    %44 = vector.load %arg6[%c0_17, %c0_18] : memref<1x512xf32, #tpu.memory_space<vmem>>, vector<1x512xf32>
    %cst_19 = arith.constant dense<0.000000e+00> : vector<40x512xf32>
    %45 = tpu.matmul %41, %42, %cst_19 {dimension_numbers = #tpu.dot_dimension_numbers<[1], [0], [0], [1], [0, 0, 1, 1], [], []>} : vector<40x21xbf16>, vector<21x512xbf16>, vector<40x512xf32> -> vector<40x512xf32>
    %46 = vector.broadcast %44 : vector<1x512xf32> to vector<40x512xf32>
    %47 = arith.addf %45, %46 : vector<40x512xf32>
    %cst_20 = arith.constant 0.000000e+00 : f32
    %48 = vector.broadcast %cst_20 : f32 to vector<8x128xf32>
    %cst_21 = arith.constant 0.000000e+00 : f32
    %49 = vector.broadcast %cst_21 : f32 to vector<8x128xf32>
    %50 = vector.extract_strided_slice %47 {offsets = [0, 0], sizes = [8, 512], strides = [1, 1]} : vector<40x512xf32> to vector<8x512xf32>
    %51 = arith.truncf %48 : vector<8x128xf32> to vector<8x128xbf16>
    %cst_22 = arith.constant dense<0.000000e+00> : vector<8x512xf32>
    %52 = tpu.matmul %51, %43, %cst_22 {dimension_numbers = #tpu.dot_dimension_numbers<[1], [0], [0], [1], [0, 0, 1, 1], [], []>} : vector<8x128xbf16>, vector<128x512xbf16>, vector<8x512xf32> -> vector<8x512xf32>
    %53 = arith.addf %50, %52 : vector<8x512xf32>
    %54 = vector.extract_strided_slice %53 {offsets = [0, 0], sizes = [8, 384], strides = [1, 1]} : vector<8x512xf32> to vector<8x384xf32>
    %55 = arith.negf %54 : vector<8x384xf32>
    %56 = math.exp %55 : vector<8x384xf32>
    %cst_23 = arith.constant 1.000000e+00 : f32
    %57 = vector.broadcast %cst_23 : f32 to vector<8x384xf32>
    %58 = arith.addf %57, %56 : vector<8x384xf32>
    %59 = arith.divf %57, %58 : vector<8x384xf32>
    %60 = vector.extract_strided_slice %59 {offsets = [0, 0], sizes = [8, 128], strides = [1, 1]} : vector<8x384xf32> to vector<8x128xf32>
    %61 = vector.extract_strided_slice %59 {offsets = [0, 128], sizes = [8, 128], strides = [1, 1]} : vector<8x384xf32> to vector<8x128xf32>
    %62 = vector.extract_strided_slice %59 {offsets = [0, 256], sizes = [8, 128], strides = [1, 1]} : vector<8x384xf32> to vector<8x128xf32>
    %63 = vector.extract_strided_slice %53 {offsets = [0, 384], sizes = [8, 128], strides = [1, 1]} : vector<8x512xf32> to vector<8x128xf32>
    %64 = math.tanh %63 : vector<8x128xf32>
    %65 = arith.mulf %61, %49 : vector<8x128xf32>
    %66 = arith.mulf %60, %64 : vector<8x128xf32>
    %67 = arith.addf %65, %66 : vector<8x128xf32>
    %68 = math.tanh %67 : vector<8x128xf32>
    %69 = arith.mulf %62, %68 : vector<8x128xf32>
    %70 = vector.extract_strided_slice %47 {offsets = [8, 0], sizes = [8, 512], strides = [1, 1]} : vector<40x512xf32> to vector<8x512xf32>
    %71 = arith.truncf %69 : vector<8x128xf32> to vector<8x128xbf16>
    %cst_24 = arith.constant dense<0.000000e+00> : vector<8x512xf32>
    %72 = tpu.matmul %71, %43, %cst_24 {dimension_numbers = #tpu.dot_dimension_numbers<[1], [0], [0], [1], [0, 0, 1, 1], [], []>} : vector<8x128xbf16>, vector<128x512xbf16>, vector<8x512xf32> -> vector<8x512xf32>
    %73 = arith.addf %70, %72 : vector<8x512xf32>
    %74 = vector.extract_strided_slice %73 {offsets = [0, 0], sizes = [8, 384], strides = [1, 1]} : vector<8x512xf32> to vector<8x384xf32>
    %75 = arith.negf %74 : vector<8x384xf32>
    %76 = math.exp %75 : vector<8x384xf32>
    %cst_25 = arith.constant 1.000000e+00 : f32
    %77 = vector.broadcast %cst_25 : f32 to vector<8x384xf32>
    %78 = arith.addf %77, %76 : vector<8x384xf32>
    %79 = arith.divf %77, %78 : vector<8x384xf32>
    %80 = vector.extract_strided_slice %79 {offsets = [0, 0], sizes = [8, 128], strides = [1, 1]} : vector<8x384xf32> to vector<8x128xf32>
    %81 = vector.extract_strided_slice %79 {offsets = [0, 128], sizes = [8, 128], strides = [1, 1]} : vector<8x384xf32> to vector<8x128xf32>
    %82 = vector.extract_strided_slice %79 {offsets = [0, 256], sizes = [8, 128], strides = [1, 1]} : vector<8x384xf32> to vector<8x128xf32>
    %83 = vector.extract_strided_slice %73 {offsets = [0, 384], sizes = [8, 128], strides = [1, 1]} : vector<8x512xf32> to vector<8x128xf32>
    %84 = math.tanh %83 : vector<8x128xf32>
    %85 = arith.mulf %81, %67 : vector<8x128xf32>
    %86 = arith.mulf %80, %84 : vector<8x128xf32>
    %87 = arith.addf %85, %86 : vector<8x128xf32>
    %88 = math.tanh %87 : vector<8x128xf32>
    %89 = arith.mulf %82, %88 : vector<8x128xf32>
    %90 = vector.extract_strided_slice %47 {offsets = [16, 0], sizes = [8, 512], strides = [1, 1]} : vector<40x512xf32> to vector<8x512xf32>
    %91 = arith.truncf %89 : vector<8x128xf32> to vector<8x128xbf16>
    %cst_26 = arith.constant dense<0.000000e+00> : vector<8x512xf32>
    %92 = tpu.matmul %91, %43, %cst_26 {dimension_numbers = #tpu.dot_dimension_numbers<[1], [0], [0], [1], [0, 0, 1, 1], [], []>} : vector<8x128xbf16>, vector<128x512xbf16>, vector<8x512xf32> -> vector<8x512xf32>
    %93 = arith.addf %90, %92 : vector<8x512xf32>
    %94 = vector.extract_strided_slice %93 {offsets = [0, 0], sizes = [8, 384], strides = [1, 1]} : vector<8x512xf32> to vector<8x384xf32>
    %95 = arith.negf %94 : vector<8x384xf32>
    %96 = math.exp %95 : vector<8x384xf32>
    %cst_27 = arith.constant 1.000000e+00 : f32
    %97 = vector.broadcast %cst_27 : f32 to vector<8x384xf32>
    %98 = arith.addf %97, %96 : vector<8x384xf32>
    %99 = arith.divf %97, %98 : vector<8x384xf32>
    %100 = vector.extract_strided_slice %99 {offsets = [0, 0], sizes = [8, 128], strides = [1, 1]} : vector<8x384xf32> to vector<8x128xf32>
    %101 = vector.extract_strided_slice %99 {offsets = [0, 128], sizes = [8, 128], strides = [1, 1]} : vector<8x384xf32> to vector<8x128xf32>
    %102 = vector.extract_strided_slice %99 {offsets = [0, 256], sizes = [8, 128], strides = [1, 1]} : vector<8x384xf32> to vector<8x128xf32>
    %103 = vector.extract_strided_slice %93 {offsets = [0, 384], sizes = [8, 128], strides = [1, 1]} : vector<8x512xf32> to vector<8x128xf32>
    %104 = math.tanh %103 : vector<8x128xf32>
    %105 = arith.mulf %101, %87 : vector<8x128xf32>
    %106 = arith.mulf %100, %104 : vector<8x128xf32>
    %107 = arith.addf %105, %106 : vector<8x128xf32>
    %108 = math.tanh %107 : vector<8x128xf32>
    %109 = arith.mulf %102, %108 : vector<8x128xf32>
    %110 = vector.extract_strided_slice %47 {offsets = [24, 0], sizes = [8, 512], strides = [1, 1]} : vector<40x512xf32> to vector<8x512xf32>
    %111 = arith.truncf %109 : vector<8x128xf32> to vector<8x128xbf16>
    %cst_28 = arith.constant dense<0.000000e+00> : vector<8x512xf32>
    %112 = tpu.matmul %111, %43, %cst_28 {dimension_numbers = #tpu.dot_dimension_numbers<[1], [0], [0], [1], [0, 0, 1, 1], [], []>} : vector<8x128xbf16>, vector<128x512xbf16>, vector<8x512xf32> -> vector<8x512xf32>
    %113 = arith.addf %110, %112 : vector<8x512xf32>
    %114 = vector.extract_strided_slice %113 {offsets = [0, 0], sizes = [8, 384], strides = [1, 1]} : vector<8x512xf32> to vector<8x384xf32>
    %115 = arith.negf %114 : vector<8x384xf32>
    %116 = math.exp %115 : vector<8x384xf32>
    %cst_29 = arith.constant 1.000000e+00 : f32
    %117 = vector.broadcast %cst_29 : f32 to vector<8x384xf32>
    %118 = arith.addf %117, %116 : vector<8x384xf32>
    %119 = arith.divf %117, %118 : vector<8x384xf32>
    %120 = vector.extract_strided_slice %119 {offsets = [0, 0], sizes = [8, 128], strides = [1, 1]} : vector<8x384xf32> to vector<8x128xf32>
    %121 = vector.extract_strided_slice %119 {offsets = [0, 128], sizes = [8, 128], strides = [1, 1]} : vector<8x384xf32> to vector<8x128xf32>
    %122 = vector.extract_strided_slice %119 {offsets = [0, 256], sizes = [8, 128], strides = [1, 1]} : vector<8x384xf32> to vector<8x128xf32>
    %123 = vector.extract_strided_slice %113 {offsets = [0, 384], sizes = [8, 128], strides = [1, 1]} : vector<8x512xf32> to vector<8x128xf32>
    %124 = math.tanh %123 : vector<8x128xf32>
    %125 = arith.mulf %121, %107 : vector<8x128xf32>
    %126 = arith.mulf %120, %124 : vector<8x128xf32>
    %127 = arith.addf %125, %126 : vector<8x128xf32>
    %128 = math.tanh %127 : vector<8x128xf32>
    %129 = arith.mulf %122, %128 : vector<8x128xf32>
    %130 = vector.extract_strided_slice %47 {offsets = [32, 0], sizes = [8, 512], strides = [1, 1]} : vector<40x512xf32> to vector<8x512xf32>
    %131 = arith.truncf %129 : vector<8x128xf32> to vector<8x128xbf16>
    %cst_30 = arith.constant dense<0.000000e+00> : vector<8x512xf32>
    %132 = tpu.matmul %131, %43, %cst_30 {dimension_numbers = #tpu.dot_dimension_numbers<[1], [0], [0], [1], [0, 0, 1, 1], [], []>} : vector<8x128xbf16>, vector<128x512xbf16>, vector<8x512xf32> -> vector<8x512xf32>
    %133 = arith.addf %130, %132 : vector<8x512xf32>
    %134 = vector.extract_strided_slice %133 {offsets = [0, 0], sizes = [8, 384], strides = [1, 1]} : vector<8x512xf32> to vector<8x384xf32>
    %135 = arith.negf %134 : vector<8x384xf32>
    %136 = math.exp %135 : vector<8x384xf32>
    %cst_31 = arith.constant 1.000000e+00 : f32
    %137 = vector.broadcast %cst_31 : f32 to vector<8x384xf32>
    %138 = arith.addf %137, %136 : vector<8x384xf32>
    %139 = arith.divf %137, %138 : vector<8x384xf32>
    %140 = vector.extract_strided_slice %139 {offsets = [0, 0], sizes = [8, 128], strides = [1, 1]} : vector<8x384xf32> to vector<8x128xf32>
    %141 = vector.extract_strided_slice %139 {offsets = [0, 128], sizes = [8, 128], strides = [1, 1]} : vector<8x384xf32> to vector<8x128xf32>
    %142 = vector.extract_strided_slice %139 {offsets = [0, 256], sizes = [8, 128], strides = [1, 1]} : vector<8x384xf32> to vector<8x128xf32>
    %143 = vector.extract_strided_slice %133 {offsets = [0, 384], sizes = [8, 128], strides = [1, 1]} : vector<8x512xf32> to vector<8x128xf32>
    %144 = math.tanh %143 : vector<8x128xf32>
    %145 = arith.mulf %141, %127 : vector<8x128xf32>
    %146 = arith.mulf %140, %144 : vector<8x128xf32>
    %147 = arith.addf %145, %146 : vector<8x128xf32>
    %148 = math.tanh %147 : vector<8x128xf32>
    %149 = arith.mulf %142, %148 : vector<8x128xf32>
    %150 = tpu.concatenate %69, %89, %109, %129, %149 in 0 : vector<8x128xf32>, vector<8x128xf32>, vector<8x128xf32>, vector<8x128xf32>, vector<8x128xf32> -> vector<40x128xf32>
    %151 = arith.truncf %150 : vector<40x128xf32> to vector<40x128xbf16>
    %c0_i32_32 = arith.constant 0 : i32
    %152 = tpu.memref_slice %arg21[%c0_i32_32] : memref<5x!tpu.dma_semaphore, #tpu.memory_space<semaphore_mem>> -> memref<1x!tpu.dma_semaphore, #tpu.memory_space<semaphore_mem>>
    %153 = tpu.memref_squeeze %152 : memref<1x!tpu.dma_semaphore, #tpu.memory_space<semaphore_mem>> -> memref<!tpu.dma_semaphore, #tpu.memory_space<semaphore_mem>>
    tpu.wait_dma2 semaphore(%153 : memref<!tpu.dma_semaphore, #tpu.memory_space<semaphore_mem>>) src(%arg7 : memref<128x512xbf16, #tpu.memory_space<any>>) dst(%arg16 : memref<128x512xbf16, #tpu.memory_space<vmem>>)
    %c1_i32_33 = arith.constant 1 : i32
    %154 = tpu.memref_slice %arg21[%c1_i32_33] : memref<5x!tpu.dma_semaphore, #tpu.memory_space<semaphore_mem>> -> memref<1x!tpu.dma_semaphore, #tpu.memory_space<semaphore_mem>>
    %155 = tpu.memref_squeeze %154 : memref<1x!tpu.dma_semaphore, #tpu.memory_space<semaphore_mem>> -> memref<!tpu.dma_semaphore, #tpu.memory_space<semaphore_mem>>
    tpu.wait_dma2 semaphore(%155 : memref<!tpu.dma_semaphore, #tpu.memory_space<semaphore_mem>>) src(%arg8 : memref<128x512xbf16, #tpu.memory_space<any>>) dst(%arg17 : memref<128x512xbf16, #tpu.memory_space<vmem>>)
    %c0_34 = arith.constant 0 : index
    %c0_35 = arith.constant 0 : index
    %156 = vector.load %arg16[%c0_34, %c0_35] : memref<128x512xbf16, #tpu.memory_space<vmem>>, vector<128x512xbf16>
    %c0_36 = arith.constant 0 : index
    %c0_37 = arith.constant 0 : index
    %157 = vector.load %arg17[%c0_36, %c0_37] : memref<128x512xbf16, #tpu.memory_space<vmem>>, vector<128x512xbf16>
    %c0_38 = arith.constant 0 : index
    %c0_39 = arith.constant 0 : index
    %158 = vector.load %arg9[%c0_38, %c0_39] : memref<1x512xf32, #tpu.memory_space<vmem>>, vector<1x512xf32>
    %cst_40 = arith.constant dense<0.000000e+00> : vector<40x512xf32>
    %159 = tpu.matmul %151, %156, %cst_40 {dimension_numbers = #tpu.dot_dimension_numbers<[1], [0], [0], [1], [0, 0, 1, 1], [], []>} : vector<40x128xbf16>, vector<128x512xbf16>, vector<40x512xf32> -> vector<40x512xf32>
    %160 = vector.broadcast %158 : vector<1x512xf32> to vector<40x512xf32>
    %161 = arith.addf %159, %160 : vector<40x512xf32>
    %cst_41 = arith.constant 0.000000e+00 : f32
    %162 = vector.broadcast %cst_41 : f32 to vector<8x128xf32>
    %cst_42 = arith.constant 0.000000e+00 : f32
    %163 = vector.broadcast %cst_42 : f32 to vector<8x128xf32>
    %164 = vector.extract_strided_slice %161 {offsets = [0, 0], sizes = [8, 512], strides = [1, 1]} : vector<40x512xf32> to vector<8x512xf32>
    %165 = arith.truncf %162 : vector<8x128xf32> to vector<8x128xbf16>
    %cst_43 = arith.constant dense<0.000000e+00> : vector<8x512xf32>
    %166 = tpu.matmul %165, %157, %cst_43 {dimension_numbers = #tpu.dot_dimension_numbers<[1], [0], [0], [1], [0, 0, 1, 1], [], []>} : vector<8x128xbf16>, vector<128x512xbf16>, vector<8x512xf32> -> vector<8x512xf32>
    %167 = arith.addf %164, %166 : vector<8x512xf32>
    %168 = vector.extract_strided_slice %167 {offsets = [0, 0], sizes = [8, 384], strides = [1, 1]} : vector<8x512xf32> to vector<8x384xf32>
    %169 = arith.negf %168 : vector<8x384xf32>
    %170 = math.exp %169 : vector<8x384xf32>
    %cst_44 = arith.constant 1.000000e+00 : f32
    %171 = vector.broadcast %cst_44 : f32 to vector<8x384xf32>
    %172 = arith.addf %171, %170 : vector<8x384xf32>
    %173 = arith.divf %171, %172 : vector<8x384xf32>
    %174 = vector.extract_strided_slice %173 {offsets = [0, 0], sizes = [8, 128], strides = [1, 1]} : vector<8x384xf32> to vector<8x128xf32>
    %175 = vector.extract_strided_slice %173 {offsets = [0, 128], sizes = [8, 128], strides = [1, 1]} : vector<8x384xf32> to vector<8x128xf32>
    %176 = vector.extract_strided_slice %173 {offsets = [0, 256], sizes = [8, 128], strides = [1, 1]} : vector<8x384xf32> to vector<8x128xf32>
    %177 = vector.extract_strided_slice %167 {offsets = [0, 384], sizes = [8, 128], strides = [1, 1]} : vector<8x512xf32> to vector<8x128xf32>
    %178 = math.tanh %177 : vector<8x128xf32>
    %179 = arith.mulf %175, %163 : vector<8x128xf32>
    %180 = arith.mulf %174, %178 : vector<8x128xf32>
    %181 = arith.addf %179, %180 : vector<8x128xf32>
    %182 = math.tanh %181 : vector<8x128xf32>
    %183 = arith.mulf %176, %182 : vector<8x128xf32>
    %184 = vector.extract_strided_slice %161 {offsets = [8, 0], sizes = [8, 512], strides = [1, 1]} : vector<40x512xf32> to vector<8x512xf32>
    %185 = arith.truncf %183 : vector<8x128xf32> to vector<8x128xbf16>
    %cst_45 = arith.constant dense<0.000000e+00> : vector<8x512xf32>
    %186 = tpu.matmul %185, %157, %cst_45 {dimension_numbers = #tpu.dot_dimension_numbers<[1], [0], [0], [1], [0, 0, 1, 1], [], []>} : vector<8x128xbf16>, vector<128x512xbf16>, vector<8x512xf32> -> vector<8x512xf32>
    %187 = arith.addf %184, %186 : vector<8x512xf32>
    %188 = vector.extract_strided_slice %187 {offsets = [0, 0], sizes = [8, 384], strides = [1, 1]} : vector<8x512xf32> to vector<8x384xf32>
    %189 = arith.negf %188 : vector<8x384xf32>
    %190 = math.exp %189 : vector<8x384xf32>
    %cst_46 = arith.constant 1.000000e+00 : f32
    %191 = vector.broadcast %cst_46 : f32 to vector<8x384xf32>
    %192 = arith.addf %191, %190 : vector<8x384xf32>
    %193 = arith.divf %191, %192 : vector<8x384xf32>
    %194 = vector.extract_strided_slice %193 {offsets = [0, 0], sizes = [8, 128], strides = [1, 1]} : vector<8x384xf32> to vector<8x128xf32>
    %195 = vector.extract_strided_slice %193 {offsets = [0, 128], sizes = [8, 128], strides = [1, 1]} : vector<8x384xf32> to vector<8x128xf32>
    %196 = vector.extract_strided_slice %193 {offsets = [0, 256], sizes = [8, 128], strides = [1, 1]} : vector<8x384xf32> to vector<8x128xf32>
    %197 = vector.extract_strided_slice %187 {offsets = [0, 384], sizes = [8, 128], strides = [1, 1]} : vector<8x512xf32> to vector<8x128xf32>
    %198 = math.tanh %197 : vector<8x128xf32>
    %199 = arith.mulf %195, %181 : vector<8x128xf32>
    %200 = arith.mulf %194, %198 : vector<8x128xf32>
    %201 = arith.addf %199, %200 : vector<8x128xf32>
    %202 = math.tanh %201 : vector<8x128xf32>
    %203 = arith.mulf %196, %202 : vector<8x128xf32>
    %204 = vector.extract_strided_slice %161 {offsets = [16, 0], sizes = [8, 512], strides = [1, 1]} : vector<40x512xf32> to vector<8x512xf32>
    %205 = arith.truncf %203 : vector<8x128xf32> to vector<8x128xbf16>
    %cst_47 = arith.constant dense<0.000000e+00> : vector<8x512xf32>
    %206 = tpu.matmul %205, %157, %cst_47 {dimension_numbers = #tpu.dot_dimension_numbers<[1], [0], [0], [1], [0, 0, 1, 1], [], []>} : vector<8x128xbf16>, vector<128x512xbf16>, vector<8x512xf32> -> vector<8x512xf32>
    %207 = arith.addf %204, %206 : vector<8x512xf32>
    %208 = vector.extract_strided_slice %207 {offsets = [0, 0], sizes = [8, 384], strides = [1, 1]} : vector<8x512xf32> to vector<8x384xf32>
    %209 = arith.negf %208 : vector<8x384xf32>
    %210 = math.exp %209 : vector<8x384xf32>
    %cst_48 = arith.constant 1.000000e+00 : f32
    %211 = vector.broadcast %cst_48 : f32 to vector<8x384xf32>
    %212 = arith.addf %211, %210 : vector<8x384xf32>
    %213 = arith.divf %211, %212 : vector<8x384xf32>
    %214 = vector.extract_strided_slice %213 {offsets = [0, 0], sizes = [8, 128], strides = [1, 1]} : vector<8x384xf32> to vector<8x128xf32>
    %215 = vector.extract_strided_slice %213 {offsets = [0, 128], sizes = [8, 128], strides = [1, 1]} : vector<8x384xf32> to vector<8x128xf32>
    %216 = vector.extract_strided_slice %213 {offsets = [0, 256], sizes = [8, 128], strides = [1, 1]} : vector<8x384xf32> to vector<8x128xf32>
    %217 = vector.extract_strided_slice %207 {offsets = [0, 384], sizes = [8, 128], strides = [1, 1]} : vector<8x512xf32> to vector<8x128xf32>
    %218 = math.tanh %217 : vector<8x128xf32>
    %219 = arith.mulf %215, %201 : vector<8x128xf32>
    %220 = arith.mulf %214, %218 : vector<8x128xf32>
    %221 = arith.addf %219, %220 : vector<8x128xf32>
    %222 = math.tanh %221 : vector<8x128xf32>
    %223 = arith.mulf %216, %222 : vector<8x128xf32>
    %224 = vector.extract_strided_slice %161 {offsets = [24, 0], sizes = [8, 512], strides = [1, 1]} : vector<40x512xf32> to vector<8x512xf32>
    %225 = arith.truncf %223 : vector<8x128xf32> to vector<8x128xbf16>
    %cst_49 = arith.constant dense<0.000000e+00> : vector<8x512xf32>
    %226 = tpu.matmul %225, %157, %cst_49 {dimension_numbers = #tpu.dot_dimension_numbers<[1], [0], [0], [1], [0, 0, 1, 1], [], []>} : vector<8x128xbf16>, vector<128x512xbf16>, vector<8x512xf32> -> vector<8x512xf32>
    %227 = arith.addf %224, %226 : vector<8x512xf32>
    %228 = vector.extract_strided_slice %227 {offsets = [0, 0], sizes = [8, 384], strides = [1, 1]} : vector<8x512xf32> to vector<8x384xf32>
    %229 = arith.negf %228 : vector<8x384xf32>
    %230 = math.exp %229 : vector<8x384xf32>
    %cst_50 = arith.constant 1.000000e+00 : f32
    %231 = vector.broadcast %cst_50 : f32 to vector<8x384xf32>
    %232 = arith.addf %231, %230 : vector<8x384xf32>
    %233 = arith.divf %231, %232 : vector<8x384xf32>
    %234 = vector.extract_strided_slice %233 {offsets = [0, 0], sizes = [8, 128], strides = [1, 1]} : vector<8x384xf32> to vector<8x128xf32>
    %235 = vector.extract_strided_slice %233 {offsets = [0, 128], sizes = [8, 128], strides = [1, 1]} : vector<8x384xf32> to vector<8x128xf32>
    %236 = vector.extract_strided_slice %233 {offsets = [0, 256], sizes = [8, 128], strides = [1, 1]} : vector<8x384xf32> to vector<8x128xf32>
    %237 = vector.extract_strided_slice %227 {offsets = [0, 384], sizes = [8, 128], strides = [1, 1]} : vector<8x512xf32> to vector<8x128xf32>
    %238 = math.tanh %237 : vector<8x128xf32>
    %239 = arith.mulf %235, %221 : vector<8x128xf32>
    %240 = arith.mulf %234, %238 : vector<8x128xf32>
    %241 = arith.addf %239, %240 : vector<8x128xf32>
    %242 = math.tanh %241 : vector<8x128xf32>
    %243 = arith.mulf %236, %242 : vector<8x128xf32>
    %244 = vector.extract_strided_slice %161 {offsets = [32, 0], sizes = [8, 512], strides = [1, 1]} : vector<40x512xf32> to vector<8x512xf32>
    %245 = arith.truncf %243 : vector<8x128xf32> to vector<8x128xbf16>
    %cst_51 = arith.constant dense<0.000000e+00> : vector<8x512xf32>
    %246 = tpu.matmul %245, %157, %cst_51 {dimension_numbers = #tpu.dot_dimension_numbers<[1], [0], [0], [1], [0, 0, 1, 1], [], []>} : vector<8x128xbf16>, vector<128x512xbf16>, vector<8x512xf32> -> vector<8x512xf32>
    %247 = arith.addf %244, %246 : vector<8x512xf32>
    %248 = vector.extract_strided_slice %247 {offsets = [0, 0], sizes = [8, 384], strides = [1, 1]} : vector<8x512xf32> to vector<8x384xf32>
    %249 = arith.negf %248 : vector<8x384xf32>
    %250 = math.exp %249 : vector<8x384xf32>
    %cst_52 = arith.constant 1.000000e+00 : f32
    %251 = vector.broadcast %cst_52 : f32 to vector<8x384xf32>
    %252 = arith.addf %251, %250 : vector<8x384xf32>
    %253 = arith.divf %251, %252 : vector<8x384xf32>
    %254 = vector.extract_strided_slice %253 {offsets = [0, 0], sizes = [8, 128], strides = [1, 1]} : vector<8x384xf32> to vector<8x128xf32>
    %255 = vector.extract_strided_slice %253 {offsets = [0, 128], sizes = [8, 128], strides = [1, 1]} : vector<8x384xf32> to vector<8x128xf32>
    %256 = vector.extract_strided_slice %253 {offsets = [0, 256], sizes = [8, 128], strides = [1, 1]} : vector<8x384xf32> to vector<8x128xf32>
    %257 = vector.extract_strided_slice %247 {offsets = [0, 384], sizes = [8, 128], strides = [1, 1]} : vector<8x512xf32> to vector<8x128xf32>
    %258 = math.tanh %257 : vector<8x128xf32>
    %259 = arith.mulf %255, %241 : vector<8x128xf32>
    %260 = arith.mulf %254, %258 : vector<8x128xf32>
    %261 = arith.addf %259, %260 : vector<8x128xf32>
    %262 = math.tanh %261 : vector<8x128xf32>
    %263 = arith.mulf %256, %262 : vector<8x128xf32>
    %264 = tpu.concatenate %183, %203, %223, %243, %263 in 0 : vector<8x128xf32>, vector<8x128xf32>, vector<8x128xf32>, vector<8x128xf32>, vector<8x128xf32> -> vector<40x128xf32>
    %265 = arith.truncf %264 : vector<40x128xf32> to vector<40x128xbf16>
    %c2_i32_53 = arith.constant 2 : i32
    %266 = tpu.memref_slice %arg21[%c2_i32_53] : memref<5x!tpu.dma_semaphore, #tpu.memory_space<semaphore_mem>> -> memref<1x!tpu.dma_semaphore, #tpu.memory_space<semaphore_mem>>
    %267 = tpu.memref_squeeze %266 : memref<1x!tpu.dma_semaphore, #tpu.memory_space<semaphore_mem>> -> memref<!tpu.dma_semaphore, #tpu.memory_space<semaphore_mem>>
    tpu.wait_dma2 semaphore(%267 : memref<!tpu.dma_semaphore, #tpu.memory_space<semaphore_mem>>) src(%arg10 : memref<128x512xbf16, #tpu.memory_space<any>>) dst(%arg18 : memref<128x512xbf16, #tpu.memory_space<vmem>>)
    %c3_i32_54 = arith.constant 3 : i32
    %268 = tpu.memref_slice %arg21[%c3_i32_54] : memref<5x!tpu.dma_semaphore, #tpu.memory_space<semaphore_mem>> -> memref<1x!tpu.dma_semaphore, #tpu.memory_space<semaphore_mem>>
    %269 = tpu.memref_squeeze %268 : memref<1x!tpu.dma_semaphore, #tpu.memory_space<semaphore_mem>> -> memref<!tpu.dma_semaphore, #tpu.memory_space<semaphore_mem>>
    tpu.wait_dma2 semaphore(%269 : memref<!tpu.dma_semaphore, #tpu.memory_space<semaphore_mem>>) src(%arg11 : memref<128x512xbf16, #tpu.memory_space<any>>) dst(%arg19 : memref<128x512xbf16, #tpu.memory_space<vmem>>)
    %c0_55 = arith.constant 0 : index
    %c0_56 = arith.constant 0 : index
    %270 = vector.load %arg18[%c0_55, %c0_56] : memref<128x512xbf16, #tpu.memory_space<vmem>>, vector<128x512xbf16>
    %c0_57 = arith.constant 0 : index
    %c0_58 = arith.constant 0 : index
    %271 = vector.load %arg19[%c0_57, %c0_58] : memref<128x512xbf16, #tpu.memory_space<vmem>>, vector<128x512xbf16>
    %c0_59 = arith.constant 0 : index
    %c0_60 = arith.constant 0 : index
    %272 = vector.load %arg12[%c0_59, %c0_60] : memref<1x512xf32, #tpu.memory_space<vmem>>, vector<1x512xf32>
    %cst_61 = arith.constant dense<0.000000e+00> : vector<40x512xf32>
    %273 = tpu.matmul %265, %270, %cst_61 {dimension_numbers = #tpu.dot_dimension_numbers<[1], [0], [0], [1], [0, 0, 1, 1], [], []>} : vector<40x128xbf16>, vector<128x512xbf16>, vector<40x512xf32> -> vector<40x512xf32>
    %274 = vector.broadcast %272 : vector<1x512xf32> to vector<40x512xf32>
    %275 = arith.addf %273, %274 : vector<40x512xf32>
    %cst_62 = arith.constant 0.000000e+00 : f32
    %276 = vector.broadcast %cst_62 : f32 to vector<8x128xf32>
    %cst_63 = arith.constant 0.000000e+00 : f32
    %277 = vector.broadcast %cst_63 : f32 to vector<8x128xf32>
    %278 = vector.extract_strided_slice %275 {offsets = [0, 0], sizes = [8, 512], strides = [1, 1]} : vector<40x512xf32> to vector<8x512xf32>
    %279 = arith.truncf %276 : vector<8x128xf32> to vector<8x128xbf16>
    %cst_64 = arith.constant dense<0.000000e+00> : vector<8x512xf32>
    %280 = tpu.matmul %279, %271, %cst_64 {dimension_numbers = #tpu.dot_dimension_numbers<[1], [0], [0], [1], [0, 0, 1, 1], [], []>} : vector<8x128xbf16>, vector<128x512xbf16>, vector<8x512xf32> -> vector<8x512xf32>
    %281 = arith.addf %278, %280 : vector<8x512xf32>
    %282 = vector.extract_strided_slice %281 {offsets = [0, 0], sizes = [8, 384], strides = [1, 1]} : vector<8x512xf32> to vector<8x384xf32>
    %283 = arith.negf %282 : vector<8x384xf32>
    %284 = math.exp %283 : vector<8x384xf32>
    %cst_65 = arith.constant 1.000000e+00 : f32
    %285 = vector.broadcast %cst_65 : f32 to vector<8x384xf32>
    %286 = arith.addf %285, %284 : vector<8x384xf32>
    %287 = arith.divf %285, %286 : vector<8x384xf32>
    %288 = vector.extract_strided_slice %287 {offsets = [0, 0], sizes = [8, 128], strides = [1, 1]} : vector<8x384xf32> to vector<8x128xf32>
    %289 = vector.extract_strided_slice %287 {offsets = [0, 128], sizes = [8, 128], strides = [1, 1]} : vector<8x384xf32> to vector<8x128xf32>
    %290 = vector.extract_strided_slice %287 {offsets = [0, 256], sizes = [8, 128], strides = [1, 1]} : vector<8x384xf32> to vector<8x128xf32>
    %291 = vector.extract_strided_slice %281 {offsets = [0, 384], sizes = [8, 128], strides = [1, 1]} : vector<8x512xf32> to vector<8x128xf32>
    %292 = math.tanh %291 : vector<8x128xf32>
    %293 = arith.mulf %289, %277 : vector<8x128xf32>
    %294 = arith.mulf %288, %292 : vector<8x128xf32>
    %295 = arith.addf %293, %294 : vector<8x128xf32>
    %296 = math.tanh %295 : vector<8x128xf32>
    %297 = arith.mulf %290, %296 : vector<8x128xf32>
    %298 = vector.extract_strided_slice %275 {offsets = [8, 0], sizes = [8, 512], strides = [1, 1]} : vector<40x512xf32> to vector<8x512xf32>
    %299 = arith.truncf %297 : vector<8x128xf32> to vector<8x128xbf16>
    %cst_66 = arith.constant dense<0.000000e+00> : vector<8x512xf32>
    %300 = tpu.matmul %299, %271, %cst_66 {dimension_numbers = #tpu.dot_dimension_numbers<[1], [0], [0], [1], [0, 0, 1, 1], [], []>} : vector<8x128xbf16>, vector<128x512xbf16>, vector<8x512xf32> -> vector<8x512xf32>
    %301 = arith.addf %298, %300 : vector<8x512xf32>
    %302 = vector.extract_strided_slice %301 {offsets = [0, 0], sizes = [8, 384], strides = [1, 1]} : vector<8x512xf32> to vector<8x384xf32>
    %303 = arith.negf %302 : vector<8x384xf32>
    %304 = math.exp %303 : vector<8x384xf32>
    %cst_67 = arith.constant 1.000000e+00 : f32
    %305 = vector.broadcast %cst_67 : f32 to vector<8x384xf32>
    %306 = arith.addf %305, %304 : vector<8x384xf32>
    %307 = arith.divf %305, %306 : vector<8x384xf32>
    %308 = vector.extract_strided_slice %307 {offsets = [0, 0], sizes = [8, 128], strides = [1, 1]} : vector<8x384xf32> to vector<8x128xf32>
    %309 = vector.extract_strided_slice %307 {offsets = [0, 128], sizes = [8, 128], strides = [1, 1]} : vector<8x384xf32> to vector<8x128xf32>
    %310 = vector.extract_strided_slice %307 {offsets = [0, 256], sizes = [8, 128], strides = [1, 1]} : vector<8x384xf32> to vector<8x128xf32>
    %311 = vector.extract_strided_slice %301 {offsets = [0, 384], sizes = [8, 128], strides = [1, 1]} : vector<8x512xf32> to vector<8x128xf32>
    %312 = math.tanh %311 : vector<8x128xf32>
    %313 = arith.mulf %309, %295 : vector<8x128xf32>
    %314 = arith.mulf %308, %312 : vector<8x128xf32>
    %315 = arith.addf %313, %314 : vector<8x128xf32>
    %316 = math.tanh %315 : vector<8x128xf32>
    %317 = arith.mulf %310, %316 : vector<8x128xf32>
    %318 = vector.extract_strided_slice %275 {offsets = [16, 0], sizes = [8, 512], strides = [1, 1]} : vector<40x512xf32> to vector<8x512xf32>
    %319 = arith.truncf %317 : vector<8x128xf32> to vector<8x128xbf16>
    %cst_68 = arith.constant dense<0.000000e+00> : vector<8x512xf32>
    %320 = tpu.matmul %319, %271, %cst_68 {dimension_numbers = #tpu.dot_dimension_numbers<[1], [0], [0], [1], [0, 0, 1, 1], [], []>} : vector<8x128xbf16>, vector<128x512xbf16>, vector<8x512xf32> -> vector<8x512xf32>
    %321 = arith.addf %318, %320 : vector<8x512xf32>
    %322 = vector.extract_strided_slice %321 {offsets = [0, 0], sizes = [8, 384], strides = [1, 1]} : vector<8x512xf32> to vector<8x384xf32>
    %323 = arith.negf %322 : vector<8x384xf32>
    %324 = math.exp %323 : vector<8x384xf32>
    %cst_69 = arith.constant 1.000000e+00 : f32
    %325 = vector.broadcast %cst_69 : f32 to vector<8x384xf32>
    %326 = arith.addf %325, %324 : vector<8x384xf32>
    %327 = arith.divf %325, %326 : vector<8x384xf32>
    %328 = vector.extract_strided_slice %327 {offsets = [0, 0], sizes = [8, 128], strides = [1, 1]} : vector<8x384xf32> to vector<8x128xf32>
    %329 = vector.extract_strided_slice %327 {offsets = [0, 128], sizes = [8, 128], strides = [1, 1]} : vector<8x384xf32> to vector<8x128xf32>
    %330 = vector.extract_strided_slice %327 {offsets = [0, 256], sizes = [8, 128], strides = [1, 1]} : vector<8x384xf32> to vector<8x128xf32>
    %331 = vector.extract_strided_slice %321 {offsets = [0, 384], sizes = [8, 128], strides = [1, 1]} : vector<8x512xf32> to vector<8x128xf32>
    %332 = math.tanh %331 : vector<8x128xf32>
    %333 = arith.mulf %329, %315 : vector<8x128xf32>
    %334 = arith.mulf %328, %332 : vector<8x128xf32>
    %335 = arith.addf %333, %334 : vector<8x128xf32>
    %336 = math.tanh %335 : vector<8x128xf32>
    %337 = arith.mulf %330, %336 : vector<8x128xf32>
    %338 = vector.extract_strided_slice %275 {offsets = [24, 0], sizes = [8, 512], strides = [1, 1]} : vector<40x512xf32> to vector<8x512xf32>
    %339 = arith.truncf %337 : vector<8x128xf32> to vector<8x128xbf16>
    %cst_70 = arith.constant dense<0.000000e+00> : vector<8x512xf32>
    %340 = tpu.matmul %339, %271, %cst_70 {dimension_numbers = #tpu.dot_dimension_numbers<[1], [0], [0], [1], [0, 0, 1, 1], [], []>} : vector<8x128xbf16>, vector<128x512xbf16>, vector<8x512xf32> -> vector<8x512xf32>
    %341 = arith.addf %338, %340 : vector<8x512xf32>
    %342 = vector.extract_strided_slice %341 {offsets = [0, 0], sizes = [8, 384], strides = [1, 1]} : vector<8x512xf32> to vector<8x384xf32>
    %343 = arith.negf %342 : vector<8x384xf32>
    %344 = math.exp %343 : vector<8x384xf32>
    %cst_71 = arith.constant 1.000000e+00 : f32
    %345 = vector.broadcast %cst_71 : f32 to vector<8x384xf32>
    %346 = arith.addf %345, %344 : vector<8x384xf32>
    %347 = arith.divf %345, %346 : vector<8x384xf32>
    %348 = vector.extract_strided_slice %347 {offsets = [0, 0], sizes = [8, 128], strides = [1, 1]} : vector<8x384xf32> to vector<8x128xf32>
    %349 = vector.extract_strided_slice %347 {offsets = [0, 128], sizes = [8, 128], strides = [1, 1]} : vector<8x384xf32> to vector<8x128xf32>
    %350 = vector.extract_strided_slice %347 {offsets = [0, 256], sizes = [8, 128], strides = [1, 1]} : vector<8x384xf32> to vector<8x128xf32>
    %351 = vector.extract_strided_slice %341 {offsets = [0, 384], sizes = [8, 128], strides = [1, 1]} : vector<8x512xf32> to vector<8x128xf32>
    %352 = math.tanh %351 : vector<8x128xf32>
    %353 = arith.mulf %349, %335 : vector<8x128xf32>
    %354 = arith.mulf %348, %352 : vector<8x128xf32>
    %355 = arith.addf %353, %354 : vector<8x128xf32>
    %356 = math.tanh %355 : vector<8x128xf32>
    %357 = arith.mulf %350, %356 : vector<8x128xf32>
    %358 = vector.extract_strided_slice %275 {offsets = [32, 0], sizes = [8, 512], strides = [1, 1]} : vector<40x512xf32> to vector<8x512xf32>
    %359 = arith.truncf %357 : vector<8x128xf32> to vector<8x128xbf16>
    %cst_72 = arith.constant dense<0.000000e+00> : vector<8x512xf32>
    %360 = tpu.matmul %359, %271, %cst_72 {dimension_numbers = #tpu.dot_dimension_numbers<[1], [0], [0], [1], [0, 0, 1, 1], [], []>} : vector<8x128xbf16>, vector<128x512xbf16>, vector<8x512xf32> -> vector<8x512xf32>
    %361 = arith.addf %358, %360 : vector<8x512xf32>
    %362 = vector.extract_strided_slice %361 {offsets = [0, 0], sizes = [8, 384], strides = [1, 1]} : vector<8x512xf32> to vector<8x384xf32>
    %363 = arith.negf %362 : vector<8x384xf32>
    %364 = math.exp %363 : vector<8x384xf32>
    %cst_73 = arith.constant 1.000000e+00 : f32
    %365 = vector.broadcast %cst_73 : f32 to vector<8x384xf32>
    %366 = arith.addf %365, %364 : vector<8x384xf32>
    %367 = arith.divf %365, %366 : vector<8x384xf32>
    %368 = vector.extract_strided_slice %367 {offsets = [0, 0], sizes = [8, 128], strides = [1, 1]} : vector<8x384xf32> to vector<8x128xf32>
    %369 = vector.extract_strided_slice %367 {offsets = [0, 128], sizes = [8, 128], strides = [1, 1]} : vector<8x384xf32> to vector<8x128xf32>
    %370 = vector.extract_strided_slice %367 {offsets = [0, 256], sizes = [8, 128], strides = [1, 1]} : vector<8x384xf32> to vector<8x128xf32>
    %371 = vector.extract_strided_slice %361 {offsets = [0, 384], sizes = [8, 128], strides = [1, 1]} : vector<8x512xf32> to vector<8x128xf32>
    %372 = math.tanh %371 : vector<8x128xf32>
    %373 = arith.mulf %369, %355 : vector<8x128xf32>
    %374 = arith.mulf %368, %372 : vector<8x128xf32>
    %375 = arith.addf %373, %374 : vector<8x128xf32>
    %376 = math.tanh %375 : vector<8x128xf32>
    %377 = arith.mulf %370, %376 : vector<8x128xf32>
    %c4_i32_74 = arith.constant 4 : i32
    %378 = tpu.memref_slice %arg21[%c4_i32_74] : memref<5x!tpu.dma_semaphore, #tpu.memory_space<semaphore_mem>> -> memref<1x!tpu.dma_semaphore, #tpu.memory_space<semaphore_mem>>
    %379 = tpu.memref_squeeze %378 : memref<1x!tpu.dma_semaphore, #tpu.memory_space<semaphore_mem>> -> memref<!tpu.dma_semaphore, #tpu.memory_space<semaphore_mem>>
    tpu.wait_dma2 semaphore(%379 : memref<!tpu.dma_semaphore, #tpu.memory_space<semaphore_mem>>) src(%arg13 : memref<640x128xbf16, #tpu.memory_space<any>>) dst(%arg20 : memref<640x128xbf16, #tpu.memory_space<vmem>>)
    %380 = tpu.concatenate %297, %317, %337, %357, %377 in 1 : vector<8x128xf32>, vector<8x128xf32>, vector<8x128xf32>, vector<8x128xf32>, vector<8x128xf32> -> vector<8x640xf32>
    %381 = arith.truncf %380 : vector<8x640xf32> to vector<8x640xbf16>
    %c0_75 = arith.constant 0 : index
    %c0_76 = arith.constant 0 : index
    %382 = vector.load %arg20[%c0_75, %c0_76] : memref<640x128xbf16, #tpu.memory_space<vmem>>, vector<640x128xbf16>
    %cst_77 = arith.constant dense<0.000000e+00> : vector<8x128xf32>
    %383 = tpu.matmul %381, %382, %cst_77 {dimension_numbers = #tpu.dot_dimension_numbers<[1], [0], [0], [1], [0, 0, 1, 1], [], []>} : vector<8x640xbf16>, vector<640x128xbf16>, vector<8x128xf32> -> vector<8x128xf32>
    %c0_78 = arith.constant 0 : index
    %c0_79 = arith.constant 0 : index
    %384 = vector.load %arg14[%c0_78, %c0_79] : memref<1x128xf32, #tpu.memory_space<vmem>>, vector<1x128xf32>
    %385 = vector.broadcast %384 : vector<1x128xf32> to vector<8x128xf32>
    %386 = arith.addf %383, %385 : vector<8x128xf32>
    %387 = arith.negf %386 : vector<8x128xf32>
    %388 = math.exp %387 : vector<8x128xf32>
    %cst_80 = arith.constant 1.000000e+00 : f32
    %389 = vector.broadcast %cst_80 : f32 to vector<8x128xf32>
    %390 = arith.addf %389, %388 : vector<8x128xf32>
    %391 = arith.divf %389, %390 : vector<8x128xf32>
    %c0_81 = arith.constant 0 : index
    %c0_82 = arith.constant 0 : index
    %392 = vector.load %arg15[%c0_81, %c0_82] : memref<8x128xf32, #tpu.memory_space<vmem>>, vector<8x128xf32>
    tpu.vector_store %arg15[%c0_81, %c0_82], %391 {strides = array<i32>} : memref<8x128xf32, #tpu.memory_space<vmem>>, vector<8x128xf32>,
    return
  }
}

</mosaic_0001>

<llo_original>
// kernel: rnn_forward.1
$region0: #{rnn_forward.1}
  #allocation0 [shape = 'u32[]', space=smem, size = 0x4, offset = 0x4, fixed_abs, tag = 'smem constant byte address 0x4 - core index']
  #allocation1 [shape = 'u32[144,128]{1,0:T(1,128)}', space=vmem, size = 0x12000, scoped, tag = 'internal scratch']
  #allocation2 [shape = 'bf16[128,512]{1,0:T(16,128)(2,1)}', space=vmem, size = 0x20000, scoped, tag = 'scratch operand']
  #allocation3 [shape = 'bf16[128,512]{1,0:T(16,128)(2,1)}', space=vmem, size = 0x20000, scoped, tag = 'scratch operand']
  #allocation4 [shape = 'bf16[128,512]{1,0:T(16,128)(2,1)}', space=vmem, size = 0x20000, scoped, tag = 'scratch operand']
  #allocation5 [shape = 'bf16[128,512]{1,0:T(16,128)(2,1)}', space=vmem, size = 0x20000, scoped, tag = 'scratch operand']
  #allocation6 [shape = 'bf16[640,128]{1,0:T(16,128)(2,1)}', space=vmem, size = 0x28000, scoped, tag = 'scratch operand']
  #allocation7 [shape = 's32[5]{0}', space=sflag, size = 0x14, scoped, tag = 'scratch operand']
  #allocation13 [shape = 's32[]', space=sflag, size = 0x4, offset = 0, fixed_abs, tag = 'sflag constant byte address 0x0 - dummy sync flag']
  #allocation15 [shape = 's32[]', space=sflag, size = 0x4, offset = 0, fixed_abs, tag = 'sflag constant byte address 0x0 - dummy sync flag']
  #allocation17 [shape = 's32[]', space=sflag, size = 0x4, offset = 0, fixed_abs, tag = 'sflag constant byte address 0x0 - dummy sync flag']
  #allocation18 [shape = 's32[]', space=sflag, size = 0x4, offset = 0, fixed_abs, tag = 'sflag constant byte address 0x0 - dummy sync flag']
  #allocation20 [shape = 's32[]', space=sflag, size = 0x4, offset = 0, fixed_abs, tag = 'sflag constant byte address 0x0 - dummy sync flag']
  #allocation21 [shape = 's32[]', space=sflag, size = 0x4, offset = 0, fixed_abs, tag = 'sflag constant byte address 0x0 - dummy sync flag']
  #allocation22 [shape = 'u32[]', space=smem, size = 0x4, offset = 0x44, fixed_abs, tag = 'smem constant byte address 0x44 - assertion arg 0']
  #allocation23 [shape = 'u32[]', space=smem, size = 0x4, offset = 0x48, fixed_abs, tag = 'smem constant byte address 0x48 - assertion arg 1']
  %s0 = inlined_call_operand.vmem [shape: f32[40,21], index: 0, kind: input, shape index: {}]
  %s1 = inlined_call_operand.vmem [shape: f32[40,40], index: 1, kind: input, shape index: {}]
  %s2 = inlined_call_operand.vmem [shape: f32[40,1], index: 2, kind: input, shape index: {}]
  %s3 = inlined_call_operand.vmem [shape: f32[40,1], index: 3, kind: input, shape index: {}]
  %s4 = inlined_call_operand.hbm [shape: bf16[21,512], index: 4, kind: input, shape index: {}]
  %s5 = inlined_call_operand.hbm [shape: bf16[128,512], index: 5, kind: input, shape index: {}]
  %s6 = inlined_call_operand.vmem [shape: f32[1,512], index: 6, kind: input, shape index: {}]
  %s7 = inlined_call_operand.hbm [shape: bf16[128,512], index: 7, kind: input, shape index: {}]
  %s8 = inlined_call_operand.hbm [shape: bf16[128,512], index: 8, kind: input, shape index: {}]
  %s9 = inlined_call_operand.hbm [shape: f32[1,512], index: 9, kind: input, shape index: {}]
  %s10 = inlined_call_operand.vmem [shape: bf16[128,512], index: 10, kind: input, shape index: {}]
  %s11 = inlined_call_operand.hbm [shape: bf16[128,512], index: 11, kind: input, shape index: {}]
  %s12 = inlined_call_operand.vmem [shape: f32[1,512], index: 12, kind: input, shape index: {}]
  %s13 = inlined_call_operand.hbm [shape: bf16[640,128], index: 13, kind: input, shape index: {}]
  %s14 = inlined_call_operand.vmem [shape: f32[1,128], index: 14, kind: input, shape index: {}]
  %s15 = inlined_call_operand.vmem [shape: f32[8,128], index: 15, kind: output, shape index: {}]
  %s16 = sld [smem:[#allocation0]]
  $region103: #{rnn_forward.1} parent=0
    _
  %s18 = ssub.s32 1, %s16
  %s19 = scalar_select 0, %s18, %s16
  $region1: #{rnn_forward.1} parent=0
    #allocation8 [shape = 'u8[24576]{0}', space=vmem, size = 0x6000, scoped, tag = 'input window, operand 4, single buffered']
    #allocation9 [shape = 's32[1]{0}', space=sflag, size = 0x4, scoped, tag = 'scoped memory for rnn_forward.1']
    #allocation10 [shape = 'u8[131072]{0}', space=vmem, size = 0x20000, scoped, tag = 'input window, operand 5, single buffered']
    #allocation11 [shape = 's32[1]{0}', space=sflag, size = 0x4, scoped, tag = 'scoped memory for rnn_forward.1']
    #allocation12 [shape = 'u8[2048]{0}', space=vmem, size = 0x800, scoped, tag = 'input window, operand 9, single buffered']
    #allocation14 [shape = 'u32[9]{0}', space=smem, size = 0x24, scoped, tag = 'DMA stride descriptor']
    #allocation16 [shape = 'u32[9]{0}', space=smem, size = 0x24, scoped, tag = 'DMA stride descriptor']
    #allocation19 [shape = 'u32[9]{0}', space=smem, size = 0x24, scoped, tag = 'DMA stride descriptor']
    %20 = vsyncpa [#allocation9], 0
    %21 = vsyncpa [#allocation11], 0
    // Predicated region
    $region2: #{rnn_forward.1} parent=1 // pred_check
      _
    $region3: #{rnn_forward.1} parent=1 // pred_check_branch
      %23 = sbr.rel (0) target = $region5
    $region4: #{rnn_forward.1} parent=1 // pred_region
      _
    $region5: #{rnn_forward.1} parent=1 // pred_fallthru
      _
    // Predicated region
    $region6: #{rnn_forward.1} parent=1 // pred_check
      _
    $region7: #{rnn_forward.1} parent=1 // pred_check_branch
      %25 = sbr.rel (0) target = $region9
    $region8: #{rnn_forward.1} parent=1 // pred_region
      _
    $region9: #{rnn_forward.1} parent=1 // pred_fallthru
      _
    // Predicated region
    $region10: #{rnn_forward.1} parent=1 // pred_check
      _
    $region11: #{rnn_forward.1} parent=1 // pred_check_branch
      %27 = sbr.rel (0) target = $region13
    $region12: #{rnn_forward.1} parent=1 // pred_region
      _
    $region13: #{rnn_forward.1} parent=1 // pred_fallthru
      _
    // Predicated region
    $region14: #{rnn_forward.1} parent=1 // pred_check
      _
    $region15: #{rnn_forward.1} parent=1 // pred_check_branch
      %29 = sbr.rel (0) target = $region17
    $region16: #{rnn_forward.1} parent=1 // pred_region
      _
    $region17: #{rnn_forward.1} parent=1 // pred_fallthru
      _
    // Predicated region
    $region18: #{rnn_forward.1} parent=1 // pred_check
      _
    $region19: #{rnn_forward.1} parent=1 // pred_check_branch
      %31 = sbr.rel (0) target = $region21
    $region20: #{rnn_forward.1} parent=1 // pred_region
      %s33 = ssub.s32 768, 768
      %34 = vsyncadd [#allocation9], %s33
      %s35 = sshll.u32 [#allocation8], 4
      %s36 = int_to_ptr.vmem [resolvable:$true] %s35
      %41 = dma.hbm_to_vmem [thread:$0]  %s4, 768, %s36, [#allocation9], 256, 256, 16
    $region21: #{rnn_forward.1} parent=1 // pred_fallthru
      _
    // Predicated region
    $region22: #{rnn_forward.1} parent=1 // pred_check
      _
    $region23: #{rnn_forward.1} parent=1 // pred_check_branch
      %43 = sbr.rel (0) target = $region25
    $region24: #{rnn_forward.1} parent=1 // pred_region
      %s45 = ssub.s32 4096, 4096
      %46 = vsyncadd [#allocation11], %s45
      %s47 = sshll.u32 [#allocation10], 4
      %s48 = int_to_ptr.vmem [resolvable:$true] %s47
      %53 = dma.hbm_to_vmem [thread:$0]  %s5, 4096, %s48, [#allocation11], 256, 256, 16
    $region25: #{rnn_forward.1} parent=1 // pred_fallthru
      _
    // Predicated region
    $region26: #{rnn_forward.1} parent=1 // pred_check
      _
    $region27: #{rnn_forward.1} parent=1 // pred_check_branch
      %55 = sbr.rel (0) target = $region29
    $region28: #{rnn_forward.1} parent=1 // pred_region
      _
    $region29: #{rnn_forward.1} parent=1 // pred_fallthru
      _
    // Predicated region
    $region30: #{rnn_forward.1} parent=1 // pred_check
      _
    $region31: #{rnn_forward.1} parent=1 // pred_check_branch
      %57 = sbr.rel (0) target = $region33
    $region32: #{rnn_forward.1} parent=1 // pred_region
      %s59 = ssub.s32 64, 64
      %60 = vsyncadd [#allocation11], %s59
      %s62 = sshll.u32 [#allocation12], 4
      %s63 = int_to_ptr.vmem [resolvable:$true] %s62
      %65 = dma.hbm_to_vmem [thread:$0]  %s9, 64, %s63, [#allocation11]
    $region33: #{rnn_forward.1} parent=1 // pred_fallthru
      _
    // Predicated region
    $region34: #{rnn_forward.1} parent=1 // pred_check
      _
    $region35: #{rnn_forward.1} parent=1 // pred_check_branch
      %67 = sbr.rel (0) target = $region37
    $region36: #{rnn_forward.1} parent=1 // pred_region
      _
    $region37: #{rnn_forward.1} parent=1 // pred_fallthru
      _
    // Predicated region
    $region38: #{rnn_forward.1} parent=1 // pred_check
      _
    $region39: #{rnn_forward.1} parent=1 // pred_check_branch
      %69 = sbr.rel (0) target = $region41
    $region40: #{rnn_forward.1} parent=1 // pred_region
      _
    $region41: #{rnn_forward.1} parent=1 // pred_fallthru
      _
    // Predicated region
    $region42: #{rnn_forward.1} parent=1 // pred_check
      _
    $region43: #{rnn_forward.1} parent=1 // pred_check_branch
      %71 = sbr.rel (0) target = $region45
    $region44: #{rnn_forward.1} parent=1 // pred_region
      %72 = dma.done [#allocation9], 768
    $region45: #{rnn_forward.1} parent=1 // pred_fallthru
      _
    // Predicated region
    $region46: #{rnn_forward.1} parent=1 // pred_check
      _
    $region47: #{rnn_forward.1} parent=1 // pred_check_branch
      %74 = sbr.rel (0) target = $region49
    $region48: #{rnn_forward.1} parent=1 // pred_region
      %75 = dma.done [#allocation11], 4096
    $region49: #{rnn_forward.1} parent=1 // pred_fallthru
      _
    // Predicated region
    $region50: #{rnn_forward.1} parent=1 // pred_check
      _
    $region51: #{rnn_forward.1} parent=1 // pred_check_branch
      %77 = sbr.rel (0) target = $region53
    $region52: #{rnn_forward.1} parent=1 // pred_region
      %78 = dma.done [#allocation11], 64
    $region53: #{rnn_forward.1} parent=1 // pred_fallthru
      _
    %s81 = sshll.u32 1, 14
    %s82 = sxor.u32 4294967295, %s81
    %s84 = sld [smem:[#allocation0]]
    %s85 = sadd.s32 2, %s84
    %s87 = sshll.u32 7, 26
    %s88 = sxor.u32 4294967295, %s87
    %s89 = sand.u32 0, %s88
    %s90 = sshll.u32 %s85, 26
    %s91 = sor.u32 %s89, %s90
    %s92 = sshll.u32 [#allocation2], 4
    %s93 = int_to_ptr.vmem [resolvable:$true] %s92
    %96 = sst [smem:[#allocation14]] 512
    %s97 = scalar_lea.smem [#allocation14], 1
    %98 = sst [smem:[%s97]] 512
    %s99 = scalar_lea.smem [#allocation14], 2
    %100 = sst [smem:[%s99]] 4
    %s101 = scalar_lea.smem [#allocation14], 3
    %102 = sst [smem:[%s101]] 64
    %s103 = scalar_lea.smem [#allocation14], 4
    %104 = sst [smem:[%s103]] 128
    %s105 = scalar_lea.smem [#allocation14], 5
    %106 = sst [smem:[%s105]] 2
    %s107 = scalar_lea.smem [#allocation14], 6
    %108 = sst [smem:[%s107]] 256
    %s109 = scalar_lea.smem [#allocation14], 7
    %110 = sst [smem:[%s109]] 64
    %s111 = scalar_lea.smem [#allocation14], 8
    %112 = sst [smem:[%s111]] 4
    %114 = dma.general %s7, 4096, %s93, [#allocation7], [#allocation13], [#allocation14], %s91, 0
    %s115 = scalar_lea.sflag [#allocation7], 1
    %s117 = sshll.u32 1, 14
    %s118 = sxor.u32 4294967295, %s117
    %s120 = sadd.s32 2, %s84
    %s122 = sshll.u32 7, 26
    %s123 = sxor.u32 4294967295, %s122
    %s124 = sand.u32 0, %s123
    %s125 = sshll.u32 %s120, 26
    %s126 = sor.u32 %s124, %s125
    %s127 = sshll.u32 [#allocation3], 4
    %s128 = int_to_ptr.vmem [resolvable:$true] %s127
    %131 = sst [smem:[#allocation16]] 512
    %s132 = scalar_lea.smem [#allocation16], 1
    %133 = sst [smem:[%s132]] 512
    %s134 = scalar_lea.smem [#allocation16], 2
    %135 = sst [smem:[%s134]] 4
    %s136 = scalar_lea.smem [#allocation16], 3
    %137 = sst [smem:[%s136]] 64
    %s138 = scalar_lea.smem [#allocation16], 4
    %139 = sst [smem:[%s138]] 128
    %s140 = scalar_lea.smem [#allocation16], 5
    %141 = sst [smem:[%s140]] 2
    %s142 = scalar_lea.smem [#allocation16], 6
    %143 = sst [smem:[%s142]] 256
    %s144 = scalar_lea.smem [#allocation16], 7
    %145 = sst [smem:[%s144]] 64
    %s146 = scalar_lea.smem [#allocation16], 8
    %147 = sst [smem:[%s146]] 4
    %149 = dma.general %s8, 4096, %s128, %s115, [#allocation15], [#allocation16], %s126, 0
    %s150 = scalar_lea.sflag [#allocation7], 2
    %p152 = scmp.lt.u32.totalorder 4, 8
    %p153 = pneg %p152
    // Predicated region
    $region54: #{rnn_forward.1} parent=1 // pred_check
      _
    $region55: #{rnn_forward.1} parent=1 // pred_check_branch
      %155 = sbr.rel (%p152) target = $region57
    $region56: #{rnn_forward.1} parent=1 // pred_region
      %s296 = sand.u32 4, 7
      %p297 = scmp.eq.s32.totalorder %s296, 0
      %p298 = pneg %p297
      // Predicated region
      $region69: #{rnn_forward.1} parent=56 // pred_check
        _
      $region70: #{rnn_forward.1} parent=56 // pred_check_branch
        %300 = sbr.rel (%p297) target = $region72
      $region71: #{rnn_forward.1} parent=56 // pred_region
        %s301 = sand.u32 4, 7
        %s302 = ssub.s32 4, %s301
        %s303 = scalar_lea.vmem %s10, %s302
        %s304 = ssub.s32 4, %s301
        %s305 = scalar_lea.vmem [#allocation4], %s304
        loop: start=0, step=1, limit=1
        $region73: #{rnn_forward.1} parent=71 // loop_pre_header
          _
        $region74: #{rnn_forward.1} parent=71 // loop_header
          %s307 = sphi 0, %s311
          %p308 = scmp.ge.s32.totalorder %s307, 1
          %s312 = sphi %s10, %s10
          %s313 = sphi [#allocation4], [#allocation4]
        $region75: #{rnn_forward.1} parent=71 // loop_header_branch
          %310 = sbr.rel (%p308) target = $region79
        $region76: #{rnn_forward.1} parent=71 // loop_body
          _
        $region77: #{rnn_forward.1} parent=71 // loop_footer
          %s311 = sadd.s32 1, %s307
        $region78: #{rnn_forward.1} parent=71 // loop_footer_branch
          %306 = sbr.rel target = $region74
        $region79: #{rnn_forward.1} parent=71 // loop_exit
          _
        %s314 = sshllo.u32 0, %s301
        loop: start=0, step=1, limit=1
        $region80: #{rnn_forward.1} parent=71 // loop_pre_header
          _
        $region81: #{rnn_forward.1} parent=71 // loop_header
          %s316 = sphi 0, %s320
          %p317 = scmp.ge.s32.totalorder %s316, 1
          %s321 = sphi %s303, %s303
          %s322 = sphi %s305, %s305
        $region82: #{rnn_forward.1} parent=71 // loop_header_branch
          %319 = sbr.rel (%p317) target = $region86
        $region83: #{rnn_forward.1} parent=71 // loop_body
          %v323 = vld [vmem:[%s321] sm:%s314]
          %324 = vst [vmem:[%s322] sm:%s314] %v323
          %v325 = vld [vmem:[%s321 + $0x10] sm:%s314]
          %326 = vst [vmem:[%s322 + $0x4] sm:%s314] %v325
          %v327 = vld [vmem:[%s321 + $0x4] sm:%s314]
          %328 = vst [vmem:[%s322 + $0x8] sm:%s314] %v327
          %v329 = vld [vmem:[%s321 + $0x14] sm:%s314]
          %330 = vst [vmem:[%s322 + $0xc] sm:%s314] %v329
          %v331 = vld [vmem:[%s321 + $0x8] sm:%s314]
          %332 = vst [vmem:[%s322 + $0x10] sm:%s314] %v331
          %v333 = vld [vmem:[%s321 + $0x18] sm:%s314]
          %334 = vst [vmem:[%s322 + $0x14] sm:%s314] %v333
          %v335 = vld [vmem:[%s321 + $0xc] sm:%s314]
          %336 = vst [vmem:[%s322 + $0x18] sm:%s314] %v335
          %v337 = vld [vmem:[%s321 + $0x1c] sm:%s314]
          %338 = vst [vmem:[%s322 + $0x1c] sm:%s314] %v337
          %v339 = vld [vmem:[%s321 + $0x20] sm:%s314]
          %340 = vst [vmem:[%s322 + $0x20] sm:%s314] %v339
          %v341 = vld [vmem:[%s321 + $0x30] sm:%s314]
          %342 = vst [vmem:[%s322 + $0x24] sm:%s314] %v341
          %v343 = vld [vmem:[%s321 + $0x24] sm:%s314]
          %344 = vst [vmem:[%s322 + $0x28] sm:%s314] %v343
          %v345 = vld [vmem:[%s321 + $0x34] sm:%s314]
          %346 = vst [vmem:[%s322 + $0x2c] sm:%s314] %v345
          %v347 = vld [vmem:[%s321 + $0x28] sm:%s314]
          %348 = vst [vmem:[%s322 + $0x30] sm:%s314] %v347
          %v349 = vld [vmem:[%s321 + $0x38] sm:%s314]
          %350 = vst [vmem:[%s322 + $0x34] sm:%s314] %v349
          %v351 = vld [vmem:[%s321 + $0x2c] sm:%s314]
          %352 = vst [vmem:[%s322 + $0x38] sm:%s314] %v351
          %v353 = vld [vmem:[%s321 + $0x3c] sm:%s314]
          %354 = vst [vmem:[%s322 + $0x3c] sm:%s314] %v353
          %v355 = vld [vmem:[%s321 + $0x40] sm:%s314]
          %356 = vst [vmem:[%s322 + $0x40] sm:%s314] %v355
          %v357 = vld [vmem:[%s321 + $0x50] sm:%s314]
          %358 = vst [vmem:[%s322 + $0x44] sm:%s314] %v357
          %v359 = vld [vmem:[%s321 + $0x44] sm:%s314]
          %360 = vst [vmem:[%s322 + $0x48] sm:%s314] %v359
          %v361 = vld [vmem:[%s321 + $0x54] sm:%s314]
          %362 = vst [vmem:[%s322 + $0x4c] sm:%s314] %v361
          %v363 = vld [vmem:[%s321 + $0x48] sm:%s314]
          %364 = vst [vmem:[%s322 + $0x50] sm:%s314] %v363
          %v365 = vld [vmem:[%s321 + $0x58] sm:%s314]
          %366 = vst [vmem:[%s322 + $0x54] sm:%s314] %v365
          %v367 = vld [vmem:[%s321 + $0x4c] sm:%s314]
          %368 = vst [vmem:[%s322 + $0x58] sm:%s314] %v367
          %v369 = vld [vmem:[%s321 + $0x5c] sm:%s314]
          %370 = vst [vmem:[%s322 + $0x5c] sm:%s314] %v369
          %v371 = vld [vmem:[%s321 + $0x60] sm:%s314]
          %372 = vst [vmem:[%s322 + $0x60] sm:%s314] %v371
          %v373 = vld [vmem:[%s321 + $0x70] sm:%s314]
          %374 = vst [vmem:[%s322 + $0x64] sm:%s314] %v373
          %v375 = vld [vmem:[%s321 + $0x64] sm:%s314]
          %376 = vst [vmem:[%s322 + $0x68] sm:%s314] %v375
          %v377 = vld [vmem:[%s321 + $0x74] sm:%s314]
          %378 = vst [vmem:[%s322 + $0x6c] sm:%s314] %v377
          %v379 = vld [vmem:[%s321 + $0x68] sm:%s314]
          %380 = vst [vmem:[%s322 + $0x70] sm:%s314] %v379
          %v381 = vld [vmem:[%s321 + $0x78] sm:%s314]
          %382 = vst [vmem:[%s322 + $0x74] sm:%s314] %v381
          %v383 = vld [vmem:[%s321 + $0x6c] sm:%s314]
          %384 = vst [vmem:[%s322 + $0x78] sm:%s314] %v383
          %v385 = vld [vmem:[%s321 + $0x7c] sm:%s314]
          %386 = vst [vmem:[%s322 + $0x7c] sm:%s314] %v385
          %v387 = vld [vmem:[%s321 + $0x80] sm:%s314]
          %388 = vst [vmem:[%s322 + $0x80] sm:%s314] %v387
          %v389 = vld [vmem:[%s321 + $0x90] sm:%s314]
          %390 = vst [vmem:[%s322 + $0x84] sm:%s314] %v389
          %v391 = vld [vmem:[%s321 + $0x84] sm:%s314]
          %392 = vst [vmem:[%s322 + $0x88] sm:%s314] %v391
          %v393 = vld [vmem:[%s321 + $0x94] sm:%s314]
          %394 = vst [vmem:[%s322 + $0x8c] sm:%s314] %v393
          %v395 = vld [vmem:[%s321 + $0x88] sm:%s314]
          %396 = vst [vmem:[%s322 + $0x90] sm:%s314] %v395
          %v397 = vld [vmem:[%s321 + $0x98] sm:%s314]
          %398 = vst [vmem:[%s322 + $0x94] sm:%s314] %v397
          %v399 = vld [vmem:[%s321 + $0x8c] sm:%s314]
          %400 = vst [vmem:[%s322 + $0x98] sm:%s314] %v399
          %v401 = vld [vmem:[%s321 + $0x9c] sm:%s314]
          %402 = vst [vmem:[%s322 + $0x9c] sm:%s314] %v401
          %v403 = vld [vmem:[%s321 + $0xa0] sm:%s314]
          %404 = vst [vmem:[%s322 + $0xa0] sm:%s314] %v403
          %v405 = vld [vmem:[%s321 + $0xb0] sm:%s314]
          %406 = vst [vmem:[%s322 + $0xa4] sm:%s314] %v405
          %v407 = vld [vmem:[%s321 + $0xa4] sm:%s314]
          %408 = vst [vmem:[%s322 + $0xa8] sm:%s314] %v407
          %v409 = vld [vmem:[%s321 + $0xb4] sm:%s314]
          %410 = vst [vmem:[%s322 + $0xac] sm:%s314] %v409
          %v411 = vld [vmem:[%s321 + $0xa8] sm:%s314]
          %412 = vst [vmem:[%s322 + $0xb0] sm:%s314] %v411
          %v413 = vld [vmem:[%s321 + $0xb8] sm:%s314]
          %414 = vst [vmem:[%s322 + $0xb4] sm:%s314] %v413
          %v415 = vld [vmem:[%s321 + $0xac] sm:%s314]
          %416 = vst [vmem:[%s322 + $0xb8] sm:%s314] %v415
          %v417 = vld [vmem:[%s321 + $0xbc] sm:%s314]
          %418 = vst [vmem:[%s322 + $0xbc] sm:%s314] %v417
          %v419 = vld [vmem:[%s321 + $0xc0] sm:%s314]
          %420 = vst [vmem:[%s322 + $0xc0] sm:%s314] %v419
          %v421 = vld [vmem:[%s321 + $0xd0] sm:%s314]
          %422 = vst [vmem:[%s322 + $0xc4] sm:%s314] %v421
          %v423 = vld [vmem:[%s321 + $0xc4] sm:%s314]
          %424 = vst [vmem:[%s322 + $0xc8] sm:%s314] %v423
          %v425 = vld [vmem:[%s321 + $0xd4] sm:%s314]
          %426 = vst [vmem:[%s322 + $0xcc] sm:%s314] %v425
          %v427 = vld [vmem:[%s321 + $0xc8] sm:%s314]
          %428 = vst [vmem:[%s322 + $0xd0] sm:%s314] %v427
          %v429 = vld [vmem:[%s321 + $0xd8] sm:%s314]
          %430 = vst [vmem:[%s322 + $0xd4] sm:%s314] %v429
          %v431 = vld [vmem:[%s321 + $0xcc] sm:%s314]
          %432 = vst [vmem:[%s322 + $0xd8] sm:%s314] %v431
          %v433 = vld [vmem:[%s321 + $0xdc] sm:%s314]
          %434 = vst [vmem:[%s322 + $0xdc] sm:%s314] %v433
          %v435 = vld [vmem:[%s321 + $0xe0] sm:%s314]
          %436 = vst [vmem:[%s322 + $0xe0] sm:%s314] %v435
          %v437 = vld [vmem:[%s321 + $0xf0] sm:%s314]
          %438 = vst [vmem:[%s322 + $0xe4] sm:%s314] %v437
          %v439 = vld [vmem:[%s321 + $0xe4] sm:%s314]
          %440 = vst [vmem:[%s322 + $0xe8] sm:%s314] %v439
          %v441 = vld [vmem:[%s321 + $0xf4] sm:%s314]
          %442 = vst [vmem:[%s322 + $0xec] sm:%s314] %v441
          %v443 = vld [vmem:[%s321 + $0xe8] sm:%s314]
          %444 = vst [vmem:[%s322 + $0xf0] sm:%s314] %v443
          %v445 = vld [vmem:[%s321 + $0xf8] sm:%s314]
          %446 = vst [vmem:[%s322 + $0xf4] sm:%s314] %v445
          %v447 = vld [vmem:[%s321 + $0xec] sm:%s314]
          %448 = vst [vmem:[%s322 + $0xf8] sm:%s314] %v447
          %v449 = vld [vmem:[%s321 + $0xfc] sm:%s314]
          %450 = vst [vmem:[%s322 + $0xfc] sm:%s314] %v449
        $region84: #{rnn_forward.1} parent=71 // loop_footer
          %s320 = sadd.s32 1, %s316
        $region85: #{rnn_forward.1} parent=71 // loop_footer_branch
          %315 = sbr.rel target = $region81
        $region86: #{rnn_forward.1} parent=71 // loop_exit
          _
      $region72: #{rnn_forward.1} parent=56 // pred_fallthru
        _
    $region57: #{rnn_forward.1} parent=1 // pred_fallthru
      _
    // Predicated region
    $region58: #{rnn_forward.1} parent=1 // pred_check
      %p156 = pneg %p152
    $region59: #{rnn_forward.1} parent=1 // pred_check_branch
      %158 = sbr.rel (%p156) target = $region61
    $region60: #{rnn_forward.1} parent=1 // pred_region
      %s159 = sshllo.u32 0, 4
      loop: start=0, step=1, limit=1
      $region62: #{rnn_forward.1} parent=60 // loop_pre_header
        _
      $region63: #{rnn_forward.1} parent=60 // loop_header
        %s161 = sphi 0, %s165
        %p162 = scmp.ge.s32.totalorder %s161, 1
        %s166 = sphi %s10, %s10
        %s167 = sphi [#allocation4], [#allocation4]
      $region64: #{rnn_forward.1} parent=60 // loop_header_branch
        %164 = sbr.rel (%p162) target = $region68
      $region65: #{rnn_forward.1} parent=60 // loop_body
        %v168 = vld [vmem:[%s166] sm:%s159]
        %169 = vst [vmem:[%s167] sm:%s159] %v168
        %v170 = vld [vmem:[%s166 + $0x10] sm:%s159]
        %171 = vst [vmem:[%s167 + $0x4] sm:%s159] %v170
        %v172 = vld [vmem:[%s166 + $0x4] sm:%s159]
        %173 = vst [vmem:[%s167 + $0x8] sm:%s159] %v172
        %v174 = vld [vmem:[%s166 + $0x14] sm:%s159]
        %175 = vst [vmem:[%s167 + $0xc] sm:%s159] %v174
        %v176 = vld [vmem:[%s166 + $0x8] sm:%s159]
        %177 = vst [vmem:[%s167 + $0x10] sm:%s159] %v176
        %v178 = vld [vmem:[%s166 + $0x18] sm:%s159]
        %179 = vst [vmem:[%s167 + $0x14] sm:%s159] %v178
        %v180 = vld [vmem:[%s166 + $0xc] sm:%s159]
        %181 = vst [vmem:[%s167 + $0x18] sm:%s159] %v180
        %v182 = vld [vmem:[%s166 + $0x1c] sm:%s159]
        %183 = vst [vmem:[%s167 + $0x1c] sm:%s159] %v182
        %v184 = vld [vmem:[%s166 + $0x20] sm:%s159]
        %185 = vst [vmem:[%s167 + $0x20] sm:%s159] %v184
        %v186 = vld [vmem:[%s166 + $0x30] sm:%s159]
        %187 = vst [vmem:[%s167 + $0x24] sm:%s159] %v186
        %v188 = vld [vmem:[%s166 + $0x24] sm:%s159]
        %189 = vst [vmem:[%s167 + $0x28] sm:%s159] %v188
        %v190 = vld [vmem:[%s166 + $0x34] sm:%s159]
        %191 = vst [vmem:[%s167 + $0x2c] sm:%s159] %v190
        %v192 = vld [vmem:[%s166 + $0x28] sm:%s159]
        %193 = vst [vmem:[%s167 + $0x30] sm:%s159] %v192
        %v194 = vld [vmem:[%s166 + $0x38] sm:%s159]
        %195 = vst [vmem:[%s167 + $0x34] sm:%s159] %v194
        %v196 = vld [vmem:[%s166 + $0x2c] sm:%s159]
        %197 = vst [vmem:[%s167 + $0x38] sm:%s159] %v196
        %v198 = vld [vmem:[%s166 + $0x3c] sm:%s159]
        %199 = vst [vmem:[%s167 + $0x3c] sm:%s159] %v198
        %v200 = vld [vmem:[%s166 + $0x40] sm:%s159]
        %201 = vst [vmem:[%s167 + $0x40] sm:%s159] %v200
        %v202 = vld [vmem:[%s166 + $0x50] sm:%s159]
        %203 = vst [vmem:[%s167 + $0x44] sm:%s159] %v202
        %v204 = vld [vmem:[%s166 + $0x44] sm:%s159]
        %205 = vst [vmem:[%s167 + $0x48] sm:%s159] %v204
        %v206 = vld [vmem:[%s166 + $0x54] sm:%s159]
        %207 = vst [vmem:[%s167 + $0x4c] sm:%s159] %v206
        %v208 = vld [vmem:[%s166 + $0x48] sm:%s159]
        %209 = vst [vmem:[%s167 + $0x50] sm:%s159] %v208
        %v210 = vld [vmem:[%s166 + $0x58] sm:%s159]
        %211 = vst [vmem:[%s167 + $0x54] sm:%s159] %v210
        %v212 = vld [vmem:[%s166 + $0x4c] sm:%s159]
        %213 = vst [vmem:[%s167 + $0x58] sm:%s159] %v212
        %v214 = vld [vmem:[%s166 + $0x5c] sm:%s159]
        %215 = vst [vmem:[%s167 + $0x5c] sm:%s159] %v214
        %v216 = vld [vmem:[%s166 + $0x60] sm:%s159]
        %217 = vst [vmem:[%s167 + $0x60] sm:%s159] %v216
        %v218 = vld [vmem:[%s166 + $0x70] sm:%s159]
        %219 = vst [vmem:[%s167 + $0x64] sm:%s159] %v218
        %v220 = vld [vmem:[%s166 + $0x64] sm:%s159]
        %221 = vst [vmem:[%s167 + $0x68] sm:%s159] %v220
        %v222 = vld [vmem:[%s166 + $0x74] sm:%s159]
        %223 = vst [vmem:[%s167 + $0x6c] sm:%s159] %v222
        %v224 = vld [vmem:[%s166 + $0x68] sm:%s159]
        %225 = vst [vmem:[%s167 + $0x70] sm:%s159] %v224
        %v226 = vld [vmem:[%s166 + $0x78] sm:%s159]
        %227 = vst [vmem:[%s167 + $0x74] sm:%s159] %v226
        %v228 = vld [vmem:[%s166 + $0x6c] sm:%s159]
        %229 = vst [vmem:[%s167 + $0x78] sm:%s159] %v228
        %v230 = vld [vmem:[%s166 + $0x7c] sm:%s159]
        %231 = vst [vmem:[%s167 + $0x7c] sm:%s159] %v230
        %v232 = vld [vmem:[%s166 + $0x80] sm:%s159]
        %233 = vst [vmem:[%s167 + $0x80] sm:%s159] %v232
        %v234 = vld [vmem:[%s166 + $0x90] sm:%s159]
        %235 = vst [vmem:[%s167 + $0x84] sm:%s159] %v234
        %v236 = vld [vmem:[%s166 + $0x84] sm:%s159]
        %237 = vst [vmem:[%s167 + $0x88] sm:%s159] %v236
        %v238 = vld [vmem:[%s166 + $0x94] sm:%s159]
        %239 = vst [vmem:[%s167 + $0x8c] sm:%s159] %v238
        %v240 = vld [vmem:[%s166 + $0x88] sm:%s159]
        %241 = vst [vmem:[%s167 + $0x90] sm:%s159] %v240
        %v242 = vld [vmem:[%s166 + $0x98] sm:%s159]
        %243 = vst [vmem:[%s167 + $0x94] sm:%s159] %v242
        %v244 = vld [vmem:[%s166 + $0x8c] sm:%s159]
        %245 = vst [vmem:[%s167 + $0x98] sm:%s159] %v244
        %v246 = vld [vmem:[%s166 + $0x9c] sm:%s159]
        %247 = vst [vmem:[%s167 + $0x9c] sm:%s159] %v246
        %v248 = vld [vmem:[%s166 + $0xa0] sm:%s159]
        %249 = vst [vmem:[%s167 + $0xa0] sm:%s159] %v248
        %v250 = vld [vmem:[%s166 + $0xb0] sm:%s159]
        %251 = vst [vmem:[%s167 + $0xa4] sm:%s159] %v250
        %v252 = vld [vmem:[%s166 + $0xa4] sm:%s159]
        %253 = vst [vmem:[%s167 + $0xa8] sm:%s159] %v252
        %v254 = vld [vmem:[%s166 + $0xb4] sm:%s159]
        %255 = vst [vmem:[%s167 + $0xac] sm:%s159] %v254
        %v256 = vld [vmem:[%s166 + $0xa8] sm:%s159]
        %257 = vst [vmem:[%s167 + $0xb0] sm:%s159] %v256
        %v258 = vld [vmem:[%s166 + $0xb8] sm:%s159]
        %259 = vst [vmem:[%s167 + $0xb4] sm:%s159] %v258
        %v260 = vld [vmem:[%s166 + $0xac] sm:%s159]
        %261 = vst [vmem:[%s167 + $0xb8] sm:%s159] %v260
        %v262 = vld [vmem:[%s166 + $0xbc] sm:%s159]
        %263 = vst [vmem:[%s167 + $0xbc] sm:%s159] %v262
        %v264 = vld [vmem:[%s166 + $0xc0] sm:%s159]
        %265 = vst [vmem:[%s167 + $0xc0] sm:%s159] %v264
        %v266 = vld [vmem:[%s166 + $0xd0] sm:%s159]
        %267 = vst [vmem:[%s167 + $0xc4] sm:%s159] %v266
        %v268 = vld [vmem:[%s166 + $0xc4] sm:%s159]
        %269 = vst [vmem:[%s167 + $0xc8] sm:%s159] %v268
        %v270 = vld [vmem:[%s166 + $0xd4] sm:%s159]
        %271 = vst [vmem:[%s167 + $0xcc] sm:%s159] %v270
        %v272 = vld [vmem:[%s166 + $0xc8] sm:%s159]
        %273 = vst [vmem:[%s167 + $0xd0] sm:%s159] %v272
        %v274 = vld [vmem:[%s166 + $0xd8] sm:%s159]
        %275 = vst [vmem:[%s167 + $0xd4] sm:%s159] %v274
        %v276 = vld [vmem:[%s166 + $0xcc] sm:%s159]
        %277 = vst [vmem:[%s167 + $0xd8] sm:%s159] %v276
        %v278 = vld [vmem:[%s166 + $0xdc] sm:%s159]
        %279 = vst [vmem:[%s167 + $0xdc] sm:%s159] %v278
        %v280 = vld [vmem:[%s166 + $0xe0] sm:%s159]
        %281 = vst [vmem:[%s167 + $0xe0] sm:%s159] %v280
        %v282 = vld [vmem:[%s166 + $0xf0] sm:%s159]
        %283 = vst [vmem:[%s167 + $0xe4] sm:%s159] %v282
        %v284 = vld [vmem:[%s166 + $0xe4] sm:%s159]
        %285 = vst [vmem:[%s167 + $0xe8] sm:%s159] %v284
        %v286 = vld [vmem:[%s166 + $0xf4] sm:%s159]
        %287 = vst [vmem:[%s167 + $0xec] sm:%s159] %v286
        %v288 = vld [vmem:[%s166 + $0xe8] sm:%s159]
        %289 = vst [vmem:[%s167 + $0xf0] sm:%s159] %v288
        %v290 = vld [vmem:[%s166 + $0xf8] sm:%s159]
        %291 = vst [vmem:[%s167 + $0xf4] sm:%s159] %v290
        %v292 = vld [vmem:[%s166 + $0xec] sm:%s159]
        %293 = vst [vmem:[%s167 + $0xf8] sm:%s159] %v292
        %v294 = vld [vmem:[%s166 + $0xfc] sm:%s159]
        %295 = vst [vmem:[%s167 + $0xfc] sm:%s159] %v294
      $region66: #{rnn_forward.1} parent=60 // loop_footer
        %s165 = sadd.s32 1, %s161
      $region67: #{rnn_forward.1} parent=60 // loop_footer_branch
        %160 = sbr.rel target = $region63
      $region68: #{rnn_forward.1} parent=60 // loop_exit
        _
    $region61: #{rnn_forward.1} parent=1 // pred_fallthru
      _
    // Predicated region
    $region87: #{rnn_forward.1} parent=1 // pred_check
      _
    $region88: #{rnn_forward.1} parent=1 // pred_check_branch
      %453 = sbr.rel (0) target = $region90
    $region89: #{rnn_forward.1} parent=1 // pred_region
      %454 = vsyncadd %s150, 4096
    $region90: #{rnn_forward.1} parent=1 // pred_fallthru
      _
    %s455 = scalar_lea.sflag [#allocation7], 3
    %s457 = sshll.u32 1, 14
    %s458 = sxor.u32 4294967295, %s457
    %s460 = sadd.s32 2, %s84
    %s462 = sshll.u32 7, 26
    %s463 = sxor.u32 4294967295, %s462
    %s464 = sand.u32 0, %s463
    %s465 = sshll.u32 %s460, 26
    %s466 = sor.u32 %s464, %s465
    %s467 = sshll.u32 [#allocation5], 4
    %s468 = int_to_ptr.vmem [resolvable:$true] %s467
    %471 = sst [smem:[#allocation19]] 512
    %s472 = scalar_lea.smem [#allocation19], 1
    %473 = sst [smem:[%s472]] 512
    %s474 = scalar_lea.smem [#allocation19], 2
    %475 = sst [smem:[%s474]] 4
    %s476 = scalar_lea.smem [#allocation19], 3
    %477 = sst [smem:[%s476]] 64
    %s478 = scalar_lea.smem [#allocation19], 4
    %479 = sst [smem:[%s478]] 128
    %s480 = scalar_lea.smem [#allocation19], 5
    %481 = sst [smem:[%s480]] 2
    %s482 = scalar_lea.smem [#allocation19], 6
    %483 = sst [smem:[%s482]] 256
    %s484 = scalar_lea.smem [#allocation19], 7
    %485 = sst [smem:[%s484]] 64
    %s486 = scalar_lea.smem [#allocation19], 8
    %487 = sst [smem:[%s486]] 4
    %489 = dma.general %s11, 4096, %s468, %s455, [#allocation18], [#allocation19], %s466, 0
    %s490 = scalar_lea.sflag [#allocation7], 4
    // Predicated region
    $region91: #{rnn_forward.1} parent=1 // pred_check
      _
    $region92: #{rnn_forward.1} parent=1 // pred_check_branch
      %492 = sbr.rel target = $region94
    $region93: #{rnn_forward.1} parent=1 // pred_region
      %493 = sst [smem:[#allocation22]] [#allocation21]
      %494 = sst [smem:[#allocation23]] [#allocation20]
    $region94: #{rnn_forward.1} parent=1 // pred_fallthru
      _
    %496 = shalt.err (0)
    %s498 = sshll.u32 [#allocation6], 4
    %s499 = int_to_ptr.vmem [resolvable:$true] %s498
    %501 = dma.hbm_to_vmem [thread:$0]  %s13, 5120, %s499, %s490
    %v502 = vld [vmem:[%s0] sm:$0xff]
    %v503 = vld [vmem:[%s0 + $0x8] sm:$0xff]
    %v504 = vld [vmem:[%s0 + $0x10] sm:$0xff]
    %v505 = vld [vmem:[%s0 + $0x18] sm:$0xff]
    %v506 = vld [vmem:[%s0 + $0x20] sm:$0xff]
    %vm507 = vcmask 171008
    %v508 = vsel %vm507, %v502, 0.0
    %509 = vadd.xlane.f32.xlu0 %v508
    %v510 = vpop.xlane.xlu0 %509
    %v511 = vsel %vm507, %v503, 0.0
    %512 = vadd.xlane.f32.xlu0 %v511
    %v513 = vpop.xlane.xlu0 %512
    %v514 = vsel %vm507, %v504, 0.0
    %515 = vadd.xlane.f32.xlu0 %v514
    %v516 = vpop.xlane.xlu0 %515
    %v517 = vsel %vm507, %v505, 0.0
    %518 = vadd.xlane.f32.xlu0 %v517
    %v519 = vpop.xlane.xlu0 %518
    %v520 = vsel %vm507, %v506, 0.0
    %521 = vadd.xlane.f32.xlu0 %v520
    %v522 = vpop.xlane.xlu0 %521
    %v523 = vrcp.pop 21.0
    %v524 = vmul.f32 %v510, %v523
    %v525 = vmul.f32 %v513, %v523
    %v526 = vmul.f32 %v516, %v523
    %v527 = vmul.f32 %v519, %v523
    %v528 = vmul.f32 %v522, %v523
    %v529 = vmul.f32 %v502, %v502
    %v530 = vmul.f32 %v503, %v503
    %v531 = vmul.f32 %v504, %v504
    %v532 = vmul.f32 %v505, %v505
    %v533 = vmul.f32 %v506, %v506
    %v534 = vsel %vm507, %v529, 0.0
    %535 = vadd.xlane.f32.xlu0 %v534
    %v536 = vpop.xlane.xlu0 %535
    %v537 = vsel %vm507, %v530, 0.0
    %538 = vadd.xlane.f32.xlu0 %v537
    %v539 = vpop.xlane.xlu0 %538
    %v540 = vsel %vm507, %v531, 0.0
    %541 = vadd.xlane.f32.xlu0 %v540
    %v542 = vpop.xlane.xlu0 %541
    %v543 = vsel %vm507, %v532, 0.0
    %544 = vadd.xlane.f32.xlu0 %v543
    %v545 = vpop.xlane.xlu0 %544
    %v546 = vsel %vm507, %v533, 0.0
    %547 = vadd.xlane.f32.xlu0 %v546
    %v548 = vpop.xlane.xlu0 %547
    %v549 = vmul.f32 %v536, %v523
    %v550 = vmul.f32 %v539, %v523
    %v551 = vmul.f32 %v542, %v523
    %v552 = vmul.f32 %v545, %v523
    %v553 = vmul.f32 %v548, %v523
    %v554 = vld [vmem:[%s1] sm:$0xff]
    %v555 = vld [vmem:[%s1 + $0x8] sm:$0xff]
    %v556 = vld [vmem:[%s1 + $0x10] sm:$0xff]
    %v557 = vld [vmem:[%s1 + $0x18] sm:$0xff]
    %v558 = vld [vmem:[%s1 + $0x20] sm:$0xff]
    %vm559 = vcmask 7168
    %v560 = vsel %vm559, %v524, %v549
    %v561 = vsel %vm559, %v525, %v550
    %v562 = vsel %vm559, %v526, %v551
    %v563 = vsel %vm559, %v527, %v552
    %v564 = vsel %vm559, %v528, %v553
    %vm565 = vcmask 326656
    %v567 = vsel %vm565, %v554, 0
    %v570 = vsel %vm565, %v555, 0
    %v573 = vsel %vm565, %v556, 0
    %v576 = vsel %vm565, %v557, 0
    %v579 = vsel %vm565, %v558, 0
    %581 = vmatprep.subr.mxu0 0.0
    %582 = vmatpush1.msra.mxu0 %v560
    %583 = vmatprep.subr.mxu0 0.0
    %584 = vmatpush1.msra.mxu0 %v561
    %585 = vmatprep.subr.mxu0 0.0
    %586 = vmatpush1.msra.mxu0 %v562
    %587 = vmatprep.subr.mxu0 0.0
    %588 = vmatpush1.msra.mxu0 %v563
    %589 = vmatprep.subr.mxu0 0.0
    %590 = vmatpush1.msra.mxu0 %v564
    %591 = vmatprep.subr.mxu0 0.0
    %592 = vmatpush1.msra.mxu0 0.0
    %593 = vmatprep.subr.mxu0 0.0
    %594 = vmatpush1.msra.mxu0 0.0
    %595 = vmatprep.subr.mxu0 0.0
    %596 = vmatpush1.msra.mxu0 0.0
    %597 = vmatprep.subr.mxu0 0.0
    %598 = vmatpush1.msra.mxu0 0.0
    %599 = vmatprep.subr.mxu0 0.0
    %600 = vmatpush1.msra.mxu0 0.0
    %601 = vmatprep.subr.mxu0 0.0
    %602 = vmatpush1.msra.mxu0 0.0
    %603 = vmatprep.subr.mxu0 0.0
    %604 = vmatpush1.msra.mxu0 0.0
    %605 = vmatprep.subr.mxu0 0.0
    %606 = vmatpush1.msra.mxu0 0.0
    %607 = vmatprep.subr.mxu0 0.0
    %608 = vmatpush1.msra.mxu0 0.0
    %609 = vmatprep.subr.mxu0 0.0
    %610 = vmatpush1.msra.mxu0 0.0
    %611 = vmatprep.subr.mxu0 0.0
    %612 = vmatpush1.msra.mxu0 0.0
    %613 = vmatprep.subr.mxu0 0.0
    %614 = vmatpush1.msra.mxu0 0.0
    %615 = vmatprep.subr.mxu0 0.0
    %616 = vmatpush1.msra.mxu0 0.0
    %617 = vmatprep.subr.mxu0 0.0
    %618 = vmatpush1.msra.mxu0 0.0
    %619 = vmatprep.subr.mxu0 0.0
    %620 = vmatpush1.msra.mxu0 0.0
    %621 = vmatprep.subr.mxu0 0.0
    %622 = vmatpush1.msra.mxu0 0.0
    %623 = vmatprep.subr.mxu0 0.0
    %624 = vmatpush1.msra.mxu0 0.0
    %625 = vmatprep.subr.mxu0 0.0
    %626 = vmatpush1.msra.mxu0 0.0
    %627 = vmatprep.subr.mxu0 0.0
    %628 = vmatpush1.msra.mxu0 0.0
    %629 = vmatprep.subr.mxu0 0.0
    %630 = vmatpush1.msra.mxu0 0.0
    %631 = vmatprep.subr.mxu0 0.0
    %632 = vmatpush1.msra.mxu0 0.0
    %633 = vmatprep.subr.mxu0 0.0
    %634 = vmatpush1.msra.mxu0 0.0
    %635 = vmatprep.subr.mxu0 0.0
    %636 = vmatpush1.msra.mxu0 0.0
    %637 = vmatprep.subr.mxu0 0.0
    %638 = vmatpush1.msra.mxu0 0.0
    %639 = vmatprep.subr.mxu0 0.0
    %640 = vmatpush1.msra.mxu0 0.0
    %641 = vmatprep.subr.mxu0 0.0
    %642 = vmatpush1.msra.mxu0 0.0
    %643 = vmatprep.subr.mxu0 0.0
    %644 = vmatpush1.msra.mxu0 0.0
    %645 = vmatprep.mubr.f32.mxu0 0.0
    %646 = vmatmul.mubr.f32.gmra.mrb[0].mxu0 %v567
    %v647 = vpop.f32.mrb[0].mxu0
    %v648 = vadd.f32 0.0, %v647
    %v649 = vpop.f32.mrb[0].mxu0
    %650 = vmatprep.mubr.f32.mxu0 0.0
    %651 = vmatmul.mubr.f32.gmra.mrb[0].mxu0 %v570
    %v652 = vpop.f32.mrb[0].mxu0
    %v653 = vadd.f32 0.0, %v652
    %v654 = vpop.f32.mrb[0].mxu0
    %655 = vmatprep.mubr.f32.mxu0 0.0
    %656 = vmatmul.mubr.f32.gmra.mrb[0].mxu0 %v573
    %v657 = vpop.f32.mrb[0].mxu0
    %v658 = vadd.f32 0.0, %v657
    %v659 = vpop.f32.mrb[0].mxu0
    %660 = vmatprep.mubr.f32.mxu0 0.0
    %661 = vmatmul.mubr.f32.gmra.mrb[0].mxu0 %v576
    %v662 = vpop.f32.mrb[0].mxu0
    %v663 = vadd.f32 0.0, %v662
    %v664 = vpop.f32.mrb[0].mxu0
    %665 = vmatprep.mubr.f32.mxu0 0.0
    %666 = vmatmul.mubr.f32.gmra.mrb[0].mxu0 %v579
    %v667 = vpop.f32.mrb[0].mxu0
    %v668 = vadd.f32 0.0, %v667
    %v669 = vpop.f32.mrb[0].mxu0
    %670 = vdwg.mxu0
    %v671 = vmul.f32 %v648, %v648
    %v672 = vmul.f32 %v653, %v653
    %v673 = vmul.f32 %v658, %v658
    %v674 = vmul.f32 %v663, %v663
    %v675 = vmul.f32 %v668, %v668
    %681 = vrot.lane.b32.xlu0 %v671, 1
    %v682 = vpop.permute.xlu0 %681
    %683 = vrot.lane.b32.xlu0 %v672, 1
    %v684 = vpop.permute.xlu0 %683
    %685 = vrot.lane.b32.xlu0 %v673, 1
    %v686 = vpop.permute.xlu0 %685
    %687 = vrot.lane.b32.xlu0 %v674, 1
    %v688 = vpop.permute.xlu0 %687
    %689 = vrot.lane.b32.xlu0 %v675, 1
    %v690 = vpop.permute.xlu0 %689
    %v696 = vsub.f32 %v648, %v682
    %v697 = vsub.f32 %v653, %v684
    %v698 = vsub.f32 %v658, %v686
    %v699 = vsub.f32 %v663, %v688
    %v700 = vsub.f32 %v668, %v690
    %v701 = vmax.f32 %v696, 0.0
    %v702 = vmax.f32 %v697, 0.0
    %v703 = vmax.f32 %v698, 0.0
    %v704 = vmax.f32 %v699, 0.0
    %v705 = vmax.f32 %v700, 0.0
    %707 = vset.pattern.permute.xlu0 0
    %708 = vperm.xlu0 %707, %v648
    %v709 = vpop.permute.xlu0 %708
    %712 = vset.pattern.permute.xlu0 0
    %713 = vperm.xlu0 %712, %v653
    %v714 = vpop.permute.xlu0 %713
    %717 = vset.pattern.permute.xlu0 0
    %718 = vperm.xlu0 %717, %v658
    %v719 = vpop.permute.xlu0 %718
    %722 = vset.pattern.permute.xlu0 0
    %723 = vperm.xlu0 %722, %v663
    %v724 = vpop.permute.xlu0 %723
    %727 = vset.pattern.permute.xlu0 0
    %728 = vperm.xlu0 %727, %v668
    %v729 = vpop.permute.xlu0 %728
    %v731 = vsub.f32 %v502, %v709
    %v732 = vsub.f32 %v503, %v714
    %v733 = vsub.f32 %v504, %v719
    %v734 = vsub.f32 %v505, %v724
    %v735 = vsub.f32 %v506, %v729
    %v736 = vadd.f32 %v701, 1e-05
    %v737 = vadd.f32 %v702, 1e-05
    %v738 = vadd.f32 %v703, 1e-05
    %v739 = vadd.f32 %v704, 1e-05
    %v740 = vadd.f32 %v705, 1e-05
    %v741 = vrsqrt.pop %v736
    %v742 = vrsqrt.pop %v737
    %v743 = vrsqrt.pop %v738
    %v744 = vrsqrt.pop %v739
    %v745 = vrsqrt.pop %v740
    %v746 = vld [vmem:[%s2] sm:$0xff]
    %v747 = vld [vmem:[%s2 + $0x8] sm:$0xff]
    %v748 = vld [vmem:[%s2 + $0x10] sm:$0xff]
    %v749 = vld [vmem:[%s2 + $0x18] sm:$0xff]
    %v750 = vld [vmem:[%s2 + $0x20] sm:$0xff]
    %756 = vrot.lane.b32.xlu0 %v746, 1
    %v757 = vpop.permute.xlu0 %756
    %758 = vrot.lane.b32.xlu0 %v747, 1
    %v759 = vpop.permute.xlu0 %758
    %760 = vrot.lane.b32.xlu0 %v748, 1
    %v761 = vpop.permute.xlu0 %760
    %762 = vrot.lane.b32.xlu0 %v749, 1
    %v763 = vpop.permute.xlu0 %762
    %764 = vrot.lane.b32.xlu0 %v750, 1
    %v765 = vpop.permute.xlu0 %764
    %v771 = vmul.f32 %v741, %v757
    %v772 = vmul.f32 %v742, %v759
    %v773 = vmul.f32 %v743, %v761
    %v774 = vmul.f32 %v744, %v763
    %v775 = vmul.f32 %v745, %v765
    %777 = vset.pattern.permute.xlu0 1
    %778 = vperm.xlu0 %777, %v771
    %v779 = vpop.permute.xlu0 %778
    %782 = vset.pattern.permute.xlu0 1
    %783 = vperm.xlu0 %782, %v772
    %v784 = vpop.permute.xlu0 %783
    %787 = vset.pattern.permute.xlu0 1
    %788 = vperm.xlu0 %787, %v773
    %v789 = vpop.permute.xlu0 %788
    %792 = vset.pattern.permute.xlu0 1
    %793 = vperm.xlu0 %792, %v774
    %v794 = vpop.permute.xlu0 %793
    %797 = vset.pattern.permute.xlu0 1
    %798 = vperm.xlu0 %797, %v775
    %v799 = vpop.permute.xlu0 %798
    %v801 = vmul.f32 %v731, %v779
    %v802 = vmul.f32 %v732, %v784
    %v803 = vmul.f32 %v733, %v789
    %v804 = vmul.f32 %v734, %v794
    %v805 = vmul.f32 %v735, %v799
    %v806 = vld [vmem:[%s3] sm:$0xff]
    %v807 = vld [vmem:[%s3 + $0x8] sm:$0xff]
    %v808 = vld [vmem:[%s3 + $0x10] sm:$0xff]
    %v809 = vld [vmem:[%s3 + $0x18] sm:$0xff]
    %v810 = vld [vmem:[%s3 + $0x20] sm:$0xff]
    %812 = vset.pattern.permute.xlu0 0
    %813 = vperm.xlu0 %812, %v806
    %v814 = vpop.permute.xlu0 %813
    %817 = vset.pattern.permute.xlu0 0
    %818 = vperm.xlu0 %817, %v807
    %v819 = vpop.permute.xlu0 %818
    %822 = vset.pattern.permute.xlu0 0
    %823 = vperm.xlu0 %822, %v808
    %v824 = vpop.permute.xlu0 %823
    %827 = vset.pattern.permute.xlu0 0
    %828 = vperm.xlu0 %827, %v809
    %v829 = vpop.permute.xlu0 %828
    %832 = vset.pattern.permute.xlu0 0
    %833 = vperm.xlu0 %832, %v810
    %v834 = vpop.permute.xlu0 %833
    %v836 = vadd.f32 %v801, %v814
    %v837 = vadd.f32 %v802, %v819
    %v838 = vadd.f32 %v803, %v824
    %v839 = vadd.f32 %v804, %v829
    %v840 = vadd.f32 %v805, %v834
    %v841 = vpack.c.bf16 %v837, %v836
    %v842 = vpack.c.bf16 %v839, %v838
    %v843 = vpack.c.bf16 %v840, %v840
    %v844 = vld [vmem:[#allocation8] sm:$0xff]
    %v845 = vld [vmem:[#allocation8 + $0x8] sm:$0xff]
    %v846 = vld [vmem:[#allocation8 + $0x10] sm:$0xff]
    %v847 = vld [vmem:[#allocation8 + $0x18] sm:$0xff]
    %v848 = vld [vmem:[#allocation8 + $0x20] sm:$0x77]
    %v849 = vld [vmem:[#allocation8 + $0x28] sm:$0x77]
    %v850 = vld [vmem:[#allocation10] sm:$0xff]
    %v851 = vld [vmem:[#allocation10 + $0x8] sm:$0xff]
    %v852 = vld [vmem:[#allocation10 + $0x10] sm:$0xff]
    %v853 = vld [vmem:[#allocation10 + $0x18] sm:$0xff]
    %v854 = vld [vmem:[#allocation10 + $0x20] sm:$0xff]
    %v855 = vld [vmem:[#allocation10 + $0x28] sm:$0xff]
    %v856 = vld [vmem:[#allocation10 + $0x30] sm:$0xff]
    %v857 = vld [vmem:[#allocation10 + $0x38] sm:$0xff]
    %v858 = vld [vmem:[#allocation10 + $0x40] sm:$0xff]
    %v859 = vld [vmem:[#allocation10 + $0x48] sm:$0xff]
    %v860 = vld [vmem:[#allocation10 + $0x50] sm:$0xff]
    %v861 = vld [vmem:[#allocation10 + $0x58] sm:$0xff]
    %v862 = vld [vmem:[#allocation10 + $0x60] sm:$0xff]
    %v863 = vld [vmem:[#allocation10 + $0x68] sm:$0xff]
    %v864 = vld [vmem:[#allocation10 + $0x70] sm:$0xff]
    %v865 = vld [vmem:[#allocation10 + $0x78] sm:$0xff]
    %v866 = vld [vmem:[#allocation10 + $0x80] sm:$0xff]
    %v867 = vld [vmem:[#allocation10 + $0x88] sm:$0xff]
    %v868 = vld [vmem:[#allocation10 + $0x90] sm:$0xff]
    %v869 = vld [vmem:[#allocation10 + $0x98] sm:$0xff]
    %v870 = vld [vmem:[#allocation10 + $0xa0] sm:$0xff]
    %v871 = vld [vmem:[#allocation10 + $0xa8] sm:$0xff]
    %v872 = vld [vmem:[#allocation10 + $0xb0] sm:$0xff]
    %v873 = vld [vmem:[#allocation10 + $0xb8] sm:$0xff]
    %v874 = vld [vmem:[#allocation10 + $0xc0] sm:$0xff]
    %v875 = vld [vmem:[#allocation10 + $0xc8] sm:$0xff]
    %v876 = vld [vmem:[#allocation10 + $0xd0] sm:$0xff]
    %v877 = vld [vmem:[#allocation10 + $0xd8] sm:$0xff]
    %v878 = vld [vmem:[#allocation10 + $0xe0] sm:$0xff]
    %v879 = vld [vmem:[#allocation10 + $0xe8] sm:$0xff]
    %v880 = vld [vmem:[#allocation10 + $0xf0] sm:$0xff]
    %v881 = vld [vmem:[#allocation10 + $0xf8] sm:$0xff]
    %v882 = vld [vmem:[%s6] sm:$0xf]
    %v884 = vlaneseq
    %v885 = vshrl.u32 %v884, 7
    %v886 = vsub.s32 0, %v885
    %v887 = vrot.slane %v882, %v886
    %v888 = vlaneseq
    %v889 = vshrl.u32 %v888, 7
    %v890 = vsub.s32 1, %v889
    %v891 = vrot.slane %v882, %v890
    %v892 = vlaneseq
    %v893 = vshrl.u32 %v892, 7
    %v894 = vsub.s32 2, %v893
    %v895 = vrot.slane %v882, %v894
    %v896 = vlaneseq
    %v897 = vshrl.u32 %v896, 7
    %v898 = vsub.s32 3, %v897
    %v899 = vrot.slane %v882, %v898
    %v910 = vunpack.c.l.b16 %v844
    %v911 = vunpack.c.h.b16 %v844
    %v912 = vunpack.c.l.b16 %v845
    %v913 = vunpack.c.h.b16 %v845
    %v914 = vunpack.c.l.b16 %v846
    %v915 = vunpack.c.h.b16 %v846
    %v916 = vunpack.c.l.b16 %v847
    %v917 = vunpack.c.h.b16 %v847
    %v918 = vunpack.c.l.b16 %v848
    %v919 = vunpack.c.h.b16 %v848
    %v920 = vunpack.c.l.b16 %v849
    %v921 = vunpack.c.h.b16 %v849
    %v922 = vpack.c.b16 %v914, %v910
    %v923 = vpack.c.b16 %v915, %v911
    %v924 = vpack.c.b16 %v916, %v912
    %v925 = vpack.c.b16 %v917, %v913
    %v926 = vpack.c.b16 %v918, %v918
    %v927 = vpack.c.b16 %v919, %v919
    %v928 = vpack.c.b16 %v920, %v920
    %v929 = vpack.c.b16 %v921, %v921
    %v935 = vsel %vm507, %v841, 0
    %v938 = vsel %vm507, %v842, 0
    %v941 = vsel %vm507, %v843, 0
    %vm943 = vcmask 1041408
    %vm944 = vcmask 1042432
    %v945 = vsel %vm943, 4294967295, 65535
    %v946 = vsel %vm944, %v945, 0
    %v948 = vand.u32 %v926, %v946
    %v951 = vand.u32 %v927, %v946
    %v954 = vand.u32 %v928, %v946
    %v957 = vand.u32 %v929, %v946
    %959 = vmatprep.subr.bf16.mxu0 %v923
    %960 = vmatpush1.bf16.msra.mxu0 %v922
    %961 = vmatprep.subr.bf16.mxu0 %v951
    %962 = vmatpush1.bf16.msra.mxu0 %v948
    %963 = vmatprep.subr.bf16.mxu0 0
    %964 = vmatpush1.bf16.msra.mxu0 0
    %965 = vmatprep.subr.bf16.mxu0 0
    %966 = vmatpush1.bf16.msra.mxu0 0
    %967 = vmatprep.subr.bf16.mxu0 0
    %968 = vmatpush1.bf16.msra.mxu0 0
    %969 = vmatprep.subr.bf16.mxu0 0
    %970 = vmatpush1.bf16.msra.mxu0 0
    %971 = vmatprep.subr.bf16.mxu0 0
    %972 = vmatpush1.bf16.msra.mxu0 0
    %973 = vmatprep.subr.bf16.mxu0 0
    %974 = vmatpush1.bf16.msra.mxu0 0
    %975 = vmatprep.subr.bf16.mxu0 0
    %976 = vmatpush1.bf16.msra.mxu0 0
    %977 = vmatprep.subr.bf16.mxu0 0
    %978 = vmatpush1.bf16.msra.mxu0 0
    %979 = vmatprep.subr.bf16.mxu0 0
    %980 = vmatpush1.bf16.msra.mxu0 0
    %981 = vmatprep.subr.bf16.mxu0 0
    %982 = vmatpush1.bf16.msra.mxu0 0
    %983 = vmatprep.subr.bf16.mxu0 0
    %984 = vmatpush1.bf16.msra.mxu0 0
    %985 = vmatprep.subr.bf16.mxu0 0
    %986 = vmatpush1.bf16.msra.mxu0 0
    %987 = vmatprep.subr.bf16.mxu0 0
    %988 = vmatpush1.bf16.msra.mxu0 0
    %989 = vmatprep.subr.bf16.mxu0 0
    %990 = vmatpush1.bf16.msra.mxu0 0
    %991 = vmatprep.mubr.bf16.mxu0 0
    %992 = vmatmul.mubr.bf16.gmra.mrb[0].mxu0 %v935
    %v993 = vpop.f32.mrb[0].mxu0
    %v994 = vadd.f32 %v887, %v993
    %v995 = vpop.f32.mrb[0].mxu0
    %v996 = vadd.f32 %v891, %v995
    %v997 = vpop.f32.mrb[0].mxu0
    %v998 = vadd.f32 %v887, %v997
    %v999 = vpop.f32.mrb[0].mxu0
    %v1000 = vadd.f32 %v891, %v999
    %1001 = vmatprep.mubr.bf16.mxu0 0
    %1002 = vmatmul.mubr.bf16.gmra.mrb[0].mxu0 %v938
    %v1003 = vpop.f32.mrb[0].mxu0
    %v1004 = vadd.f32 %v887, %v1003
    %v1005 = vpop.f32.mrb[0].mxu0
    %v1006 = vadd.f32 %v891, %v1005
    %v1007 = vpop.f32.mrb[0].mxu0
    %v1008 = vadd.f32 %v887, %v1007
    %v1009 = vpop.f32.mrb[0].mxu0
    %v1010 = vadd.f32 %v891, %v1009
    %1011 = vmatprep.mubr.bf16.mxu0 0
    %1012 = vmatmul.mubr.bf16.gmra.mrb[0].mxu0 %v941
    %v1013 = vpop.f32.mrb[0].mxu0
    %v1014 = vadd.f32 %v887, %v1013
    %v1015 = vpop.f32.mrb[0].mxu0
    %v1016 = vadd.f32 %v891, %v1015
    %v1017 = vpop.f32.mrb[0].mxu0
    %v1018 = vpop.f32.mrb[0].mxu0
    %1019 = vdwg.mxu0
    %1020 = vmatprep.subr.bf16.mxu0 %v925
    %1021 = vmatpush1.bf16.msra.mxu0 %v924
    %1022 = vmatprep.subr.bf16.mxu0 %v957
    %1023 = vmatpush1.bf16.msra.mxu0 %v954
    %1024 = vmatprep.subr.bf16.mxu0 0
    %1025 = vmatpush1.bf16.msra.mxu0 0
    %1026 = vmatprep.subr.bf16.mxu0 0
    %1027 = vmatpush1.bf16.msra.mxu0 0
    %1028 = vmatprep.subr.bf16.mxu0 0
    %1029 = vmatpush1.bf16.msra.mxu0 0
    %1030 = vmatprep.subr.bf16.mxu0 0
    %1031 = vmatpush1.bf16.msra.mxu0 0
    %1032 = vmatprep.subr.bf16.mxu0 0
    %1033 = vmatpush1.bf16.msra.mxu0 0
    %1034 = vmatprep.subr.bf16.mxu0 0
    %1035 = vmatpush1.bf16.msra.mxu0 0
    %1036 = vmatprep.subr.bf16.mxu0 0
    %1037 = vmatpush1.bf16.msra.mxu0 0
    %1038 = vmatprep.subr.bf16.mxu0 0
    %1039 = vmatpush1.bf16.msra.mxu0 0
    %1040 = vmatprep.subr.bf16.mxu0 0
    %1041 = vmatpush1.bf16.msra.mxu0 0
    %1042 = vmatprep.subr.bf16.mxu0 0
    %1043 = vmatpush1.bf16.msra.mxu0 0
    %1044 = vmatprep.subr.bf16.mxu0 0
    %1045 = vmatpush1.bf16.msra.mxu0 0
    %1046 = vmatprep.subr.bf16.mxu0 0
    %1047 = vmatpush1.bf16.msra.mxu0 0
    %1048 = vmatprep.subr.bf16.mxu0 0
    %1049 = vmatpush1.bf16.msra.mxu0 0
    %1050 = vmatprep.subr.bf16.mxu0 0
    %1051 = vmatpush1.bf16.msra.mxu0 0
    %1052 = vmatprep.mubr.bf16.mxu0 0
    %1053 = vmatmul.mubr.bf16.gmra.mrb[0].mxu0 %v935
    %v1054 = vpop.f32.mrb[0].mxu0
    %v1055 = vadd.f32 %v895, %v1054
    %v1056 = vpop.f32.mrb[0].mxu0
    %v1057 = vadd.f32 %v899, %v1056
    %v1058 = vpop.f32.mrb[0].mxu0
    %v1059 = vadd.f32 %v895, %v1058
    %v1060 = vpop.f32.mrb[0].mxu0
    %v1061 = vadd.f32 %v899, %v1060
    %1062 = vmatprep.mubr.bf16.mxu0 0
    %1063 = vmatmul.mubr.bf16.gmra.mrb[0].mxu0 %v938
    %v1064 = vpop.f32.mrb[0].mxu0
    %v1065 = vadd.f32 %v895, %v1064
    %v1066 = vpop.f32.mrb[0].mxu0
    %v1067 = vadd.f32 %v899, %v1066
    %v1068 = vpop.f32.mrb[0].mxu0
    %v1069 = vadd.f32 %v895, %v1068
    %v1070 = vpop.f32.mrb[0].mxu0
    %v1071 = vadd.f32 %v899, %v1070
    %1072 = vmatprep.mubr.bf16.mxu0 0
    %1073 = vmatmul.mubr.bf16.gmra.mrb[0].mxu0 %v941
    %v1074 = vpop.f32.mrb[0].mxu0
    %v1075 = vadd.f32 %v895, %v1074
    %v1076 = vpop.f32.mrb[0].mxu0
    %v1077 = vadd.f32 %v899, %v1076
    %v1078 = vpop.f32.mrb[0].mxu0
    %v1079 = vpop.f32.mrb[0].mxu0
    %1080 = vdwg.mxu0
    %v1113 = vunpack.c.l.b16 %v850
    %v1114 = vunpack.c.h.b16 %v850
    %v1115 = vunpack.c.l.b16 %v851
    %v1116 = vunpack.c.h.b16 %v851
    %v1117 = vunpack.c.l.b16 %v852
    %v1118 = vunpack.c.h.b16 %v852
    %v1119 = vunpack.c.l.b16 %v853
    %v1120 = vunpack.c.h.b16 %v853
    %v1121 = vunpack.c.l.b16 %v854
    %v1122 = vunpack.c.h.b16 %v854
    %v1123 = vunpack.c.l.b16 %v855
    %v1124 = vunpack.c.h.b16 %v855
    %v1125 = vunpack.c.l.b16 %v856
    %v1126 = vunpack.c.h.b16 %v856
    %v1127 = vunpack.c.l.b16 %v857
    %v1128 = vunpack.c.h.b16 %v857
    %v1129 = vunpack.c.l.b16 %v858
    %v1130 = vunpack.c.h.b16 %v858
    %v1131 = vunpack.c.l.b16 %v859
    %v1132 = vunpack.c.h.b16 %v859
    %v1133 = vunpack.c.l.b16 %v860
    %v1134 = vunpack.c.h.b16 %v860
    %v1135 = vunpack.c.l.b16 %v861
    %v1136 = vunpack.c.h.b16 %v861
    %v1137 = vunpack.c.l.b16 %v862
    %v1138 = vunpack.c.h.b16 %v862
    %v1139 = vunpack.c.l.b16 %v863
    %v1140 = vunpack.c.h.b16 %v863
    %v1141 = vunpack.c.l.b16 %v864
    %v1142 = vunpack.c.h.b16 %v864
    %v1143 = vunpack.c.l.b16 %v865
    %v1144 = vunpack.c.h.b16 %v865
    %v1145 = vunpack.c.l.b16 %v866
    %v1146 = vunpack.c.h.b16 %v866
    %v1147 = vunpack.c.l.b16 %v867
    %v1148 = vunpack.c.h.b16 %v867
    %v1149 = vunpack.c.l.b16 %v868
    %v1150 = vunpack.c.h.b16 %v868
    %v1151 = vunpack.c.l.b16 %v869
    %v1152 = vunpack.c.h.b16 %v869
    %v1153 = vunpack.c.l.b16 %v870
    %v1154 = vunpack.c.h.b16 %v870
    %v1155 = vunpack.c.l.b16 %v871
    %v1156 = vunpack.c.h.b16 %v871
    %v1157 = vunpack.c.l.b16 %v872
    %v1158 = vunpack.c.h.b16 %v872
    %v1159 = vunpack.c.l.b16 %v873
    %v1160 = vunpack.c.h.b16 %v873
    %v1161 = vunpack.c.l.b16 %v874
    %v1162 = vunpack.c.h.b16 %v874
    %v1163 = vunpack.c.l.b16 %v875
    %v1164 = vunpack.c.h.b16 %v875
    %v1165 = vunpack.c.l.b16 %v876
    %v1166 = vunpack.c.h.b16 %v876
    %v1167 = vunpack.c.l.b16 %v877
    %v1168 = vunpack.c.h.b16 %v877
    %v1169 = vunpack.c.l.b16 %v878
    %v1170 = vunpack.c.h.b16 %v878
    %v1171 = vunpack.c.l.b16 %v879
    %v1172 = vunpack.c.h.b16 %v879
    %v1173 = vunpack.c.l.b16 %v880
    %v1174 = vunpack.c.h.b16 %v880
    %v1175 = vunpack.c.l.b16 %v881
    %v1176 = vunpack.c.h.b16 %v881
    %v1177 = vpack.c.b16 %v1117, %v1113
    %v1178 = vpack.c.b16 %v1118, %v1114
    %v1179 = vpack.c.b16 %v1119, %v1115
    %v1180 = vpack.c.b16 %v1120, %v1116
    %v1181 = vpack.c.b16 %v1125, %v1121
    %v1182 = vpack.c.b16 %v1126, %v1122
    %v1183 = vpack.c.b16 %v1127, %v1123
    %v1184 = vpack.c.b16 %v1128, %v1124
    %v1185 = vpack.c.b16 %v1133, %v1129
    %v1186 = vpack.c.b16 %v1134, %v1130
    %v1187 = vpack.c.b16 %v1135, %v1131
    %v1188 = vpack.c.b16 %v1136, %v1132
    %v1189 = vpack.c.b16 %v1141, %v1137
    %v1190 = vpack.c.b16 %v1142, %v1138
    %v1191 = vpack.c.b16 %v1143, %v1139
    %v1192 = vpack.c.b16 %v1144, %v1140
    %v1193 = vpack.c.b16 %v1149, %v1145
    %v1194 = vpack.c.b16 %v1150, %v1146
    %v1195 = vpack.c.b16 %v1151, %v1147
    %v1196 = vpack.c.b16 %v1152, %v1148
    %v1197 = vpack.c.b16 %v1157, %v1153
    %v1198 = vpack.c.b16 %v1158, %v1154
    %v1199 = vpack.c.b16 %v1159, %v1155
    %v1200 = vpack.c.b16 %v1160, %v1156
    %v1201 = vpack.c.b16 %v1165, %v1161
    %v1202 = vpack.c.b16 %v1166, %v1162
    %v1203 = vpack.c.b16 %v1167, %v1163
    %v1204 = vpack.c.b16 %v1168, %v1164
    %v1205 = vpack.c.b16 %v1173, %v1169
    %v1206 = vpack.c.b16 %v1174, %v1170
    %v1207 = vpack.c.b16 %v1175, %v1171
    %v1208 = vpack.c.b16 %v1176, %v1172
    %1241 = vmatprep.subr.bf16.mxu0 %v1178
    %1242 = vmatpush1.bf16.msra.mxu0 %v1177
    %1243 = vmatprep.subr.bf16.mxu0 %v1182
    %1244 = vmatpush1.bf16.msra.mxu0 %v1181
    %1245 = vmatprep.subr.bf16.mxu0 %v1186
    %1246 = vmatpush1.bf16.msra.mxu0 %v1185
    %1247 = vmatprep.subr.bf16.mxu0 %v1190
    %1248 = vmatpush1.bf16.msra.mxu0 %v1189
    %1249 = vmatprep.subr.bf16.mxu0 %v1194
    %1250 = vmatpush1.bf16.msra.mxu0 %v1193
    %1251 = vmatprep.subr.bf16.mxu0 %v1198
    %1252 = vmatpush1.bf16.msra.mxu0 %v1197
    %1253 = vmatprep.subr.bf16.mxu0 %v1202
    %1254 = vmatpush1.bf16.msra.mxu0 %v1201
    %1255 = vmatprep.subr.bf16.mxu0 %v1206
    %1256 = vmatpush1.bf16.msra.mxu0 %v1205
    %1257 = vmatprep.subr.bf16.mxu0 0
    %1258 = vmatpush1.bf16.msra.mxu0 0
    %1259 = vmatprep.subr.bf16.mxu0 0
    %1260 = vmatpush1.bf16.msra.mxu0 0
    %1261 = vmatprep.subr.bf16.mxu0 0
    %1262 = vmatpush1.bf16.msra.mxu0 0
    %1263 = vmatprep.subr.bf16.mxu0 0
    %1264 = vmatpush1.bf16.msra.mxu0 0
    %1265 = vmatprep.subr.bf16.mxu0 0
    %1266 = vmatpush1.bf16.msra.mxu0 0
    %1267 = vmatprep.subr.bf16.mxu0 0
    %1268 = vmatpush1.bf16.msra.mxu0 0
    %1269 = vmatprep.subr.bf16.mxu0 0
    %1270 = vmatpush1.bf16.msra.mxu0 0
    %1271 = vmatprep.subr.bf16.mxu0 0
    %1272 = vmatpush1.bf16.msra.mxu0 0
    %1273 = vmatprep.mubr.bf16.mxu0 0
    %1274 = vmatmul.mubr.bf16.gmra.mrb[0].mxu0 0
    %v1275 = vpop.f32.mrb[0].mxu0
    %v1276 = vadd.f32 0.0, %v1275
    %v1277 = vpop.f32.mrb[0].mxu0
    %v1278 = vadd.f32 0.0, %v1277
    %v1279 = vpop.f32.mrb[0].mxu0
    %v1280 = vpop.f32.mrb[0].mxu0
    %1281 = vdwg.mxu0
    %1282 = vmatprep.subr.bf16.mxu0 %v1180
    %1283 = vmatpush1.bf16.msra.mxu0 %v1179
    %1284 = vmatprep.subr.bf16.mxu0 %v1184
    %1285 = vmatpush1.bf16.msra.mxu0 %v1183
    %1286 = vmatprep.subr.bf16.mxu0 %v1188
    %1287 = vmatpush1.bf16.msra.mxu0 %v1187
    %1288 = vmatprep.subr.bf16.mxu0 %v1192
    %1289 = vmatpush1.bf16.msra.mxu0 %v1191
    %1290 = vmatprep.subr.bf16.mxu0 %v1196
    %1291 = vmatpush1.bf16.msra.mxu0 %v1195
    %1292 = vmatprep.subr.bf16.mxu0 %v1200
    %1293 = vmatpush1.bf16.msra.mxu0 %v1199
    %1294 = vmatprep.subr.bf16.mxu0 %v1204
    %1295 = vmatpush1.bf16.msra.mxu0 %v1203
    %1296 = vmatprep.subr.bf16.mxu0 %v1208
    %1297 = vmatpush1.bf16.msra.mxu0 %v1207
    %1298 = vmatprep.subr.bf16.mxu0 0
    %1299 = vmatpush1.bf16.msra.mxu0 0
    %1300 = vmatprep.subr.bf16.mxu0 0
    %1301 = vmatpush1.bf16.msra.mxu0 0
    %1302 = vmatprep.subr.bf16.mxu0 0
    %1303 = vmatpush1.bf16.msra.mxu0 0
    %1304 = vmatprep.subr.bf16.mxu0 0
    %1305 = vmatpush1.bf16.msra.mxu0 0
    %1306 = vmatprep.subr.bf16.mxu0 0
    %1307 = vmatpush1.bf16.msra.mxu0 0
    %1308 = vmatprep.subr.bf16.mxu0 0
    %1309 = vmatpush1.bf16.msra.mxu0 0
    %1310 = vmatprep.subr.bf16.mxu0 0
    %1311 = vmatpush1.bf16.msra.mxu0 0
    %1312 = vmatprep.subr.bf16.mxu0 0
    %1313 = vmatpush1.bf16.msra.mxu0 0
    %1314 = vmatprep.mubr.bf16.mxu0 0
    %1315 = vmatmul.mubr.bf16.gmra.mrb[0].mxu0 0
    %v1316 = vpop.f32.mrb[0].mxu0
    %v1317 = vadd.f32 0.0, %v1316
    %v1318 = vpop.f32.mrb[0].mxu0
    %v1319 = vadd.f32 0.0, %v1318
    %v1320 = vpop.f32.mrb[0].mxu0
    %v1321 = vpop.f32.mrb[0].mxu0
    %1322 = vdwg.mxu0
    %v1323 = vadd.f32 %v994, %v1276
    %v1324 = vadd.f32 %v996, %v1278
    %v1325 = vadd.f32 %v1055, %v1317
    %v1326 = vadd.f32 %v1057, %v1319
    %v1327 = vxor.u32 %v1323, 2147483648
    %v1328 = vxor.u32 %v1324, 2147483648
    %v1329 = vxor.u32 %v1325, 2147483648
    %v1330 = vmul.f32 %v1327, 1.442695
    %v1331 = vpow.pop %v1330
    %v1332 = vmul.f32 %v1328, 1.442695
    %v1333 = vpow.pop %v1332
    %v1334 = vmul.f32 %v1329, 1.442695
    %v1335 = vpow.pop %v1334
    %v1336 = vadd.f32 %v1331, 1.0
    %v1337 = vadd.f32 %v1333, 1.0
    %v1338 = vadd.f32 %v1335, 1.0
    %v1339 = vrcp.pop %v1336
    %v1340 = vmul.f32 1.0, %v1339
    %v1341 = vrcp.pop %v1337
    %v1342 = vmul.f32 1.0, %v1341
    %v1343 = vrcp.pop %v1338
    %v1344 = vmul.f32 1.0, %v1343
    %v1345 = vtanh.pop %v1326
    %v1346 = vmul.f32 %v1342, 0.0
    %v1347 = vmul.f32 %v1340, %v1345
    %v1348 = vadd.f32 %v1346, %v1347
    %v1349 = vtanh.pop %v1348
    %v1350 = vmul.f32 %v1344, %v1349
    %v1351 = vpack.c.bf16 %v1350, %v1350
    %1352 = vmatprep.subr.bf16.mxu0 %v1178
    %1353 = vmatpush1.bf16.msra.mxu0 %v1177
    %1354 = vmatprep.subr.bf16.mxu0 %v1182
    %1355 = vmatpush1.bf16.msra.mxu0 %v1181
    %1356 = vmatprep.subr.bf16.mxu0 %v1186
    %1357 = vmatpush1.bf16.msra.mxu0 %v1185
    %1358 = vmatprep.subr.bf16.mxu0 %v1190
    %1359 = vmatpush1.bf16.msra.mxu0 %v1189
    %1360 = vmatprep.subr.bf16.mxu0 %v1194
    %1361 = vmatpush1.bf16.msra.mxu0 %v1193
    %1362 = vmatprep.subr.bf16.mxu0 %v1198
    %1363 = vmatpush1.bf16.msra.mxu0 %v1197
    %1364 = vmatprep.subr.bf16.mxu0 %v1202
    %1365 = vmatpush1.bf16.msra.mxu0 %v1201
    %1366 = vmatprep.subr.bf16.mxu0 %v1206
    %1367 = vmatpush1.bf16.msra.mxu0 %v1205
    %1368 = vmatprep.subr.bf16.mxu0 0
    %1369 = vmatpush1.bf16.msra.mxu0 0
    %1370 = vmatprep.subr.bf16.mxu0 0
    %1371 = vmatpush1.bf16.msra.mxu0 0
    %1372 = vmatprep.subr.bf16.mxu0 0
    %1373 = vmatpush1.bf16.msra.mxu0 0
    %1374 = vmatprep.subr.bf16.mxu0 0
    %1375 = vmatpush1.bf16.msra.mxu0 0
    %1376 = vmatprep.subr.bf16.mxu0 0
    %1377 = vmatpush1.bf16.msra.mxu0 0
    %1378 = vmatprep.subr.bf16.mxu0 0
    %1379 = vmatpush1.bf16.msra.mxu0 0
    %1380 = vmatprep.subr.bf16.mxu0 0
    %1381 = vmatpush1.bf16.msra.mxu0 0
    %1382 = vmatprep.subr.bf16.mxu0 0
    %1383 = vmatpush1.bf16.msra.mxu0 0
    %1384 = vmatprep.mubr.bf16.mxu0 0
    %1385 = vmatmul.mubr.bf16.gmra.mrb[0].mxu0 %v1351
    %v1386 = vpop.f32.mrb[0].mxu0
    %v1387 = vadd.f32 0.0, %v1386
    %v1388 = vpop.f32.mrb[0].mxu0
    %v1389 = vadd.f32 0.0, %v1388
    %v1390 = vpop.f32.mrb[0].mxu0
    %v1391 = vpop.f32.mrb[0].mxu0
    %1392 = vdwg.mxu0
    %1393 = vmatprep.subr.bf16.mxu0 %v1180
    %1394 = vmatpush1.bf16.msra.mxu0 %v1179
    %1395 = vmatprep.subr.bf16.mxu0 %v1184
    %1396 = vmatpush1.bf16.msra.mxu0 %v1183
    %1397 = vmatprep.subr.bf16.mxu0 %v1188
    %1398 = vmatpush1.bf16.msra.mxu0 %v1187
    %1399 = vmatprep.subr.bf16.mxu0 %v1192
    %1400 = vmatpush1.bf16.msra.mxu0 %v1191
    %1401 = vmatprep.subr.bf16.mxu0 %v1196
    %1402 = vmatpush1.bf16.msra.mxu0 %v1195
    %1403 = vmatprep.subr.bf16.mxu0 %v1200
    %1404 = vmatpush1.bf16.msra.mxu0 %v1199
    %1405 = vmatprep.subr.bf16.mxu0 %v1204
    %1406 = vmatpush1.bf16.msra.mxu0 %v1203
    %1407 = vmatprep.subr.bf16.mxu0 %v1208
    %1408 = vmatpush1.bf16.msra.mxu0 %v1207
    %1409 = vmatprep.subr.bf16.mxu0 0
    %1410 = vmatpush1.bf16.msra.mxu0 0
    %1411 = vmatprep.subr.bf16.mxu0 0
    %1412 = vmatpush1.bf16.msra.mxu0 0
    %1413 = vmatprep.subr.bf16.mxu0 0
    %1414 = vmatpush1.bf16.msra.mxu0 0
    %1415 = vmatprep.subr.bf16.mxu0 0
    %1416 = vmatpush1.bf16.msra.mxu0 0
    %1417 = vmatprep.subr.bf16.mxu0 0
    %1418 = vmatpush1.bf16.msra.mxu0 0
    %1419 = vmatprep.subr.bf16.mxu0 0
    %1420 = vmatpush1.bf16.msra.mxu0 0
    %1421 = vmatprep.subr.bf16.mxu0 0
    %1422 = vmatpush1.bf16.msra.mxu0 0
    %1423 = vmatprep.subr.bf16.mxu0 0
    %1424 = vmatpush1.bf16.msra.mxu0 0
    %1425 = vmatprep.mubr.bf16.mxu0 0
    %1426 = vmatmul.mubr.bf16.gmra.mrb[0].mxu0 %v1351
    %v1427 = vpop.f32.mrb[0].mxu0
    %v1428 = vadd.f32 0.0, %v1427
    %v1429 = vpop.f32.mrb[0].mxu0
    %v1430 = vadd.f32 0.0, %v1429
    %v1431 = vpop.f32.mrb[0].mxu0
    %v1432 = vpop.f32.mrb[0].mxu0
    %1433 = vdwg.mxu0
    %v1434 = vadd.f32 %v998, %v1387
    %v1435 = vadd.f32 %v1000, %v1389
    %v1436 = vadd.f32 %v1059, %v1428
    %v1437 = vadd.f32 %v1061, %v1430
    %v1438 = vxor.u32 %v1434, 2147483648
    %v1439 = vxor.u32 %v1435, 2147483648
    %v1440 = vxor.u32 %v1436, 2147483648
    %v1441 = vmul.f32 %v1438, 1.442695
    %v1442 = vpow.pop %v1441
    %v1443 = vmul.f32 %v1439, 1.442695
    %v1444 = vpow.pop %v1443
    %v1445 = vmul.f32 %v1440, 1.442695
    %v1446 = vpow.pop %v1445
    %v1447 = vadd.f32 %v1442, 1.0
    %v1448 = vadd.f32 %v1444, 1.0
    %v1449 = vadd.f32 %v1446, 1.0
    %v1450 = vrcp.pop %v1447
    %v1451 = vmul.f32 1.0, %v1450
    %v1452 = vrcp.pop %v1448
    %v1453 = vmul.f32 1.0, %v1452
    %v1454 = vrcp.pop %v1449
    %v1455 = vmul.f32 1.0, %v1454
    %v1456 = vtanh.pop %v1437
    %v1457 = vmul.f32 %v1453, %v1348
    %v1458 = vmul.f32 %v1451, %v1456
    %v1459 = vadd.f32 %v1457, %v1458
    %v1460 = vtanh.pop %v1459
    %v1461 = vmul.f32 %v1455, %v1460
    %v1462 = vpack.c.bf16 %v1461, %v1461
    %1463 = vmatprep.subr.bf16.mxu0 %v1178
    %1464 = vmatpush1.bf16.msra.mxu0 %v1177
    %1465 = vmatprep.subr.bf16.mxu0 %v1182
    %1466 = vmatpush1.bf16.msra.mxu0 %v1181
    %1467 = vmatprep.subr.bf16.mxu0 %v1186
    %1468 = vmatpush1.bf16.msra.mxu0 %v1185
    %1469 = vmatprep.subr.bf16.mxu0 %v1190
    %1470 = vmatpush1.bf16.msra.mxu0 %v1189
    %1471 = vmatprep.subr.bf16.mxu0 %v1194
    %1472 = vmatpush1.bf16.msra.mxu0 %v1193
    %1473 = vmatprep.subr.bf16.mxu0 %v1198
    %1474 = vmatpush1.bf16.msra.mxu0 %v1197
    %1475 = vmatprep.subr.bf16.mxu0 %v1202
    %1476 = vmatpush1.bf16.msra.mxu0 %v1201
    %1477 = vmatprep.subr.bf16.mxu0 %v1206
    %1478 = vmatpush1.bf16.msra.mxu0 %v1205
    %1479 = vmatprep.subr.bf16.mxu0 0
    %1480 = vmatpush1.bf16.msra.mxu0 0
    %1481 = vmatprep.subr.bf16.mxu0 0
    %1482 = vmatpush1.bf16.msra.mxu0 0
    %1483 = vmatprep.subr.bf16.mxu0 0
    %1484 = vmatpush1.bf16.msra.mxu0 0
    %1485 = vmatprep.subr.bf16.mxu0 0
    %1486 = vmatpush1.bf16.msra.mxu0 0
    %1487 = vmatprep.subr.bf16.mxu0 0
    %1488 = vmatpush1.bf16.msra.mxu0 0
    %1489 = vmatprep.subr.bf16.mxu0 0
    %1490 = vmatpush1.bf16.msra.mxu0 0
    %1491 = vmatprep.subr.bf16.mxu0 0
    %1492 = vmatpush1.bf16.msra.mxu0 0
    %1493 = vmatprep.subr.bf16.mxu0 0
    %1494 = vmatpush1.bf16.msra.mxu0 0
    %1495 = vmatprep.mubr.bf16.mxu0 0
    %1496 = vmatmul.mubr.bf16.gmra.mrb[0].mxu0 %v1462
    %v1497 = vpop.f32.mrb[0].mxu0
    %v1498 = vadd.f32 0.0, %v1497
    %v1499 = vpop.f32.mrb[0].mxu0
    %v1500 = vadd.f32 0.0, %v1499
    %v1501 = vpop.f32.mrb[0].mxu0
    %v1502 = vpop.f32.mrb[0].mxu0
    %1503 = vdwg.mxu0
    %1504 = vmatprep.subr.bf16.mxu0 %v1180
    %1505 = vmatpush1.bf16.msra.mxu0 %v1179
    %1506 = vmatprep.subr.bf16.mxu0 %v1184
    %1507 = vmatpush1.bf16.msra.mxu0 %v1183
    %1508 = vmatprep.subr.bf16.mxu0 %v1188
    %1509 = vmatpush1.bf16.msra.mxu0 %v1187
    %1510 = vmatprep.subr.bf16.mxu0 %v1192
    %1511 = vmatpush1.bf16.msra.mxu0 %v1191
    %1512 = vmatprep.subr.bf16.mxu0 %v1196
    %1513 = vmatpush1.bf16.msra.mxu0 %v1195
    %1514 = vmatprep.subr.bf16.mxu0 %v1200
    %1515 = vmatpush1.bf16.msra.mxu0 %v1199
    %1516 = vmatprep.subr.bf16.mxu0 %v1204
    %1517 = vmatpush1.bf16.msra.mxu0 %v1203
    %1518 = vmatprep.subr.bf16.mxu0 %v1208
    %1519 = vmatpush1.bf16.msra.mxu0 %v1207
    %1520 = vmatprep.subr.bf16.mxu0 0
    %1521 = vmatpush1.bf16.msra.mxu0 0
    %1522 = vmatprep.subr.bf16.mxu0 0
    %1523 = vmatpush1.bf16.msra.mxu0 0
    %1524 = vmatprep.subr.bf16.mxu0 0
    %1525 = vmatpush1.bf16.msra.mxu0 0
    %1526 = vmatprep.subr.bf16.mxu0 0
    %1527 = vmatpush1.bf16.msra.mxu0 0
    %1528 = vmatprep.subr.bf16.mxu0 0
    %1529 = vmatpush1.bf16.msra.mxu0 0
    %1530 = vmatprep.subr.bf16.mxu0 0
    %1531 = vmatpush1.bf16.msra.mxu0 0
    %1532 = vmatprep.subr.bf16.mxu0 0
    %1533 = vmatpush1.bf16.msra.mxu0 0
    %1534 = vmatprep.subr.bf16.mxu0 0
    %1535 = vmatpush1.bf16.msra.mxu0 0
    %1536 = vmatprep.mubr.bf16.mxu0 0
    %1537 = vmatmul.mubr.bf16.gmra.mrb[0].mxu0 %v1462
    %v1538 = vpop.f32.mrb[0].mxu0
    %v1539 = vadd.f32 0.0, %v1538
    %v1540 = vpop.f32.mrb[0].mxu0
    %v1541 = vadd.f32 0.0, %v1540
    %v1542 = vpop.f32.mrb[0].mxu0
    %v1543 = vpop.f32.mrb[0].mxu0
    %1544 = vdwg.mxu0
    %v1545 = vadd.f32 %v1004, %v1498
    %v1546 = vadd.f32 %v1006, %v1500
    %v1547 = vadd.f32 %v1065, %v1539
    %v1548 = vadd.f32 %v1067, %v1541
    %v1549 = vxor.u32 %v1545, 2147483648
    %v1550 = vxor.u32 %v1546, 2147483648
    %v1551 = vxor.u32 %v1547, 2147483648
    %v1552 = vmul.f32 %v1549, 1.442695
    %v1553 = vpow.pop %v1552
    %v1554 = vmul.f32 %v1550, 1.442695
    %v1555 = vpow.pop %v1554
    %v1556 = vmul.f32 %v1551, 1.442695
    %v1557 = vpow.pop %v1556
    %v1558 = vadd.f32 %v1553, 1.0
    %v1559 = vadd.f32 %v1555, 1.0
    %v1560 = vadd.f32 %v1557, 1.0
    %v1561 = vrcp.pop %v1558
    %v1562 = vmul.f32 1.0, %v1561
    %v1563 = vrcp.pop %v1559
    %v1564 = vmul.f32 1.0, %v1563
    %v1565 = vrcp.pop %v1560
    %v1566 = vmul.f32 1.0, %v1565
    %v1567 = vtanh.pop %v1548
    %v1568 = vmul.f32 %v1564, %v1459
    %v1569 = vmul.f32 %v1562, %v1567
    %v1570 = vadd.f32 %v1568, %v1569
    %v1571 = vtanh.pop %v1570
    %v1572 = vmul.f32 %v1566, %v1571
    %v1573 = vpack.c.bf16 %v1572, %v1572
    %1574 = vmatprep.subr.bf16.mxu0 %v1178
    %1575 = vmatpush1.bf16.msra.mxu0 %v1177
    %1576 = vmatprep.subr.bf16.mxu0 %v1182
    %1577 = vmatpush1.bf16.msra.mxu0 %v1181
    %1578 = vmatprep.subr.bf16.mxu0 %v1186
    %1579 = vmatpush1.bf16.msra.mxu0 %v1185
    %1580 = vmatprep.subr.bf16.mxu0 %v1190
    %1581 = vmatpush1.bf16.msra.mxu0 %v1189
    %1582 = vmatprep.subr.bf16.mxu0 %v1194
    %1583 = vmatpush1.bf16.msra.mxu0 %v1193
    %1584 = vmatprep.subr.bf16.mxu0 %v1198
    %1585 = vmatpush1.bf16.msra.mxu0 %v1197
    %1586 = vmatprep.subr.bf16.mxu0 %v1202
    %1587 = vmatpush1.bf16.msra.mxu0 %v1201
    %1588 = vmatprep.subr.bf16.mxu0 %v1206
    %1589 = vmatpush1.bf16.msra.mxu0 %v1205
    %1590 = vmatprep.subr.bf16.mxu0 0
    %1591 = vmatpush1.bf16.msra.mxu0 0
    %1592 = vmatprep.subr.bf16.mxu0 0
    %1593 = vmatpush1.bf16.msra.mxu0 0
    %1594 = vmatprep.subr.bf16.mxu0 0
    %1595 = vmatpush1.bf16.msra.mxu0 0
    %1596 = vmatprep.subr.bf16.mxu0 0
    %1597 = vmatpush1.bf16.msra.mxu0 0
    %1598 = vmatprep.subr.bf16.mxu0 0
    %1599 = vmatpush1.bf16.msra.mxu0 0
    %1600 = vmatprep.subr.bf16.mxu0 0
    %1601 = vmatpush1.bf16.msra.mxu0 0
    %1602 = vmatprep.subr.bf16.mxu0 0
    %1603 = vmatpush1.bf16.msra.mxu0 0
    %1604 = vmatprep.subr.bf16.mxu0 0
    %1605 = vmatpush1.bf16.msra.mxu0 0
    %1606 = vmatprep.mubr.bf16.mxu0 0
    %1607 = vmatmul.mubr.bf16.gmra.mrb[0].mxu0 %v1573
    %v1608 = vpop.f32.mrb[0].mxu0
    %v1609 = vadd.f32 0.0, %v1608
    %v1610 = vpop.f32.mrb[0].mxu0
    %v1611 = vadd.f32 0.0, %v1610
    %v1612 = vpop.f32.mrb[0].mxu0
    %v1613 = vpop.f32.mrb[0].mxu0
    %1614 = vdwg.mxu0
    %1615 = vmatprep.subr.bf16.mxu0 %v1180
    %1616 = vmatpush1.bf16.msra.mxu0 %v1179
    %1617 = vmatprep.subr.bf16.mxu0 %v1184
    %1618 = vmatpush1.bf16.msra.mxu0 %v1183
    %1619 = vmatprep.subr.bf16.mxu0 %v1188
    %1620 = vmatpush1.bf16.msra.mxu0 %v1187
    %1621 = vmatprep.subr.bf16.mxu0 %v1192
    %1622 = vmatpush1.bf16.msra.mxu0 %v1191
    %1623 = vmatprep.subr.bf16.mxu0 %v1196
    %1624 = vmatpush1.bf16.msra.mxu0 %v1195
    %1625 = vmatprep.subr.bf16.mxu0 %v1200
    %1626 = vmatpush1.bf16.msra.mxu0 %v1199
    %1627 = vmatprep.subr.bf16.mxu0 %v1204
    %1628 = vmatpush1.bf16.msra.mxu0 %v1203
    %1629 = vmatprep.subr.bf16.mxu0 %v1208
    %1630 = vmatpush1.bf16.msra.mxu0 %v1207
    %1631 = vmatprep.subr.bf16.mxu0 0
    %1632 = vmatpush1.bf16.msra.mxu0 0
    %1633 = vmatprep.subr.bf16.mxu0 0
    %1634 = vmatpush1.bf16.msra.mxu0 0
    %1635 = vmatprep.subr.bf16.mxu0 0
    %1636 = vmatpush1.bf16.msra.mxu0 0
    %1637 = vmatprep.subr.bf16.mxu0 0
    %1638 = vmatpush1.bf16.msra.mxu0 0
    %1639 = vmatprep.subr.bf16.mxu0 0
    %1640 = vmatpush1.bf16.msra.mxu0 0
    %1641 = vmatprep.subr.bf16.mxu0 0
    %1642 = vmatpush1.bf16.msra.mxu0 0
    %1643 = vmatprep.subr.bf16.mxu0 0
    %1644 = vmatpush1.bf16.msra.mxu0 0
    %1645 = vmatprep.subr.bf16.mxu0 0
    %1646 = vmatpush1.bf16.msra.mxu0 0
    %1647 = vmatprep.mubr.bf16.mxu0 0
    %1648 = vmatmul.mubr.bf16.gmra.mrb[0].mxu0 %v1573
    %v1649 = vpop.f32.mrb[0].mxu0
    %v1650 = vadd.f32 0.0, %v1649
    %v1651 = vpop.f32.mrb[0].mxu0
    %v1652 = vadd.f32 0.0, %v1651
    %v1653 = vpop.f32.mrb[0].mxu0
    %v1654 = vpop.f32.mrb[0].mxu0
    %1655 = vdwg.mxu0
    %v1656 = vadd.f32 %v1008, %v1609
    %v1657 = vadd.f32 %v1010, %v1611
    %v1658 = vadd.f32 %v1069, %v1650
    %v1659 = vadd.f32 %v1071, %v1652
    %v1660 = vxor.u32 %v1656, 2147483648
    %v1661 = vxor.u32 %v1657, 2147483648
    %v1662 = vxor.u32 %v1658, 2147483648
    %v1663 = vmul.f32 %v1660, 1.442695
    %v1664 = vpow.pop %v1663
    %v1665 = vmul.f32 %v1661, 1.442695
    %v1666 = vpow.pop %v1665
    %v1667 = vmul.f32 %v1662, 1.442695
    %v1668 = vpow.pop %v1667
    %v1669 = vadd.f32 %v1664, 1.0
    %v1670 = vadd.f32 %v1666, 1.0
    %v1671 = vadd.f32 %v1668, 1.0
    %v1672 = vrcp.pop %v1669
    %v1673 = vmul.f32 1.0, %v1672
    %v1674 = vrcp.pop %v1670
    %v1675 = vmul.f32 1.0, %v1674
    %v1676 = vrcp.pop %v1671
    %v1677 = vmul.f32 1.0, %v1676
    %v1678 = vtanh.pop %v1659
    %v1679 = vmul.f32 %v1675, %v1570
    %v1680 = vmul.f32 %v1673, %v1678
    %v1681 = vadd.f32 %v1679, %v1680
    %v1682 = vtanh.pop %v1681
    %v1683 = vmul.f32 %v1677, %v1682
    %v1684 = vpack.c.bf16 %v1683, %v1683
    %1685 = vmatprep.subr.bf16.mxu0 %v1178
    %1686 = vmatpush1.bf16.msra.mxu0 %v1177
    %1687 = vmatprep.subr.bf16.mxu0 %v1182
    %1688 = vmatpush1.bf16.msra.mxu0 %v1181
    %1689 = vmatprep.subr.bf16.mxu0 %v1186
    %1690 = vmatpush1.bf16.msra.mxu0 %v1185
    %1691 = vmatprep.subr.bf16.mxu0 %v1190
    %1692 = vmatpush1.bf16.msra.mxu0 %v1189
    %1693 = vmatprep.subr.bf16.mxu0 %v1194
    %1694 = vmatpush1.bf16.msra.mxu0 %v1193
    %1695 = vmatprep.subr.bf16.mxu0 %v1198
    %1696 = vmatpush1.bf16.msra.mxu0 %v1197
    %1697 = vmatprep.subr.bf16.mxu0 %v1202
    %1698 = vmatpush1.bf16.msra.mxu0 %v1201
    %1699 = vmatprep.subr.bf16.mxu0 %v1206
    %1700 = vmatpush1.bf16.msra.mxu0 %v1205
    %1701 = vmatprep.subr.bf16.mxu0 0
    %1702 = vmatpush1.bf16.msra.mxu0 0
    %1703 = vmatprep.subr.bf16.mxu0 0
    %1704 = vmatpush1.bf16.msra.mxu0 0
    %1705 = vmatprep.subr.bf16.mxu0 0
    %1706 = vmatpush1.bf16.msra.mxu0 0
    %1707 = vmatprep.subr.bf16.mxu0 0
    %1708 = vmatpush1.bf16.msra.mxu0 0
    %1709 = vmatprep.subr.bf16.mxu0 0
    %1710 = vmatpush1.bf16.msra.mxu0 0
    %1711 = vmatprep.subr.bf16.mxu0 0
    %1712 = vmatpush1.bf16.msra.mxu0 0
    %1713 = vmatprep.subr.bf16.mxu0 0
    %1714 = vmatpush1.bf16.msra.mxu0 0
    %1715 = vmatprep.subr.bf16.mxu0 0
    %1716 = vmatpush1.bf16.msra.mxu0 0
    %1717 = vmatprep.mubr.bf16.mxu0 0
    %1718 = vmatmul.mubr.bf16.gmra.mrb[0].mxu0 %v1684
    %v1719 = vpop.f32.mrb[0].mxu0
    %v1720 = vadd.f32 0.0, %v1719
    %v1721 = vpop.f32.mrb[0].mxu0
    %v1722 = vadd.f32 0.0, %v1721
    %v1723 = vpop.f32.mrb[0].mxu0
    %v1724 = vpop.f32.mrb[0].mxu0
    %1725 = vdwg.mxu0
    %1726 = vmatprep.subr.bf16.mxu0 %v1180
    %1727 = vmatpush1.bf16.msra.mxu0 %v1179
    %1728 = vmatprep.subr.bf16.mxu0 %v1184
    %1729 = vmatpush1.bf16.msra.mxu0 %v1183
    %1730 = vmatprep.subr.bf16.mxu0 %v1188
    %1731 = vmatpush1.bf16.msra.mxu0 %v1187
    %1732 = vmatprep.subr.bf16.mxu0 %v1192
    %1733 = vmatpush1.bf16.msra.mxu0 %v1191
    %1734 = vmatprep.subr.bf16.mxu0 %v1196
    %1735 = vmatpush1.bf16.msra.mxu0 %v1195
    %1736 = vmatprep.subr.bf16.mxu0 %v1200
    %1737 = vmatpush1.bf16.msra.mxu0 %v1199
    %1738 = vmatprep.subr.bf16.mxu0 %v1204
    %1739 = vmatpush1.bf16.msra.mxu0 %v1203
    %1740 = vmatprep.subr.bf16.mxu0 %v1208
    %1741 = vmatpush1.bf16.msra.mxu0 %v1207
    %1742 = vmatprep.subr.bf16.mxu0 0
    %1743 = vmatpush1.bf16.msra.mxu0 0
    %1744 = vmatprep.subr.bf16.mxu0 0
    %1745 = vmatpush1.bf16.msra.mxu0 0
    %1746 = vmatprep.subr.bf16.mxu0 0
    %1747 = vmatpush1.bf16.msra.mxu0 0
    %1748 = vmatprep.subr.bf16.mxu0 0
    %1749 = vmatpush1.bf16.msra.mxu0 0
    %1750 = vmatprep.subr.bf16.mxu0 0
    %1751 = vmatpush1.bf16.msra.mxu0 0
    %1752 = vmatprep.subr.bf16.mxu0 0
    %1753 = vmatpush1.bf16.msra.mxu0 0
    %1754 = vmatprep.subr.bf16.mxu0 0
    %1755 = vmatpush1.bf16.msra.mxu0 0
    %1756 = vmatprep.subr.bf16.mxu0 0
    %1757 = vmatpush1.bf16.msra.mxu0 0
    %1758 = vmatprep.mubr.bf16.mxu0 0
    %1759 = vmatmul.mubr.bf16.gmra.mrb[0].mxu0 %v1684
    %v1760 = vpop.f32.mrb[0].mxu0
    %v1761 = vadd.f32 0.0, %v1760
    %v1762 = vpop.f32.mrb[0].mxu0
    %v1763 = vadd.f32 0.0, %v1762
    %v1764 = vpop.f32.mrb[0].mxu0
    %v1765 = vpop.f32.mrb[0].mxu0
    %1766 = vdwg.mxu0
    %v1767 = vadd.f32 %v1014, %v1720
    %v1768 = vadd.f32 %v1016, %v1722
    %v1769 = vadd.f32 %v1075, %v1761
    %v1770 = vadd.f32 %v1077, %v1763
    %v1771 = vxor.u32 %v1767, 2147483648
    %v1772 = vxor.u32 %v1768, 2147483648
    %v1773 = vxor.u32 %v1769, 2147483648
    %v1774 = vmul.f32 %v1771, 1.442695
    %v1775 = vpow.pop %v1774
    %v1776 = vmul.f32 %v1772, 1.442695
    %v1777 = vpow.pop %v1776
    %v1778 = vmul.f32 %v1773, 1.442695
    %v1779 = vpow.pop %v1778
    %v1780 = vadd.f32 %v1775, 1.0
    %v1781 = vadd.f32 %v1777, 1.0
    %v1782 = vadd.f32 %v1779, 1.0
    %v1783 = vrcp.pop %v1780
    %v1784 = vmul.f32 1.0, %v1783
    %v1785 = vrcp.pop %v1781
    %v1786 = vmul.f32 1.0, %v1785
    %v1787 = vrcp.pop %v1782
    %v1788 = vmul.f32 1.0, %v1787
    %v1789 = vtanh.pop %v1770
    %v1790 = vmul.f32 %v1786, %v1681
    %v1791 = vmul.f32 %v1784, %v1789
    %v1792 = vadd.f32 %v1790, %v1791
    %v1793 = vtanh.pop %v1792
    %v1794 = vmul.f32 %v1788, %v1793
    %v1795 = vpack.c.bf16 %v1461, %v1350
    %v1796 = vpack.c.bf16 %v1683, %v1572
    %v1797 = vpack.c.bf16 %v1794, %v1794
    %s1798 = smul.u32 4, 16
    %s1799 = smul.u32 %s1798, 4
    %s1800 = sshll.u32 %s1799, 4
    %1801 = dma.done [#allocation7], %s1800
    %s1802 = sshll.u32 %s1799, 4
    %1803 = dma.done %s115, %s1802
    %v1804 = vld [vmem:[#allocation2] sm:$0xff]
    %v1805 = vld [vmem:[#allocation2 + $0x8] sm:$0xff]
    %v1806 = vld [vmem:[#allocation2 + $0x10] sm:$0xff]
    %v1807 = vld [vmem:[#allocation2 + $0x18] sm:$0xff]
    %v1808 = vld [vmem:[#allocation2 + $0x20] sm:$0xff]
    %v1809 = vld [vmem:[#allocation2 + $0x28] sm:$0xff]
    %v1810 = vld [vmem:[#allocation2 + $0x30] sm:$0xff]
    %v1811 = vld [vmem:[#allocation2 + $0x38] sm:$0xff]
    %v1812 = vld [vmem:[#allocation2 + $0x40] sm:$0xff]
    %v1813 = vld [vmem:[#allocation2 + $0x48] sm:$0xff]
    %v1814 = vld [vmem:[#allocation2 + $0x50] sm:$0xff]
    %v1815 = vld [vmem:[#allocation2 + $0x58] sm:$0xff]
    %v1816 = vld [vmem:[#allocation2 + $0x60] sm:$0xff]
    %v1817 = vld [vmem:[#allocation2 + $0x68] sm:$0xff]
    %v1818 = vld [vmem:[#allocation2 + $0x70] sm:$0xff]
    %v1819 = vld [vmem:[#allocation2 + $0x78] sm:$0xff]
    %v1820 = vld [vmem:[#allocation2 + $0x80] sm:$0xff]
    %v1821 = vld [vmem:[#allocation2 + $0x88] sm:$0xff]
    %v1822 = vld [vmem:[#allocation2 + $0x90] sm:$0xff]
    %v1823 = vld [vmem:[#allocation2 + $0x98] sm:$0xff]
    %v1824 = vld [vmem:[#allocation2 + $0xa0] sm:$0xff]
    %v1825 = vld [vmem:[#allocation2 + $0xa8] sm:$0xff]
    %v1826 = vld [vmem:[#allocation2 + $0xb0] sm:$0xff]
    %v1827 = vld [vmem:[#allocation2 + $0xb8] sm:$0xff]
    %v1828 = vld [vmem:[#allocation2 + $0xc0] sm:$0xff]
    %v1829 = vld [vmem:[#allocation2 + $0xc8] sm:$0xff]
    %v1830 = vld [vmem:[#allocation2 + $0xd0] sm:$0xff]
    %v1831 = vld [vmem:[#allocation2 + $0xd8] sm:$0xff]
    %v1832 = vld [vmem:[#allocation2 + $0xe0] sm:$0xff]
    %v1833 = vld [vmem:[#allocation2 + $0xe8] sm:$0xff]
    %v1834 = vld [vmem:[#allocation2 + $0xf0] sm:$0xff]
    %v1835 = vld [vmem:[#allocation2 + $0xf8] sm:$0xff]
    %v1836 = vld [vmem:[#allocation3] sm:$0xff]
    %v1837 = vld [vmem:[#allocation3 + $0x8] sm:$0xff]
    %v1838 = vld [vmem:[#allocation3 + $0x10] sm:$0xff]
    %v1839 = vld [vmem:[#allocation3 + $0x18] sm:$0xff]
    %v1840 = vld [vmem:[#allocation3 + $0x20] sm:$0xff]
    %v1841 = vld [vmem:[#allocation3 + $0x28] sm:$0xff]
    %v1842 = vld [vmem:[#allocation3 + $0x30] sm:$0xff]
    %v1843 = vld [vmem:[#allocation3 + $0x38] sm:$0xff]
    %v1844 = vld [vmem:[#allocation3 + $0x40] sm:$0xff]
    %v1845 = vld [vmem:[#allocation3 + $0x48] sm:$0xff]
    %v1846 = vld [vmem:[#allocation3 + $0x50] sm:$0xff]
    %v1847 = vld [vmem:[#allocation3 + $0x58] sm:$0xff]
    %v1848 = vld [vmem:[#allocation3 + $0x60] sm:$0xff]
    %v1849 = vld [vmem:[#allocation3 + $0x68] sm:$0xff]
    %v1850 = vld [vmem:[#allocation3 + $0x70] sm:$0xff]
    %v1851 = vld [vmem:[#allocation3 + $0x78] sm:$0xff]
    %v1852 = vld [vmem:[#allocation3 + $0x80] sm:$0xff]
    %v1853 = vld [vmem:[#allocation3 + $0x88] sm:$0xff]
    %v1854 = vld [vmem:[#allocation3 + $0x90] sm:$0xff]
    %v1855 = vld [vmem:[#allocation3 + $0x98] sm:$0xff]
    %v1856 = vld [vmem:[#allocation3 + $0xa0] sm:$0xff]
    %v1857 = vld [vmem:[#allocation3 + $0xa8] sm:$0xff]
    %v1858 = vld [vmem:[#allocation3 + $0xb0] sm:$0xff]
    %v1859 = vld [vmem:[#allocation3 + $0xb8] sm:$0xff]
    %v1860 = vld [vmem:[#allocation3 + $0xc0] sm:$0xff]
    %v1861 = vld [vmem:[#allocation3 + $0xc8] sm:$0xff]
    %v1862 = vld [vmem:[#allocation3 + $0xd0] sm:$0xff]
    %v1863 = vld [vmem:[#allocation3 + $0xd8] sm:$0xff]
    %v1864 = vld [vmem:[#allocation3 + $0xe0] sm:$0xff]
    %v1865 = vld [vmem:[#allocation3 + $0xe8] sm:$0xff]
    %v1866 = vld [vmem:[#allocation3 + $0xf0] sm:$0xff]
    %v1867 = vld [vmem:[#allocation3 + $0xf8] sm:$0xff]
    %v1868 = vld [vmem:[#allocation12] sm:$0xf]
    %v1870 = vlaneseq
    %v1871 = vshrl.u32 %v1870, 7
    %v1872 = vsub.s32 0, %v1871
    %v1873 = vrot.slane %v1868, %v1872
    %v1874 = vlaneseq
    %v1875 = vshrl.u32 %v1874, 7
    %v1876 = vsub.s32 1, %v1875
    %v1877 = vrot.slane %v1868, %v1876
    %v1878 = vlaneseq
    %v1879 = vshrl.u32 %v1878, 7
    %v1880 = vsub.s32 2, %v1879
    %v1881 = vrot.slane %v1868, %v1880
    %v1882 = vlaneseq
    %v1883 = vshrl.u32 %v1882, 7
    %v1884 = vsub.s32 3, %v1883
    %v1885 = vrot.slane %v1868, %v1884
    %1890 = vmatprep.subr.bf16.mxu0 %v1805
    %1891 = vmatpush1.bf16.msra.mxu0 %v1804
    %1892 = vmatprep.subr.bf16.mxu0 %v1809
    %1893 = vmatpush1.bf16.msra.mxu0 %v1808
    %1894 = vmatprep.subr.bf16.mxu0 %v1813
    %1895 = vmatpush1.bf16.msra.mxu0 %v1812
    %1896 = vmatprep.subr.bf16.mxu0 %v1817
    %1897 = vmatpush1.bf16.msra.mxu0 %v1816
    %1898 = vmatprep.subr.bf16.mxu0 %v1821
    %1899 = vmatpush1.bf16.msra.mxu0 %v1820
    %1900 = vmatprep.subr.bf16.mxu0 %v1825
    %1901 = vmatpush1.bf16.msra.mxu0 %v1824
    %1902 = vmatprep.subr.bf16.mxu0 %v1829
    %1903 = vmatpush1.bf16.msra.mxu0 %v1828
    %1904 = vmatprep.subr.bf16.mxu0 %v1833
    %1905 = vmatpush1.bf16.msra.mxu0 %v1832
    %1906 = vmatprep.subr.bf16.mxu0 0
    %1907 = vmatpush1.bf16.msra.mxu0 0
    %1908 = vmatprep.subr.bf16.mxu0 0
    %1909 = vmatpush1.bf16.msra.mxu0 0
    %1910 = vmatprep.subr.bf16.mxu0 0
    %1911 = vmatpush1.bf16.msra.mxu0 0
    %1912 = vmatprep.subr.bf16.mxu0 0
    %1913 = vmatpush1.bf16.msra.mxu0 0
    %1914 = vmatprep.subr.bf16.mxu0 0
    %1915 = vmatpush1.bf16.msra.mxu0 0
    %1916 = vmatprep.subr.bf16.mxu0 0
    %1917 = vmatpush1.bf16.msra.mxu0 0
    %1918 = vmatprep.subr.bf16.mxu0 0
    %1919 = vmatpush1.bf16.msra.mxu0 0
    %1920 = vmatprep.subr.bf16.mxu0 0
    %1921 = vmatpush1.bf16.msra.mxu0 0
    %1922 = vmatprep.mubr.bf16.mxu0 0
    %1923 = vmatmul.mubr.bf16.gmra.mrb[0].mxu0 %v1795
    %v1924 = vpop.f32.mrb[0].mxu0
    %v1925 = vadd.f32 %v1873, %v1924
    %v1926 = vpop.f32.mrb[0].mxu0
    %v1927 = vadd.f32 %v1877, %v1926
    %v1928 = vpop.f32.mrb[0].mxu0
    %v1929 = vadd.f32 %v1873, %v1928
    %v1930 = vpop.f32.mrb[0].mxu0
    %v1931 = vadd.f32 %v1877, %v1930
    %1932 = vmatprep.mubr.bf16.mxu0 0
    %1933 = vmatmul.mubr.bf16.gmra.mrb[0].mxu0 %v1796
    %v1934 = vpop.f32.mrb[0].mxu0
    %v1935 = vadd.f32 %v1873, %v1934
    %v1936 = vpop.f32.mrb[0].mxu0
    %v1937 = vadd.f32 %v1877, %v1936
    %v1938 = vpop.f32.mrb[0].mxu0
    %v1939 = vadd.f32 %v1873, %v1938
    %v1940 = vpop.f32.mrb[0].mxu0
    %v1941 = vadd.f32 %v1877, %v1940
    %1942 = vmatprep.mubr.bf16.mxu0 0
    %1943 = vmatmul.mubr.bf16.gmra.mrb[0].mxu0 %v1797
    %v1944 = vpop.f32.mrb[0].mxu0
    %v1945 = vadd.f32 %v1873, %v1944
    %v1946 = vpop.f32.mrb[0].mxu0
    %v1947 = vadd.f32 %v1877, %v1946
    %v1948 = vpop.f32.mrb[0].mxu0
    %v1949 = vpop.f32.mrb[0].mxu0
    %1950 = vdwg.mxu0
    %1951 = vmatprep.subr.bf16.mxu0 %v1807
    %1952 = vmatpush1.bf16.msra.mxu0 %v1806
    %1953 = vmatprep.subr.bf16.mxu0 %v1811
    %1954 = vmatpush1.bf16.msra.mxu0 %v1810
    %1955 = vmatprep.subr.bf16.mxu0 %v1815
    %1956 = vmatpush1.bf16.msra.mxu0 %v1814
    %1957 = vmatprep.subr.bf16.mxu0 %v1819
    %1958 = vmatpush1.bf16.msra.mxu0 %v1818
    %1959 = vmatprep.subr.bf16.mxu0 %v1823
    %1960 = vmatpush1.bf16.msra.mxu0 %v1822
    %1961 = vmatprep.subr.bf16.mxu0 %v1827
    %1962 = vmatpush1.bf16.msra.mxu0 %v1826
    %1963 = vmatprep.subr.bf16.mxu0 %v1831
    %1964 = vmatpush1.bf16.msra.mxu0 %v1830
    %1965 = vmatprep.subr.bf16.mxu0 %v1835
    %1966 = vmatpush1.bf16.msra.mxu0 %v1834
    %1967 = vmatprep.subr.bf16.mxu0 0
    %1968 = vmatpush1.bf16.msra.mxu0 0
    %1969 = vmatprep.subr.bf16.mxu0 0
    %1970 = vmatpush1.bf16.msra.mxu0 0
    %1971 = vmatprep.subr.bf16.mxu0 0
    %1972 = vmatpush1.bf16.msra.mxu0 0
    %1973 = vmatprep.subr.bf16.mxu0 0
    %1974 = vmatpush1.bf16.msra.mxu0 0
    %1975 = vmatprep.subr.bf16.mxu0 0
    %1976 = vmatpush1.bf16.msra.mxu0 0
    %1977 = vmatprep.subr.bf16.mxu0 0
    %1978 = vmatpush1.bf16.msra.mxu0 0
    %1979 = vmatprep.subr.bf16.mxu0 0
    %1980 = vmatpush1.bf16.msra.mxu0 0
    %1981 = vmatprep.subr.bf16.mxu0 0
    %1982 = vmatpush1.bf16.msra.mxu0 0
    %1983 = vmatprep.mubr.bf16.mxu0 0
    %1984 = vmatmul.mubr.bf16.gmra.mrb[0].mxu0 %v1795
    %v1985 = vpop.f32.mrb[0].mxu0
    %v1986 = vadd.f32 %v1881, %v1985
    %v1987 = vpop.f32.mrb[0].mxu0
    %v1988 = vadd.f32 %v1885, %v1987
    %v1989 = vpop.f32.mrb[0].mxu0
    %v1990 = vadd.f32 %v1881, %v1989
    %v1991 = vpop.f32.mrb[0].mxu0
    %v1992 = vadd.f32 %v1885, %v1991
    %1993 = vmatprep.mubr.bf16.mxu0 0
    %1994 = vmatmul.mubr.bf16.gmra.mrb[0].mxu0 %v1796
    %v1995 = vpop.f32.mrb[0].mxu0
    %v1996 = vadd.f32 %v1881, %v1995
    %v1997 = vpop.f32.mrb[0].mxu0
    %v1998 = vadd.f32 %v1885, %v1997
    %v1999 = vpop.f32.mrb[0].mxu0
    %v2000 = vadd.f32 %v1881, %v1999
    %v2001 = vpop.f32.mrb[0].mxu0
    %v2002 = vadd.f32 %v1885, %v2001
    %2003 = vmatprep.mubr.bf16.mxu0 0
    %2004 = vmatmul.mubr.bf16.gmra.mrb[0].mxu0 %v1797
    %v2005 = vpop.f32.mrb[0].mxu0
    %v2006 = vadd.f32 %v1881, %v2005
    %v2007 = vpop.f32.mrb[0].mxu0
    %v2008 = vadd.f32 %v1885, %v2007
    %v2009 = vpop.f32.mrb[0].mxu0
    %v2010 = vpop.f32.mrb[0].mxu0
    %2011 = vdwg.mxu0
    %2012 = vmatprep.subr.bf16.mxu0 %v1837
    %2013 = vmatpush1.bf16.msra.mxu0 %v1836
    %2014 = vmatprep.subr.bf16.mxu0 %v1841
    %2015 = vmatpush1.bf16.msra.mxu0 %v1840
    %2016 = vmatprep.subr.bf16.mxu0 %v1845
    %2017 = vmatpush1.bf16.msra.mxu0 %v1844
    %2018 = vmatprep.subr.bf16.mxu0 %v1849
    %2019 = vmatpush1.bf16.msra.mxu0 %v1848
    %2020 = vmatprep.subr.bf16.mxu0 %v1853
    %2021 = vmatpush1.bf16.msra.mxu0 %v1852
    %2022 = vmatprep.subr.bf16.mxu0 %v1857
    %2023 = vmatpush1.bf16.msra.mxu0 %v1856
    %2024 = vmatprep.subr.bf16.mxu0 %v1861
    %2025 = vmatpush1.bf16.msra.mxu0 %v1860
    %2026 = vmatprep.subr.bf16.mxu0 %v1865
    %2027 = vmatpush1.bf16.msra.mxu0 %v1864
    %2028 = vmatprep.subr.bf16.mxu0 0
    %2029 = vmatpush1.bf16.msra.mxu0 0
    %2030 = vmatprep.subr.bf16.mxu0 0
    %2031 = vmatpush1.bf16.msra.mxu0 0
    %2032 = vmatprep.subr.bf16.mxu0 0
    %2033 = vmatpush1.bf16.msra.mxu0 0
    %2034 = vmatprep.subr.bf16.mxu0 0
    %2035 = vmatpush1.bf16.msra.mxu0 0
    %2036 = vmatprep.subr.bf16.mxu0 0
    %2037 = vmatpush1.bf16.msra.mxu0 0
    %2038 = vmatprep.subr.bf16.mxu0 0
    %2039 = vmatpush1.bf16.msra.mxu0 0
    %2040 = vmatprep.subr.bf16.mxu0 0
    %2041 = vmatpush1.bf16.msra.mxu0 0
    %2042 = vmatprep.subr.bf16.mxu0 0
    %2043 = vmatpush1.bf16.msra.mxu0 0
    %2044 = vmatprep.mubr.bf16.mxu0 0
    %2045 = vmatmul.mubr.bf16.gmra.mrb[0].mxu0 0
    %v2046 = vpop.f32.mrb[0].mxu0
    %v2047 = vadd.f32 0.0, %v2046
    %v2048 = vpop.f32.mrb[0].mxu0
    %v2049 = vadd.f32 0.0, %v2048
    %v2050 = vpop.f32.mrb[0].mxu0
    %v2051 = vpop.f32.mrb[0].mxu0
    %2052 = vdwg.mxu0
    %2053 = vmatprep.subr.bf16.mxu0 %v1839
    %2054 = vmatpush1.bf16.msra.mxu0 %v1838
    %2055 = vmatprep.subr.bf16.mxu0 %v1843
    %2056 = vmatpush1.bf16.msra.mxu0 %v1842
    %2057 = vmatprep.subr.bf16.mxu0 %v1847
    %2058 = vmatpush1.bf16.msra.mxu0 %v1846
    %2059 = vmatprep.subr.bf16.mxu0 %v1851
    %2060 = vmatpush1.bf16.msra.mxu0 %v1850
    %2061 = vmatprep.subr.bf16.mxu0 %v1855
    %2062 = vmatpush1.bf16.msra.mxu0 %v1854
    %2063 = vmatprep.subr.bf16.mxu0 %v1859
    %2064 = vmatpush1.bf16.msra.mxu0 %v1858
    %2065 = vmatprep.subr.bf16.mxu0 %v1863
    %2066 = vmatpush1.bf16.msra.mxu0 %v1862
    %2067 = vmatprep.subr.bf16.mxu0 %v1867
    %2068 = vmatpush1.bf16.msra.mxu0 %v1866
    %2069 = vmatprep.subr.bf16.mxu0 0
    %2070 = vmatpush1.bf16.msra.mxu0 0
    %2071 = vmatprep.subr.bf16.mxu0 0
    %2072 = vmatpush1.bf16.msra.mxu0 0
    %2073 = vmatprep.subr.bf16.mxu0 0
    %2074 = vmatpush1.bf16.msra.mxu0 0
    %2075 = vmatprep.subr.bf16.mxu0 0
    %2076 = vmatpush1.bf16.msra.mxu0 0
    %2077 = vmatprep.subr.bf16.mxu0 0
    %2078 = vmatpush1.bf16.msra.mxu0 0
    %2079 = vmatprep.subr.bf16.mxu0 0
    %2080 = vmatpush1.bf16.msra.mxu0 0
    %2081 = vmatprep.subr.bf16.mxu0 0
    %2082 = vmatpush1.bf16.msra.mxu0 0
    %2083 = vmatprep.subr.bf16.mxu0 0
    %2084 = vmatpush1.bf16.msra.mxu0 0
    %2085 = vmatprep.mubr.bf16.mxu0 0
    %2086 = vmatmul.mubr.bf16.gmra.mrb[0].mxu0 0
    %v2087 = vpop.f32.mrb[0].mxu0
    %v2088 = vadd.f32 0.0, %v2087
    %v2089 = vpop.f32.mrb[0].mxu0
    %v2090 = vadd.f32 0.0, %v2089
    %v2091 = vpop.f32.mrb[0].mxu0
    %v2092 = vpop.f32.mrb[0].mxu0
    %2093 = vdwg.mxu0
    %v2094 = vadd.f32 %v1925, %v2047
    %v2095 = vadd.f32 %v1927, %v2049
    %v2096 = vadd.f32 %v1986, %v2088
    %v2097 = vadd.f32 %v1988, %v2090
    %v2098 = vxor.u32 %v2094, 2147483648
    %v2099 = vxor.u32 %v2095, 2147483648
    %v2100 = vxor.u32 %v2096, 2147483648
    %v2101 = vmul.f32 %v2098, 1.442695
    %v2102 = vpow.pop %v2101
    %v2103 = vmul.f32 %v2099, 1.442695
    %v2104 = vpow.pop %v2103
    %v2105 = vmul.f32 %v2100, 1.442695
    %v2106 = vpow.pop %v2105
    %v2107 = vadd.f32 %v2102, 1.0
    %v2108 = vadd.f32 %v2104, 1.0
    %v2109 = vadd.f32 %v2106, 1.0
    %v2110 = vrcp.pop %v2107
    %v2111 = vmul.f32 1.0, %v2110
    %v2112 = vrcp.pop %v2108
    %v2113 = vmul.f32 1.0, %v2112
    %v2114 = vrcp.pop %v2109
    %v2115 = vmul.f32 1.0, %v2114
    %v2116 = vtanh.pop %v2097
    %v2117 = vmul.f32 %v2113, 0.0
    %v2118 = vmul.f32 %v2111, %v2116
    %v2119 = vadd.f32 %v2117, %v2118
    %v2120 = vtanh.pop %v2119
    %v2121 = vmul.f32 %v2115, %v2120
    %v2122 = vpack.c.bf16 %v2121, %v2121
    %2123 = vmatprep.subr.bf16.mxu0 %v1837
    %2124 = vmatpush1.bf16.msra.mxu0 %v1836
    %2125 = vmatprep.subr.bf16.mxu0 %v1841
    %2126 = vmatpush1.bf16.msra.mxu0 %v1840
    %2127 = vmatprep.subr.bf16.mxu0 %v1845
    %2128 = vmatpush1.bf16.msra.mxu0 %v1844
    %2129 = vmatprep.subr.bf16.mxu0 %v1849
    %2130 = vmatpush1.bf16.msra.mxu0 %v1848
    %2131 = vmatprep.subr.bf16.mxu0 %v1853
    %2132 = vmatpush1.bf16.msra.mxu0 %v1852
    %2133 = vmatprep.subr.bf16.mxu0 %v1857
    %2134 = vmatpush1.bf16.msra.mxu0 %v1856
    %2135 = vmatprep.subr.bf16.mxu0 %v1861
    %2136 = vmatpush1.bf16.msra.mxu0 %v1860
    %2137 = vmatprep.subr.bf16.mxu0 %v1865
    %2138 = vmatpush1.bf16.msra.mxu0 %v1864
    %2139 = vmatprep.subr.bf16.mxu0 0
    %2140 = vmatpush1.bf16.msra.mxu0 0
    %2141 = vmatprep.subr.bf16.mxu0 0
    %2142 = vmatpush1.bf16.msra.mxu0 0
    %2143 = vmatprep.subr.bf16.mxu0 0
    %2144 = vmatpush1.bf16.msra.mxu0 0
    %2145 = vmatprep.subr.bf16.mxu0 0
    %2146 = vmatpush1.bf16.msra.mxu0 0
    %2147 = vmatprep.subr.bf16.mxu0 0
    %2148 = vmatpush1.bf16.msra.mxu0 0
    %2149 = vmatprep.subr.bf16.mxu0 0
    %2150 = vmatpush1.bf16.msra.mxu0 0
    %2151 = vmatprep.subr.bf16.mxu0 0
    %2152 = vmatpush1.bf16.msra.mxu0 0
    %2153 = vmatprep.subr.bf16.mxu0 0
    %2154 = vmatpush1.bf16.msra.mxu0 0
    %2155 = vmatprep.mubr.bf16.mxu0 0
    %2156 = vmatmul.mubr.bf16.gmra.mrb[0].mxu0 %v2122
    %v2157 = vpop.f32.mrb[0].mxu0
    %v2158 = vadd.f32 0.0, %v2157
    %v2159 = vpop.f32.mrb[0].mxu0
    %v2160 = vadd.f32 0.0, %v2159
    %v2161 = vpop.f32.mrb[0].mxu0
    %v2162 = vpop.f32.mrb[0].mxu0
    %2163 = vdwg.mxu0
    %2164 = vmatprep.subr.bf16.mxu0 %v1839
    %2165 = vmatpush1.bf16.msra.mxu0 %v1838
    %2166 = vmatprep.subr.bf16.mxu0 %v1843
    %2167 = vmatpush1.bf16.msra.mxu0 %v1842
    %2168 = vmatprep.subr.bf16.mxu0 %v1847
    %2169 = vmatpush1.bf16.msra.mxu0 %v1846
    %2170 = vmatprep.subr.bf16.mxu0 %v1851
    %2171 = vmatpush1.bf16.msra.mxu0 %v1850
    %2172 = vmatprep.subr.bf16.mxu0 %v1855
    %2173 = vmatpush1.bf16.msra.mxu0 %v1854
    %2174 = vmatprep.subr.bf16.mxu0 %v1859
    %2175 = vmatpush1.bf16.msra.mxu0 %v1858
    %2176 = vmatprep.subr.bf16.mxu0 %v1863
    %2177 = vmatpush1.bf16.msra.mxu0 %v1862
    %2178 = vmatprep.subr.bf16.mxu0 %v1867
    %2179 = vmatpush1.bf16.msra.mxu0 %v1866
    %2180 = vmatprep.subr.bf16.mxu0 0
    %2181 = vmatpush1.bf16.msra.mxu0 0
    %2182 = vmatprep.subr.bf16.mxu0 0
    %2183 = vmatpush1.bf16.msra.mxu0 0
    %2184 = vmatprep.subr.bf16.mxu0 0
    %2185 = vmatpush1.bf16.msra.mxu0 0
    %2186 = vmatprep.subr.bf16.mxu0 0
    %2187 = vmatpush1.bf16.msra.mxu0 0
    %2188 = vmatprep.subr.bf16.mxu0 0
    %2189 = vmatpush1.bf16.msra.mxu0 0
    %2190 = vmatprep.subr.bf16.mxu0 0
    %2191 = vmatpush1.bf16.msra.mxu0 0
    %2192 = vmatprep.subr.bf16.mxu0 0
    %2193 = vmatpush1.bf16.msra.mxu0 0
    %2194 = vmatprep.subr.bf16.mxu0 0
    %2195 = vmatpush1.bf16.msra.mxu0 0
    %2196 = vmatprep.mubr.bf16.mxu0 0
    %2197 = vmatmul.mubr.bf16.gmra.mrb[0].mxu0 %v2122
    %v2198 = vpop.f32.mrb[0].mxu0
    %v2199 = vadd.f32 0.0, %v2198
    %v2200 = vpop.f32.mrb[0].mxu0
    %v2201 = vadd.f32 0.0, %v2200
    %v2202 = vpop.f32.mrb[0].mxu0
    %v2203 = vpop.f32.mrb[0].mxu0
    %2204 = vdwg.mxu0
    %v2205 = vadd.f32 %v1929, %v2158
    %v2206 = vadd.f32 %v1931, %v2160
    %v2207 = vadd.f32 %v1990, %v2199
    %v2208 = vadd.f32 %v1992, %v2201
    %v2209 = vxor.u32 %v2205, 2147483648
    %v2210 = vxor.u32 %v2206, 2147483648
    %v2211 = vxor.u32 %v2207, 2147483648
    %v2212 = vmul.f32 %v2209, 1.442695
    %v2213 = vpow.pop %v2212
    %v2214 = vmul.f32 %v2210, 1.442695
    %v2215 = vpow.pop %v2214
    %v2216 = vmul.f32 %v2211, 1.442695
    %v2217 = vpow.pop %v2216
    %v2218 = vadd.f32 %v2213, 1.0
    %v2219 = vadd.f32 %v2215, 1.0
    %v2220 = vadd.f32 %v2217, 1.0
    %v2221 = vrcp.pop %v2218
    %v2222 = vmul.f32 1.0, %v2221
    %v2223 = vrcp.pop %v2219
    %v2224 = vmul.f32 1.0, %v2223
    %v2225 = vrcp.pop %v2220
    %v2226 = vmul.f32 1.0, %v2225
    %v2227 = vtanh.pop %v2208
    %v2228 = vmul.f32 %v2224, %v2119
    %v2229 = vmul.f32 %v2222, %v2227
    %v2230 = vadd.f32 %v2228, %v2229
    %v2231 = vtanh.pop %v2230
    %v2232 = vmul.f32 %v2226, %v2231
    %v2233 = vpack.c.bf16 %v2232, %v2232
    %2234 = vmatprep.subr.bf16.mxu0 %v1837
    %2235 = vmatpush1.bf16.msra.mxu0 %v1836
    %2236 = vmatprep.subr.bf16.mxu0 %v1841
    %2237 = vmatpush1.bf16.msra.mxu0 %v1840
    %2238 = vmatprep.subr.bf16.mxu0 %v1845
    %2239 = vmatpush1.bf16.msra.mxu0 %v1844
    %2240 = vmatprep.subr.bf16.mxu0 %v1849
    %2241 = vmatpush1.bf16.msra.mxu0 %v1848
    %2242 = vmatprep.subr.bf16.mxu0 %v1853
    %2243 = vmatpush1.bf16.msra.mxu0 %v1852
    %2244 = vmatprep.subr.bf16.mxu0 %v1857
    %2245 = vmatpush1.bf16.msra.mxu0 %v1856
    %2246 = vmatprep.subr.bf16.mxu0 %v1861
    %2247 = vmatpush1.bf16.msra.mxu0 %v1860
    %2248 = vmatprep.subr.bf16.mxu0 %v1865
    %2249 = vmatpush1.bf16.msra.mxu0 %v1864
    %2250 = vmatprep.subr.bf16.mxu0 0
    %2251 = vmatpush1.bf16.msra.mxu0 0
    %2252 = vmatprep.subr.bf16.mxu0 0
    %2253 = vmatpush1.bf16.msra.mxu0 0
    %2254 = vmatprep.subr.bf16.mxu0 0
    %2255 = vmatpush1.bf16.msra.mxu0 0
    %2256 = vmatprep.subr.bf16.mxu0 0
    %2257 = vmatpush1.bf16.msra.mxu0 0
    %2258 = vmatprep.subr.bf16.mxu0 0
    %2259 = vmatpush1.bf16.msra.mxu0 0
    %2260 = vmatprep.subr.bf16.mxu0 0
    %2261 = vmatpush1.bf16.msra.mxu0 0
    %2262 = vmatprep.subr.bf16.mxu0 0
    %2263 = vmatpush1.bf16.msra.mxu0 0
    %2264 = vmatprep.subr.bf16.mxu0 0
    %2265 = vmatpush1.bf16.msra.mxu0 0
    %2266 = vmatprep.mubr.bf16.mxu0 0
    %2267 = vmatmul.mubr.bf16.gmra.mrb[0].mxu0 %v2233
    %v2268 = vpop.f32.mrb[0].mxu0
    %v2269 = vadd.f32 0.0, %v2268
    %v2270 = vpop.f32.mrb[0].mxu0
    %v2271 = vadd.f32 0.0, %v2270
    %v2272 = vpop.f32.mrb[0].mxu0
    %v2273 = vpop.f32.mrb[0].mxu0
    %2274 = vdwg.mxu0
    %2275 = vmatprep.subr.bf16.mxu0 %v1839
    %2276 = vmatpush1.bf16.msra.mxu0 %v1838
    %2277 = vmatprep.subr.bf16.mxu0 %v1843
    %2278 = vmatpush1.bf16.msra.mxu0 %v1842
    %2279 = vmatprep.subr.bf16.mxu0 %v1847
    %2280 = vmatpush1.bf16.msra.mxu0 %v1846
    %2281 = vmatprep.subr.bf16.mxu0 %v1851
    %2282 = vmatpush1.bf16.msra.mxu0 %v1850
    %2283 = vmatprep.subr.bf16.mxu0 %v1855
    %2284 = vmatpush1.bf16.msra.mxu0 %v1854
    %2285 = vmatprep.subr.bf16.mxu0 %v1859
    %2286 = vmatpush1.bf16.msra.mxu0 %v1858
    %2287 = vmatprep.subr.bf16.mxu0 %v1863
    %2288 = vmatpush1.bf16.msra.mxu0 %v1862
    %2289 = vmatprep.subr.bf16.mxu0 %v1867
    %2290 = vmatpush1.bf16.msra.mxu0 %v1866
    %2291 = vmatprep.subr.bf16.mxu0 0
    %2292 = vmatpush1.bf16.msra.mxu0 0
    %2293 = vmatprep.subr.bf16.mxu0 0
    %2294 = vmatpush1.bf16.msra.mxu0 0
    %2295 = vmatprep.subr.bf16.mxu0 0
    %2296 = vmatpush1.bf16.msra.mxu0 0
    %2297 = vmatprep.subr.bf16.mxu0 0
    %2298 = vmatpush1.bf16.msra.mxu0 0
    %2299 = vmatprep.subr.bf16.mxu0 0
    %2300 = vmatpush1.bf16.msra.mxu0 0
    %2301 = vmatprep.subr.bf16.mxu0 0
    %2302 = vmatpush1.bf16.msra.mxu0 0
    %2303 = vmatprep.subr.bf16.mxu0 0
    %2304 = vmatpush1.bf16.msra.mxu0 0
    %2305 = vmatprep.subr.bf16.mxu0 0
    %2306 = vmatpush1.bf16.msra.mxu0 0
    %2307 = vmatprep.mubr.bf16.mxu0 0
    %2308 = vmatmul.mubr.bf16.gmra.mrb[0].mxu0 %v2233
    %v2309 = vpop.f32.mrb[0].mxu0
    %v2310 = vadd.f32 0.0, %v2309
    %v2311 = vpop.f32.mrb[0].mxu0
    %v2312 = vadd.f32 0.0, %v2311
    %v2313 = vpop.f32.mrb[0].mxu0
    %v2314 = vpop.f32.mrb[0].mxu0
    %2315 = vdwg.mxu0
    %v2316 = vadd.f32 %v1935, %v2269
    %v2317 = vadd.f32 %v1937, %v2271
    %v2318 = vadd.f32 %v1996, %v2310
    %v2319 = vadd.f32 %v1998, %v2312
    %v2320 = vxor.u32 %v2316, 2147483648
    %v2321 = vxor.u32 %v2317, 2147483648
    %v2322 = vxor.u32 %v2318, 2147483648
    %v2323 = vmul.f32 %v2320, 1.442695
    %v2324 = vpow.pop %v2323
    %v2325 = vmul.f32 %v2321, 1.442695
    %v2326 = vpow.pop %v2325
    %v2327 = vmul.f32 %v2322, 1.442695
    %v2328 = vpow.pop %v2327
    %v2329 = vadd.f32 %v2324, 1.0
    %v2330 = vadd.f32 %v2326, 1.0
    %v2331 = vadd.f32 %v2328, 1.0
    %v2332 = vrcp.pop %v2329
    %v2333 = vmul.f32 1.0, %v2332
    %v2334 = vrcp.pop %v2330
    %v2335 = vmul.f32 1.0, %v2334
    %v2336 = vrcp.pop %v2331
    %v2337 = vmul.f32 1.0, %v2336
    %v2338 = vtanh.pop %v2319
    %v2339 = vmul.f32 %v2335, %v2230
    %v2340 = vmul.f32 %v2333, %v2338
    %v2341 = vadd.f32 %v2339, %v2340
    %v2342 = vtanh.pop %v2341
    %v2343 = vmul.f32 %v2337, %v2342
    %v2344 = vpack.c.bf16 %v2343, %v2343
    %2345 = vmatprep.subr.bf16.mxu0 %v1837
    %2346 = vmatpush1.bf16.msra.mxu0 %v1836
    %2347 = vmatprep.subr.bf16.mxu0 %v1841
    %2348 = vmatpush1.bf16.msra.mxu0 %v1840
    %2349 = vmatprep.subr.bf16.mxu0 %v1845
    %2350 = vmatpush1.bf16.msra.mxu0 %v1844
    %2351 = vmatprep.subr.bf16.mxu0 %v1849
    %2352 = vmatpush1.bf16.msra.mxu0 %v1848
    %2353 = vmatprep.subr.bf16.mxu0 %v1853
    %2354 = vmatpush1.bf16.msra.mxu0 %v1852
    %2355 = vmatprep.subr.bf16.mxu0 %v1857
    %2356 = vmatpush1.bf16.msra.mxu0 %v1856
    %2357 = vmatprep.subr.bf16.mxu0 %v1861
    %2358 = vmatpush1.bf16.msra.mxu0 %v1860
    %2359 = vmatprep.subr.bf16.mxu0 %v1865
    %2360 = vmatpush1.bf16.msra.mxu0 %v1864
    %2361 = vmatprep.subr.bf16.mxu0 0
    %2362 = vmatpush1.bf16.msra.mxu0 0
    %2363 = vmatprep.subr.bf16.mxu0 0
    %2364 = vmatpush1.bf16.msra.mxu0 0
    %2365 = vmatprep.subr.bf16.mxu0 0
    %2366 = vmatpush1.bf16.msra.mxu0 0
    %2367 = vmatprep.subr.bf16.mxu0 0
    %2368 = vmatpush1.bf16.msra.mxu0 0
    %2369 = vmatprep.subr.bf16.mxu0 0
    %2370 = vmatpush1.bf16.msra.mxu0 0
    %2371 = vmatprep.subr.bf16.mxu0 0
    %2372 = vmatpush1.bf16.msra.mxu0 0
    %2373 = vmatprep.subr.bf16.mxu0 0
    %2374 = vmatpush1.bf16.msra.mxu0 0
    %2375 = vmatprep.subr.bf16.mxu0 0
    %2376 = vmatpush1.bf16.msra.mxu0 0
    %2377 = vmatprep.mubr.bf16.mxu0 0
    %2378 = vmatmul.mubr.bf16.gmra.mrb[0].mxu0 %v2344
    %v2379 = vpop.f32.mrb[0].mxu0
    %v2380 = vadd.f32 0.0, %v2379
    %v2381 = vpop.f32.mrb[0].mxu0
    %v2382 = vadd.f32 0.0, %v2381
    %v2383 = vpop.f32.mrb[0].mxu0
    %v2384 = vpop.f32.mrb[0].mxu0
    %2385 = vdwg.mxu0
    %2386 = vmatprep.subr.bf16.mxu0 %v1839
    %2387 = vmatpush1.bf16.msra.mxu0 %v1838
    %2388 = vmatprep.subr.bf16.mxu0 %v1843
    %2389 = vmatpush1.bf16.msra.mxu0 %v1842
    %2390 = vmatprep.subr.bf16.mxu0 %v1847
    %2391 = vmatpush1.bf16.msra.mxu0 %v1846
    %2392 = vmatprep.subr.bf16.mxu0 %v1851
    %2393 = vmatpush1.bf16.msra.mxu0 %v1850
    %2394 = vmatprep.subr.bf16.mxu0 %v1855
    %2395 = vmatpush1.bf16.msra.mxu0 %v1854
    %2396 = vmatprep.subr.bf16.mxu0 %v1859
    %2397 = vmatpush1.bf16.msra.mxu0 %v1858
    %2398 = vmatprep.subr.bf16.mxu0 %v1863
    %2399 = vmatpush1.bf16.msra.mxu0 %v1862
    %2400 = vmatprep.subr.bf16.mxu0 %v1867
    %2401 = vmatpush1.bf16.msra.mxu0 %v1866
    %2402 = vmatprep.subr.bf16.mxu0 0
    %2403 = vmatpush1.bf16.msra.mxu0 0
    %2404 = vmatprep.subr.bf16.mxu0 0
    %2405 = vmatpush1.bf16.msra.mxu0 0
    %2406 = vmatprep.subr.bf16.mxu0 0
    %2407 = vmatpush1.bf16.msra.mxu0 0
    %2408 = vmatprep.subr.bf16.mxu0 0
    %2409 = vmatpush1.bf16.msra.mxu0 0
    %2410 = vmatprep.subr.bf16.mxu0 0
    %2411 = vmatpush1.bf16.msra.mxu0 0
    %2412 = vmatprep.subr.bf16.mxu0 0
    %2413 = vmatpush1.bf16.msra.mxu0 0
    %2414 = vmatprep.subr.bf16.mxu0 0
    %2415 = vmatpush1.bf16.msra.mxu0 0
    %2416 = vmatprep.subr.bf16.mxu0 0
    %2417 = vmatpush1.bf16.msra.mxu0 0
    %2418 = vmatprep.mubr.bf16.mxu0 0
    %2419 = vmatmul.mubr.bf16.gmra.mrb[0].mxu0 %v2344
    %v2420 = vpop.f32.mrb[0].mxu0
    %v2421 = vadd.f32 0.0, %v2420
    %v2422 = vpop.f32.mrb[0].mxu0
    %v2423 = vadd.f32 0.0, %v2422
    %v2424 = vpop.f32.mrb[0].mxu0
    %v2425 = vpop.f32.mrb[0].mxu0
    %2426 = vdwg.mxu0
    %v2427 = vadd.f32 %v1939, %v2380
    %v2428 = vadd.f32 %v1941, %v2382
    %v2429 = vadd.f32 %v2000, %v2421
    %v2430 = vadd.f32 %v2002, %v2423
    %v2431 = vxor.u32 %v2427, 2147483648
    %v2432 = vxor.u32 %v2428, 2147483648
    %v2433 = vxor.u32 %v2429, 2147483648
    %v2434 = vmul.f32 %v2431, 1.442695
    %v2435 = vpow.pop %v2434
    %v2436 = vmul.f32 %v2432, 1.442695
    %v2437 = vpow.pop %v2436
    %v2438 = vmul.f32 %v2433, 1.442695
    %v2439 = vpow.pop %v2438
    %v2440 = vadd.f32 %v2435, 1.0
    %v2441 = vadd.f32 %v2437, 1.0
    %v2442 = vadd.f32 %v2439, 1.0
    %v2443 = vrcp.pop %v2440
    %v2444 = vmul.f32 1.0, %v2443
    %v2445 = vrcp.pop %v2441
    %v2446 = vmul.f32 1.0, %v2445
    %v2447 = vrcp.pop %v2442
    %v2448 = vmul.f32 1.0, %v2447
    %v2449 = vtanh.pop %v2430
    %v2450 = vmul.f32 %v2446, %v2341
    %v2451 = vmul.f32 %v2444, %v2449
    %v2452 = vadd.f32 %v2450, %v2451
    %v2453 = vtanh.pop %v2452
    %v2454 = vmul.f32 %v2448, %v2453
    %v2455 = vpack.c.bf16 %v2454, %v2454
    %2456 = vmatprep.subr.bf16.mxu0 %v1837
    %2457 = vmatpush1.bf16.msra.mxu0 %v1836
    %2458 = vmatprep.subr.bf16.mxu0 %v1841
    %2459 = vmatpush1.bf16.msra.mxu0 %v1840
    %2460 = vmatprep.subr.bf16.mxu0 %v1845
    %2461 = vmatpush1.bf16.msra.mxu0 %v1844
    %2462 = vmatprep.subr.bf16.mxu0 %v1849
    %2463 = vmatpush1.bf16.msra.mxu0 %v1848
    %2464 = vmatprep.subr.bf16.mxu0 %v1853
    %2465 = vmatpush1.bf16.msra.mxu0 %v1852
    %2466 = vmatprep.subr.bf16.mxu0 %v1857
    %2467 = vmatpush1.bf16.msra.mxu0 %v1856
    %2468 = vmatprep.subr.bf16.mxu0 %v1861
    %2469 = vmatpush1.bf16.msra.mxu0 %v1860
    %2470 = vmatprep.subr.bf16.mxu0 %v1865
    %2471 = vmatpush1.bf16.msra.mxu0 %v1864
    %2472 = vmatprep.subr.bf16.mxu0 0
    %2473 = vmatpush1.bf16.msra.mxu0 0
    %2474 = vmatprep.subr.bf16.mxu0 0
    %2475 = vmatpush1.bf16.msra.mxu0 0
    %2476 = vmatprep.subr.bf16.mxu0 0
    %2477 = vmatpush1.bf16.msra.mxu0 0
    %2478 = vmatprep.subr.bf16.mxu0 0
    %2479 = vmatpush1.bf16.msra.mxu0 0
    %2480 = vmatprep.subr.bf16.mxu0 0
    %2481 = vmatpush1.bf16.msra.mxu0 0
    %2482 = vmatprep.subr.bf16.mxu0 0
    %2483 = vmatpush1.bf16.msra.mxu0 0
    %2484 = vmatprep.subr.bf16.mxu0 0
    %2485 = vmatpush1.bf16.msra.mxu0 0
    %2486 = vmatprep.subr.bf16.mxu0 0
    %2487 = vmatpush1.bf16.msra.mxu0 0
    %2488 = vmatprep.mubr.bf16.mxu0 0
    %2489 = vmatmul.mubr.bf16.gmra.mrb[0].mxu0 %v2455
    %v2490 = vpop.f32.mrb[0].mxu0
    %v2491 = vadd.f32 0.0, %v2490
    %v2492 = vpop.f32.mrb[0].mxu0
    %v2493 = vadd.f32 0.0, %v2492
    %v2494 = vpop.f32.mrb[0].mxu0
    %v2495 = vpop.f32.mrb[0].mxu0
    %2496 = vdwg.mxu0
    %2497 = vmatprep.subr.bf16.mxu0 %v1839
    %2498 = vmatpush1.bf16.msra.mxu0 %v1838
    %2499 = vmatprep.subr.bf16.mxu0 %v1843
    %2500 = vmatpush1.bf16.msra.mxu0 %v1842
    %2501 = vmatprep.subr.bf16.mxu0 %v1847
    %2502 = vmatpush1.bf16.msra.mxu0 %v1846
    %2503 = vmatprep.subr.bf16.mxu0 %v1851
    %2504 = vmatpush1.bf16.msra.mxu0 %v1850
    %2505 = vmatprep.subr.bf16.mxu0 %v1855
    %2506 = vmatpush1.bf16.msra.mxu0 %v1854
    %2507 = vmatprep.subr.bf16.mxu0 %v1859
    %2508 = vmatpush1.bf16.msra.mxu0 %v1858
    %2509 = vmatprep.subr.bf16.mxu0 %v1863
    %2510 = vmatpush1.bf16.msra.mxu0 %v1862
    %2511 = vmatprep.subr.bf16.mxu0 %v1867
    %2512 = vmatpush1.bf16.msra.mxu0 %v1866
    %2513 = vmatprep.subr.bf16.mxu0 0
    %2514 = vmatpush1.bf16.msra.mxu0 0
    %2515 = vmatprep.subr.bf16.mxu0 0
    %2516 = vmatpush1.bf16.msra.mxu0 0
    %2517 = vmatprep.subr.bf16.mxu0 0
    %2518 = vmatpush1.bf16.msra.mxu0 0
    %2519 = vmatprep.subr.bf16.mxu0 0
    %2520 = vmatpush1.bf16.msra.mxu0 0
    %2521 = vmatprep.subr.bf16.mxu0 0
    %2522 = vmatpush1.bf16.msra.mxu0 0
    %2523 = vmatprep.subr.bf16.mxu0 0
    %2524 = vmatpush1.bf16.msra.mxu0 0
    %2525 = vmatprep.subr.bf16.mxu0 0
    %2526 = vmatpush1.bf16.msra.mxu0 0
    %2527 = vmatprep.subr.bf16.mxu0 0
    %2528 = vmatpush1.bf16.msra.mxu0 0
    %2529 = vmatprep.mubr.bf16.mxu0 0
    %2530 = vmatmul.mubr.bf16.gmra.mrb[0].mxu0 %v2455
    %v2531 = vpop.f32.mrb[0].mxu0
    %v2532 = vadd.f32 0.0, %v2531
    %v2533 = vpop.f32.mrb[0].mxu0
    %v2534 = vadd.f32 0.0, %v2533
    %v2535 = vpop.f32.mrb[0].mxu0
    %v2536 = vpop.f32.mrb[0].mxu0
    %2537 = vdwg.mxu0
    %v2538 = vadd.f32 %v1945, %v2491
    %v2539 = vadd.f32 %v1947, %v2493
    %v2540 = vadd.f32 %v2006, %v2532
    %v2541 = vadd.f32 %v2008, %v2534
    %v2542 = vxor.u32 %v2538, 2147483648
    %v2543 = vxor.u32 %v2539, 2147483648
    %v2544 = vxor.u32 %v2540, 2147483648
    %v2545 = vmul.f32 %v2542, 1.442695
    %v2546 = vpow.pop %v2545
    %v2547 = vmul.f32 %v2543, 1.442695
    %v2548 = vpow.pop %v2547
    %v2549 = vmul.f32 %v2544, 1.442695
    %v2550 = vpow.pop %v2549
    %v2551 = vadd.f32 %v2546, 1.0
    %v2552 = vadd.f32 %v2548, 1.0
    %v2553 = vadd.f32 %v2550, 1.0
    %v2554 = vrcp.pop %v2551
    %v2555 = vmul.f32 1.0, %v2554
    %v2556 = vrcp.pop %v2552
    %v2557 = vmul.f32 1.0, %v2556
    %v2558 = vrcp.pop %v2553
    %v2559 = vmul.f32 1.0, %v2558
    %v2560 = vtanh.pop %v2541
    %v2561 = vmul.f32 %v2557, %v2452
    %v2562 = vmul.f32 %v2555, %v2560
    %v2563 = vadd.f32 %v2561, %v2562
    %v2564 = vtanh.pop %v2563
    %v2565 = vmul.f32 %v2559, %v2564
    %v2566 = vpack.c.bf16 %v2232, %v2121
    %v2567 = vpack.c.bf16 %v2454, %v2343
    %v2568 = vpack.c.bf16 %v2565, %v2565
    %s2569 = sshll.u32 %s1799, 4
    %2570 = dma.done %s150, %s2569
    %s2571 = sshll.u32 %s1799, 4
    %2572 = dma.done %s455, %s2571
    %v2573 = vld [vmem:[#allocation4] sm:$0xff]
    %v2574 = vld [vmem:[#allocation4 + $0x8] sm:$0xff]
    %v2575 = vld [vmem:[#allocation4 + $0x10] sm:$0xff]
    %v2576 = vld [vmem:[#allocation4 + $0x18] sm:$0xff]
    %v2577 = vld [vmem:[#allocation4 + $0x20] sm:$0xff]
    %v2578 = vld [vmem:[#allocation4 + $0x28] sm:$0xff]
    %v2579 = vld [vmem:[#allocation4 + $0x30] sm:$0xff]
    %v2580 = vld [vmem:[#allocation4 + $0x38] sm:$0xff]
    %v2581 = vld [vmem:[#allocation4 + $0x40] sm:$0xff]
    %v2582 = vld [vmem:[#allocation4 + $0x48] sm:$0xff]
    %v2583 = vld [vmem:[#allocation4 + $0x50] sm:$0xff]
    %v2584 = vld [vmem:[#allocation4 + $0x58] sm:$0xff]
    %v2585 = vld [vmem:[#allocation4 + $0x60] sm:$0xff]
    %v2586 = vld [vmem:[#allocation4 + $0x68] sm:$0xff]
    %v2587 = vld [vmem:[#allocation4 + $0x70] sm:$0xff]
    %v2588 = vld [vmem:[#allocation4 + $0x78] sm:$0xff]
    %v2589 = vld [vmem:[#allocation4 + $0x80] sm:$0xff]
    %v2590 = vld [vmem:[#allocation4 + $0x88] sm:$0xff]
    %v2591 = vld [vmem:[#allocation4 + $0x90] sm:$0xff]
    %v2592 = vld [vmem:[#allocation4 + $0x98] sm:$0xff]
    %v2593 = vld [vmem:[#allocation4 + $0xa0] sm:$0xff]
    %v2594 = vld [vmem:[#allocation4 + $0xa8] sm:$0xff]
    %v2595 = vld [vmem:[#allocation4 + $0xb0] sm:$0xff]
    %v2596 = vld [vmem:[#allocation4 + $0xb8] sm:$0xff]
    %v2597 = vld [vmem:[#allocation4 + $0xc0] sm:$0xff]
    %v2598 = vld [vmem:[#allocation4 + $0xc8] sm:$0xff]
    %v2599 = vld [vmem:[#allocation4 + $0xd0] sm:$0xff]
    %v2600 = vld [vmem:[#allocation4 + $0xd8] sm:$0xff]
    %v2601 = vld [vmem:[#allocation4 + $0xe0] sm:$0xff]
    %v2602 = vld [vmem:[#allocation4 + $0xe8] sm:$0xff]
    %v2603 = vld [vmem:[#allocation4 + $0xf0] sm:$0xff]
    %v2604 = vld [vmem:[#allocation4 + $0xf8] sm:$0xff]
    %v2605 = vld [vmem:[#allocation5] sm:$0xff]
    %v2606 = vld [vmem:[#allocation5 + $0x8] sm:$0xff]
    %v2607 = vld [vmem:[#allocation5 + $0x10] sm:$0xff]
    %v2608 = vld [vmem:[#allocation5 + $0x18] sm:$0xff]
    %v2609 = vld [vmem:[#allocation5 + $0x20] sm:$0xff]
    %v2610 = vld [vmem:[#allocation5 + $0x28] sm:$0xff]
    %v2611 = vld [vmem:[#allocation5 + $0x30] sm:$0xff]
    %v2612 = vld [vmem:[#allocation5 + $0x38] sm:$0xff]
    %v2613 = vld [vmem:[#allocation5 + $0x40] sm:$0xff]
    %v2614 = vld [vmem:[#allocation5 + $0x48] sm:$0xff]
    %v2615 = vld [vmem:[#allocation5 + $0x50] sm:$0xff]
    %v2616 = vld [vmem:[#allocation5 + $0x58] sm:$0xff]
    %v2617 = vld [vmem:[#allocation5 + $0x60] sm:$0xff]
    %v2618 = vld [vmem:[#allocation5 + $0x68] sm:$0xff]
    %v2619 = vld [vmem:[#allocation5 + $0x70] sm:$0xff]
    %v2620 = vld [vmem:[#allocation5 + $0x78] sm:$0xff]
    %v2621 = vld [vmem:[#allocation5 + $0x80] sm:$0xff]
    %v2622 = vld [vmem:[#allocation5 + $0x88] sm:$0xff]
    %v2623 = vld [vmem:[#allocation5 + $0x90] sm:$0xff]
    %v2624 = vld [vmem:[#allocation5 + $0x98] sm:$0xff]
    %v2625 = vld [vmem:[#allocation5 + $0xa0] sm:$0xff]
    %v2626 = vld [vmem:[#allocation5 + $0xa8] sm:$0xff]
    %v2627 = vld [vmem:[#allocation5 + $0xb0] sm:$0xff]
    %v2628 = vld [vmem:[#allocation5 + $0xb8] sm:$0xff]
    %v2629 = vld [vmem:[#allocation5 + $0xc0] sm:$0xff]
    %v2630 = vld [vmem:[#allocation5 + $0xc8] sm:$0xff]
    %v2631 = vld [vmem:[#allocation5 + $0xd0] sm:$0xff]
    %v2632 = vld [vmem:[#allocation5 + $0xd8] sm:$0xff]
    %v2633 = vld [vmem:[#allocation5 + $0xe0] sm:$0xff]
    %v2634 = vld [vmem:[#allocation5 + $0xe8] sm:$0xff]
    %v2635 = vld [vmem:[#allocation5 + $0xf0] sm:$0xff]
    %v2636 = vld [vmem:[#allocation5 + $0xf8] sm:$0xff]
    %v2637 = vld [vmem:[%s12] sm:$0xf]
    %v2639 = vlaneseq
    %v2640 = vshrl.u32 %v2639, 7
    %v2641 = vsub.s32 0, %v2640
    %v2642 = vrot.slane %v2637, %v2641
    %v2643 = vlaneseq
    %v2644 = vshrl.u32 %v2643, 7
    %v2645 = vsub.s32 1, %v2644
    %v2646 = vrot.slane %v2637, %v2645
    %v2647 = vlaneseq
    %v2648 = vshrl.u32 %v2647, 7
    %v2649 = vsub.s32 2, %v2648
    %v2650 = vrot.slane %v2637, %v2649
    %v2651 = vlaneseq
    %v2652 = vshrl.u32 %v2651, 7
    %v2653 = vsub.s32 3, %v2652
    %v2654 = vrot.slane %v2637, %v2653
    %2659 = vmatprep.subr.bf16.mxu0 %v2574
    %2660 = vmatpush1.bf16.msra.mxu0 %v2573
    %2661 = vmatprep.subr.bf16.mxu0 %v2578
    %2662 = vmatpush1.bf16.msra.mxu0 %v2577
    %2663 = vmatprep.subr.bf16.mxu0 %v2582
    %2664 = vmatpush1.bf16.msra.mxu0 %v2581
    %2665 = vmatprep.subr.bf16.mxu0 %v2586
    %2666 = vmatpush1.bf16.msra.mxu0 %v2585
    %2667 = vmatprep.subr.bf16.mxu0 %v2590
    %2668 = vmatpush1.bf16.msra.mxu0 %v2589
    %2669 = vmatprep.subr.bf16.mxu0 %v2594
    %2670 = vmatpush1.bf16.msra.mxu0 %v2593
    %2671 = vmatprep.subr.bf16.mxu0 %v2598
    %2672 = vmatpush1.bf16.msra.mxu0 %v2597
    %2673 = vmatprep.subr.bf16.mxu0 %v2602
    %2674 = vmatpush1.bf16.msra.mxu0 %v2601
    %2675 = vmatprep.subr.bf16.mxu0 0
    %2676 = vmatpush1.bf16.msra.mxu0 0
    %2677 = vmatprep.subr.bf16.mxu0 0
    %2678 = vmatpush1.bf16.msra.mxu0 0
    %2679 = vmatprep.subr.bf16.mxu0 0
    %2680 = vmatpush1.bf16.msra.mxu0 0
    %2681 = vmatprep.subr.bf16.mxu0 0
    %2682 = vmatpush1.bf16.msra.mxu0 0
    %2683 = vmatprep.subr.bf16.mxu0 0
    %2684 = vmatpush1.bf16.msra.mxu0 0
    %2685 = vmatprep.subr.bf16.mxu0 0
    %2686 = vmatpush1.bf16.msra.mxu0 0
    %2687 = vmatprep.subr.bf16.mxu0 0
    %2688 = vmatpush1.bf16.msra.mxu0 0
    %2689 = vmatprep.subr.bf16.mxu0 0
    %2690 = vmatpush1.bf16.msra.mxu0 0
    %2691 = vmatprep.mubr.bf16.mxu0 0
    %2692 = vmatmul.mubr.bf16.gmra.mrb[0].mxu0 %v2566
    %v2693 = vpop.f32.mrb[0].mxu0
    %v2694 = vadd.f32 %v2642, %v2693
    %v2695 = vpop.f32.mrb[0].mxu0
    %v2696 = vadd.f32 %v2646, %v2695
    %v2697 = vpop.f32.mrb[0].mxu0
    %v2698 = vadd.f32 %v2642, %v2697
    %v2699 = vpop.f32.mrb[0].mxu0
    %v2700 = vadd.f32 %v2646, %v2699
    %2701 = vmatprep.mubr.bf16.mxu0 0
    %2702 = vmatmul.mubr.bf16.gmra.mrb[0].mxu0 %v2567
    %v2703 = vpop.f32.mrb[0].mxu0
    %v2704 = vadd.f32 %v2642, %v2703
    %v2705 = vpop.f32.mrb[0].mxu0
    %v2706 = vadd.f32 %v2646, %v2705
    %v2707 = vpop.f32.mrb[0].mxu0
    %v2708 = vadd.f32 %v2642, %v2707
    %v2709 = vpop.f32.mrb[0].mxu0
    %v2710 = vadd.f32 %v2646, %v2709
    %2711 = vmatprep.mubr.bf16.mxu0 0
    %2712 = vmatmul.mubr.bf16.gmra.mrb[0].mxu0 %v2568
    %v2713 = vpop.f32.mrb[0].mxu0
    %v2714 = vadd.f32 %v2642, %v2713
    %v2715 = vpop.f32.mrb[0].mxu0
    %v2716 = vadd.f32 %v2646, %v2715
    %v2717 = vpop.f32.mrb[0].mxu0
    %v2718 = vpop.f32.mrb[0].mxu0
    %2719 = vdwg.mxu0
    %2720 = vmatprep.subr.bf16.mxu0 %v2576
    %2721 = vmatpush1.bf16.msra.mxu0 %v2575
    %2722 = vmatprep.subr.bf16.mxu0 %v2580
    %2723 = vmatpush1.bf16.msra.mxu0 %v2579
    %2724 = vmatprep.subr.bf16.mxu0 %v2584
    %2725 = vmatpush1.bf16.msra.mxu0 %v2583
    %2726 = vmatprep.subr.bf16.mxu0 %v2588
    %2727 = vmatpush1.bf16.msra.mxu0 %v2587
    %2728 = vmatprep.subr.bf16.mxu0 %v2592
    %2729 = vmatpush1.bf16.msra.mxu0 %v2591
    %2730 = vmatprep.subr.bf16.mxu0 %v2596
    %2731 = vmatpush1.bf16.msra.mxu0 %v2595
    %2732 = vmatprep.subr.bf16.mxu0 %v2600
    %2733 = vmatpush1.bf16.msra.mxu0 %v2599
    %2734 = vmatprep.subr.bf16.mxu0 %v2604
    %2735 = vmatpush1.bf16.msra.mxu0 %v2603
    %2736 = vmatprep.subr.bf16.mxu0 0
    %2737 = vmatpush1.bf16.msra.mxu0 0
    %2738 = vmatprep.subr.bf16.mxu0 0
    %2739 = vmatpush1.bf16.msra.mxu0 0
    %2740 = vmatprep.subr.bf16.mxu0 0
    %2741 = vmatpush1.bf16.msra.mxu0 0
    %2742 = vmatprep.subr.bf16.mxu0 0
    %2743 = vmatpush1.bf16.msra.mxu0 0
    %2744 = vmatprep.subr.bf16.mxu0 0
    %2745 = vmatpush1.bf16.msra.mxu0 0
    %2746 = vmatprep.subr.bf16.mxu0 0
    %2747 = vmatpush1.bf16.msra.mxu0 0
    %2748 = vmatprep.subr.bf16.mxu0 0
    %2749 = vmatpush1.bf16.msra.mxu0 0
    %2750 = vmatprep.subr.bf16.mxu0 0
    %2751 = vmatpush1.bf16.msra.mxu0 0
    %2752 = vmatprep.mubr.bf16.mxu0 0
    %2753 = vmatmul.mubr.bf16.gmra.mrb[0].mxu0 %v2566
    %v2754 = vpop.f32.mrb[0].mxu0
    %v2755 = vadd.f32 %v2650, %v2754
    %v2756 = vpop.f32.mrb[0].mxu0
    %v2757 = vadd.f32 %v2654, %v2756
    %v2758 = vpop.f32.mrb[0].mxu0
    %v2759 = vadd.f32 %v2650, %v2758
    %v2760 = vpop.f32.mrb[0].mxu0
    %v2761 = vadd.f32 %v2654, %v2760
    %2762 = vmatprep.mubr.bf16.mxu0 0
    %2763 = vmatmul.mubr.bf16.gmra.mrb[0].mxu0 %v2567
    %v2764 = vpop.f32.mrb[0].mxu0
    %v2765 = vadd.f32 %v2650, %v2764
    %v2766 = vpop.f32.mrb[0].mxu0
    %v2767 = vadd.f32 %v2654, %v2766
    %v2768 = vpop.f32.mrb[0].mxu0
    %v2769 = vadd.f32 %v2650, %v2768
    %v2770 = vpop.f32.mrb[0].mxu0
    %v2771 = vadd.f32 %v2654, %v2770
    %2772 = vmatprep.mubr.bf16.mxu0 0
    %2773 = vmatmul.mubr.bf16.gmra.mrb[0].mxu0 %v2568
    %v2774 = vpop.f32.mrb[0].mxu0
    %v2775 = vadd.f32 %v2650, %v2774
    %v2776 = vpop.f32.mrb[0].mxu0
    %v2777 = vadd.f32 %v2654, %v2776
    %v2778 = vpop.f32.mrb[0].mxu0
    %v2779 = vpop.f32.mrb[0].mxu0
    %2780 = vdwg.mxu0
    %2781 = vmatprep.subr.bf16.mxu0 %v2606
    %2782 = vmatpush1.bf16.msra.mxu0 %v2605
    %2783 = vmatprep.subr.bf16.mxu0 %v2610
    %2784 = vmatpush1.bf16.msra.mxu0 %v2609
    %2785 = vmatprep.subr.bf16.mxu0 %v2614
    %2786 = vmatpush1.bf16.msra.mxu0 %v2613
    %2787 = vmatprep.subr.bf16.mxu0 %v2618
    %2788 = vmatpush1.bf16.msra.mxu0 %v2617
    %2789 = vmatprep.subr.bf16.mxu0 %v2622
    %2790 = vmatpush1.bf16.msra.mxu0 %v2621
    %2791 = vmatprep.subr.bf16.mxu0 %v2626
    %2792 = vmatpush1.bf16.msra.mxu0 %v2625
    %2793 = vmatprep.subr.bf16.mxu0 %v2630
    %2794 = vmatpush1.bf16.msra.mxu0 %v2629
    %2795 = vmatprep.subr.bf16.mxu0 %v2634
    %2796 = vmatpush1.bf16.msra.mxu0 %v2633
    %2797 = vmatprep.subr.bf16.mxu0 0
    %2798 = vmatpush1.bf16.msra.mxu0 0
    %2799 = vmatprep.subr.bf16.mxu0 0
    %2800 = vmatpush1.bf16.msra.mxu0 0
    %2801 = vmatprep.subr.bf16.mxu0 0
    %2802 = vmatpush1.bf16.msra.mxu0 0
    %2803 = vmatprep.subr.bf16.mxu0 0
    %2804 = vmatpush1.bf16.msra.mxu0 0
    %2805 = vmatprep.subr.bf16.mxu0 0
    %2806 = vmatpush1.bf16.msra.mxu0 0
    %2807 = vmatprep.subr.bf16.mxu0 0
    %2808 = vmatpush1.bf16.msra.mxu0 0
    %2809 = vmatprep.subr.bf16.mxu0 0
    %2810 = vmatpush1.bf16.msra.mxu0 0
    %2811 = vmatprep.subr.bf16.mxu0 0
    %2812 = vmatpush1.bf16.msra.mxu0 0
    %2813 = vmatprep.mubr.bf16.mxu0 0
    %2814 = vmatmul.mubr.bf16.gmra.mrb[0].mxu0 0
    %v2815 = vpop.f32.mrb[0].mxu0
    %v2816 = vadd.f32 0.0, %v2815
    %v2817 = vpop.f32.mrb[0].mxu0
    %v2818 = vadd.f32 0.0, %v2817
    %v2819 = vpop.f32.mrb[0].mxu0
    %v2820 = vpop.f32.mrb[0].mxu0
    %2821 = vdwg.mxu0
    %2822 = vmatprep.subr.bf16.mxu0 %v2608
    %2823 = vmatpush1.bf16.msra.mxu0 %v2607
    %2824 = vmatprep.subr.bf16.mxu0 %v2612
    %2825 = vmatpush1.bf16.msra.mxu0 %v2611
    %2826 = vmatprep.subr.bf16.mxu0 %v2616
    %2827 = vmatpush1.bf16.msra.mxu0 %v2615
    %2828 = vmatprep.subr.bf16.mxu0 %v2620
    %2829 = vmatpush1.bf16.msra.mxu0 %v2619
    %2830 = vmatprep.subr.bf16.mxu0 %v2624
    %2831 = vmatpush1.bf16.msra.mxu0 %v2623
    %2832 = vmatprep.subr.bf16.mxu0 %v2628
    %2833 = vmatpush1.bf16.msra.mxu0 %v2627
    %2834 = vmatprep.subr.bf16.mxu0 %v2632
    %2835 = vmatpush1.bf16.msra.mxu0 %v2631
    %2836 = vmatprep.subr.bf16.mxu0 %v2636
    %2837 = vmatpush1.bf16.msra.mxu0 %v2635
    %2838 = vmatprep.subr.bf16.mxu0 0
    %2839 = vmatpush1.bf16.msra.mxu0 0
    %2840 = vmatprep.subr.bf16.mxu0 0
    %2841 = vmatpush1.bf16.msra.mxu0 0
    %2842 = vmatprep.subr.bf16.mxu0 0
    %2843 = vmatpush1.bf16.msra.mxu0 0
    %2844 = vmatprep.subr.bf16.mxu0 0
    %2845 = vmatpush1.bf16.msra.mxu0 0
    %2846 = vmatprep.subr.bf16.mxu0 0
    %2847 = vmatpush1.bf16.msra.mxu0 0
    %2848 = vmatprep.subr.bf16.mxu0 0
    %2849 = vmatpush1.bf16.msra.mxu0 0
    %2850 = vmatprep.subr.bf16.mxu0 0
    %2851 = vmatpush1.bf16.msra.mxu0 0
    %2852 = vmatprep.subr.bf16.mxu0 0
    %2853 = vmatpush1.bf16.msra.mxu0 0
    %2854 = vmatprep.mubr.bf16.mxu0 0
    %2855 = vmatmul.mubr.bf16.gmra.mrb[0].mxu0 0
    %v2856 = vpop.f32.mrb[0].mxu0
    %v2857 = vadd.f32 0.0, %v2856
    %v2858 = vpop.f32.mrb[0].mxu0
    %v2859 = vadd.f32 0.0, %v2858
    %v2860 = vpop.f32.mrb[0].mxu0
    %v2861 = vpop.f32.mrb[0].mxu0
    %2862 = vdwg.mxu0
    %v2863 = vadd.f32 %v2694, %v2816
    %v2864 = vadd.f32 %v2696, %v2818
    %v2865 = vadd.f32 %v2755, %v2857
    %v2866 = vadd.f32 %v2757, %v2859
    %v2867 = vxor.u32 %v2863, 2147483648
    %v2868 = vxor.u32 %v2864, 2147483648
    %v2869 = vxor.u32 %v2865, 2147483648
    %v2870 = vmul.f32 %v2867, 1.442695
    %v2871 = vpow.pop %v2870
    %v2872 = vmul.f32 %v2868, 1.442695
    %v2873 = vpow.pop %v2872
    %v2874 = vmul.f32 %v2869, 1.442695
    %v2875 = vpow.pop %v2874
    %v2876 = vadd.f32 %v2871, 1.0
    %v2877 = vadd.f32 %v2873, 1.0
    %v2878 = vadd.f32 %v2875, 1.0
    %v2879 = vrcp.pop %v2876
    %v2880 = vmul.f32 1.0, %v2879
    %v2881 = vrcp.pop %v2877
    %v2882 = vmul.f32 1.0, %v2881
    %v2883 = vrcp.pop %v2878
    %v2884 = vmul.f32 1.0, %v2883
    %v2885 = vtanh.pop %v2866
    %v2886 = vmul.f32 %v2882, 0.0
    %v2887 = vmul.f32 %v2880, %v2885
    %v2888 = vadd.f32 %v2886, %v2887
    %v2889 = vtanh.pop %v2888
    %v2890 = vmul.f32 %v2884, %v2889
    %v2891 = vpack.c.bf16 %v2890, %v2890
    %2892 = vmatprep.subr.bf16.mxu0 %v2606
    %2893 = vmatpush1.bf16.msra.mxu0 %v2605
    %2894 = vmatprep.subr.bf16.mxu0 %v2610
    %2895 = vmatpush1.bf16.msra.mxu0 %v2609
    %2896 = vmatprep.subr.bf16.mxu0 %v2614
    %2897 = vmatpush1.bf16.msra.mxu0 %v2613
    %2898 = vmatprep.subr.bf16.mxu0 %v2618
    %2899 = vmatpush1.bf16.msra.mxu0 %v2617
    %2900 = vmatprep.subr.bf16.mxu0 %v2622
    %2901 = vmatpush1.bf16.msra.mxu0 %v2621
    %2902 = vmatprep.subr.bf16.mxu0 %v2626
    %2903 = vmatpush1.bf16.msra.mxu0 %v2625
    %2904 = vmatprep.subr.bf16.mxu0 %v2630
    %2905 = vmatpush1.bf16.msra.mxu0 %v2629
    %2906 = vmatprep.subr.bf16.mxu0 %v2634
    %2907 = vmatpush1.bf16.msra.mxu0 %v2633
    %2908 = vmatprep.subr.bf16.mxu0 0
    %2909 = vmatpush1.bf16.msra.mxu0 0
    %2910 = vmatprep.subr.bf16.mxu0 0
    %2911 = vmatpush1.bf16.msra.mxu0 0
    %2912 = vmatprep.subr.bf16.mxu0 0
    %2913 = vmatpush1.bf16.msra.mxu0 0
    %2914 = vmatprep.subr.bf16.mxu0 0
    %2915 = vmatpush1.bf16.msra.mxu0 0
    %2916 = vmatprep.subr.bf16.mxu0 0
    %2917 = vmatpush1.bf16.msra.mxu0 0
    %2918 = vmatprep.subr.bf16.mxu0 0
    %2919 = vmatpush1.bf16.msra.mxu0 0
    %2920 = vmatprep.subr.bf16.mxu0 0
    %2921 = vmatpush1.bf16.msra.mxu0 0
    %2922 = vmatprep.subr.bf16.mxu0 0
    %2923 = vmatpush1.bf16.msra.mxu0 0
    %2924 = vmatprep.mubr.bf16.mxu0 0
    %2925 = vmatmul.mubr.bf16.gmra.mrb[0].mxu0 %v2891
    %v2926 = vpop.f32.mrb[0].mxu0
    %v2927 = vadd.f32 0.0, %v2926
    %v2928 = vpop.f32.mrb[0].mxu0
    %v2929 = vadd.f32 0.0, %v2928
    %v2930 = vpop.f32.mrb[0].mxu0
    %v2931 = vpop.f32.mrb[0].mxu0
    %2932 = vdwg.mxu0
    %2933 = vmatprep.subr.bf16.mxu0 %v2608
    %2934 = vmatpush1.bf16.msra.mxu0 %v2607
    %2935 = vmatprep.subr.bf16.mxu0 %v2612
    %2936 = vmatpush1.bf16.msra.mxu0 %v2611
    %2937 = vmatprep.subr.bf16.mxu0 %v2616
    %2938 = vmatpush1.bf16.msra.mxu0 %v2615
    %2939 = vmatprep.subr.bf16.mxu0 %v2620
    %2940 = vmatpush1.bf16.msra.mxu0 %v2619
    %2941 = vmatprep.subr.bf16.mxu0 %v2624
    %2942 = vmatpush1.bf16.msra.mxu0 %v2623
    %2943 = vmatprep.subr.bf16.mxu0 %v2628
    %2944 = vmatpush1.bf16.msra.mxu0 %v2627
    %2945 = vmatprep.subr.bf16.mxu0 %v2632
    %2946 = vmatpush1.bf16.msra.mxu0 %v2631
    %2947 = vmatprep.subr.bf16.mxu0 %v2636
    %2948 = vmatpush1.bf16.msra.mxu0 %v2635
    %2949 = vmatprep.subr.bf16.mxu0 0
    %2950 = vmatpush1.bf16.msra.mxu0 0
    %2951 = vmatprep.subr.bf16.mxu0 0
    %2952 = vmatpush1.bf16.msra.mxu0 0
    %2953 = vmatprep.subr.bf16.mxu0 0
    %2954 = vmatpush1.bf16.msra.mxu0 0
    %2955 = vmatprep.subr.bf16.mxu0 0
    %2956 = vmatpush1.bf16.msra.mxu0 0
    %2957 = vmatprep.subr.bf16.mxu0 0
    %2958 = vmatpush1.bf16.msra.mxu0 0
    %2959 = vmatprep.subr.bf16.mxu0 0
    %2960 = vmatpush1.bf16.msra.mxu0 0
    %2961 = vmatprep.subr.bf16.mxu0 0
    %2962 = vmatpush1.bf16.msra.mxu0 0
    %2963 = vmatprep.subr.bf16.mxu0 0
    %2964 = vmatpush1.bf16.msra.mxu0 0
    %2965 = vmatprep.mubr.bf16.mxu0 0
    %2966 = vmatmul.mubr.bf16.gmra.mrb[0].mxu0 %v2891
    %v2967 = vpop.f32.mrb[0].mxu0
    %v2968 = vadd.f32 0.0, %v2967
    %v2969 = vpop.f32.mrb[0].mxu0
    %v2970 = vadd.f32 0.0, %v2969
    %v2971 = vpop.f32.mrb[0].mxu0
    %v2972 = vpop.f32.mrb[0].mxu0
    %2973 = vdwg.mxu0
    %v2974 = vadd.f32 %v2698, %v2927
    %v2975 = vadd.f32 %v2700, %v2929
    %v2976 = vadd.f32 %v2759, %v2968
    %v2977 = vadd.f32 %v2761, %v2970
    %v2978 = vxor.u32 %v2974, 2147483648
    %v2979 = vxor.u32 %v2975, 2147483648
    %v2980 = vxor.u32 %v2976, 2147483648
    %v2981 = vmul.f32 %v2978, 1.442695
    %v2982 = vpow.pop %v2981
    %v2983 = vmul.f32 %v2979, 1.442695
    %v2984 = vpow.pop %v2983
    %v2985 = vmul.f32 %v2980, 1.442695
    %v2986 = vpow.pop %v2985
    %v2987 = vadd.f32 %v2982, 1.0
    %v2988 = vadd.f32 %v2984, 1.0
    %v2989 = vadd.f32 %v2986, 1.0
    %v2990 = vrcp.pop %v2987
    %v2991 = vmul.f32 1.0, %v2990
    %v2992 = vrcp.pop %v2988
    %v2993 = vmul.f32 1.0, %v2992
    %v2994 = vrcp.pop %v2989
    %v2995 = vmul.f32 1.0, %v2994
    %v2996 = vtanh.pop %v2977
    %v2997 = vmul.f32 %v2993, %v2888
    %v2998 = vmul.f32 %v2991, %v2996
    %v2999 = vadd.f32 %v2997, %v2998
    %v3000 = vtanh.pop %v2999
    %v3001 = vmul.f32 %v2995, %v3000
    %v3002 = vpack.c.bf16 %v3001, %v3001
    %3003 = vmatprep.subr.bf16.mxu0 %v2606
    %3004 = vmatpush1.bf16.msra.mxu0 %v2605
    %3005 = vmatprep.subr.bf16.mxu0 %v2610
    %3006 = vmatpush1.bf16.msra.mxu0 %v2609
    %3007 = vmatprep.subr.bf16.mxu0 %v2614
    %3008 = vmatpush1.bf16.msra.mxu0 %v2613
    %3009 = vmatprep.subr.bf16.mxu0 %v2618
    %3010 = vmatpush1.bf16.msra.mxu0 %v2617
    %3011 = vmatprep.subr.bf16.mxu0 %v2622
    %3012 = vmatpush1.bf16.msra.mxu0 %v2621
    %3013 = vmatprep.subr.bf16.mxu0 %v2626
    %3014 = vmatpush1.bf16.msra.mxu0 %v2625
    %3015 = vmatprep.subr.bf16.mxu0 %v2630
    %3016 = vmatpush1.bf16.msra.mxu0 %v2629
    %3017 = vmatprep.subr.bf16.mxu0 %v2634
    %3018 = vmatpush1.bf16.msra.mxu0 %v2633
    %3019 = vmatprep.subr.bf16.mxu0 0
    %3020 = vmatpush1.bf16.msra.mxu0 0
    %3021 = vmatprep.subr.bf16.mxu0 0
    %3022 = vmatpush1.bf16.msra.mxu0 0
    %3023 = vmatprep.subr.bf16.mxu0 0
    %3024 = vmatpush1.bf16.msra.mxu0 0
    %3025 = vmatprep.subr.bf16.mxu0 0
    %3026 = vmatpush1.bf16.msra.mxu0 0
    %3027 = vmatprep.subr.bf16.mxu0 0
    %3028 = vmatpush1.bf16.msra.mxu0 0
    %3029 = vmatprep.subr.bf16.mxu0 0
    %3030 = vmatpush1.bf16.msra.mxu0 0
    %3031 = vmatprep.subr.bf16.mxu0 0
    %3032 = vmatpush1.bf16.msra.mxu0 0
    %3033 = vmatprep.subr.bf16.mxu0 0
    %3034 = vmatpush1.bf16.msra.mxu0 0
    %3035 = vmatprep.mubr.bf16.mxu0 0
    %3036 = vmatmul.mubr.bf16.gmra.mrb[0].mxu0 %v3002
    %v3037 = vpop.f32.mrb[0].mxu0
    %v3038 = vadd.f32 0.0, %v3037
    %v3039 = vpop.f32.mrb[0].mxu0
    %v3040 = vadd.f32 0.0, %v3039
    %v3041 = vpop.f32.mrb[0].mxu0
    %v3042 = vpop.f32.mrb[0].mxu0
    %3043 = vdwg.mxu0
    %3044 = vmatprep.subr.bf16.mxu0 %v2608
    %3045 = vmatpush1.bf16.msra.mxu0 %v2607
    %3046 = vmatprep.subr.bf16.mxu0 %v2612
    %3047 = vmatpush1.bf16.msra.mxu0 %v2611
    %3048 = vmatprep.subr.bf16.mxu0 %v2616
    %3049 = vmatpush1.bf16.msra.mxu0 %v2615
    %3050 = vmatprep.subr.bf16.mxu0 %v2620
    %3051 = vmatpush1.bf16.msra.mxu0 %v2619
    %3052 = vmatprep.subr.bf16.mxu0 %v2624
    %3053 = vmatpush1.bf16.msra.mxu0 %v2623
    %3054 = vmatprep.subr.bf16.mxu0 %v2628
    %3055 = vmatpush1.bf16.msra.mxu0 %v2627
    %3056 = vmatprep.subr.bf16.mxu0 %v2632
    %3057 = vmatpush1.bf16.msra.mxu0 %v2631
    %3058 = vmatprep.subr.bf16.mxu0 %v2636
    %3059 = vmatpush1.bf16.msra.mxu0 %v2635
    %3060 = vmatprep.subr.bf16.mxu0 0
    %3061 = vmatpush1.bf16.msra.mxu0 0
    %3062 = vmatprep.subr.bf16.mxu0 0
    %3063 = vmatpush1.bf16.msra.mxu0 0
    %3064 = vmatprep.subr.bf16.mxu0 0
    %3065 = vmatpush1.bf16.msra.mxu0 0
    %3066 = vmatprep.subr.bf16.mxu0 0
    %3067 = vmatpush1.bf16.msra.mxu0 0
    %3068 = vmatprep.subr.bf16.mxu0 0
    %3069 = vmatpush1.bf16.msra.mxu0 0
    %3070 = vmatprep.subr.bf16.mxu0 0
    %3071 = vmatpush1.bf16.msra.mxu0 0
    %3072 = vmatprep.subr.bf16.mxu0 0
    %3073 = vmatpush1.bf16.msra.mxu0 0
    %3074 = vmatprep.subr.bf16.mxu0 0
    %3075 = vmatpush1.bf16.msra.mxu0 0
    %3076 = vmatprep.mubr.bf16.mxu0 0
    %3077 = vmatmul.mubr.bf16.gmra.mrb[0].mxu0 %v3002
    %v3078 = vpop.f32.mrb[0].mxu0
    %v3079 = vadd.f32 0.0, %v3078
    %v3080 = vpop.f32.mrb[0].mxu0
    %v3081 = vadd.f32 0.0, %v3080
    %v3082 = vpop.f32.mrb[0].mxu0
    %v3083 = vpop.f32.mrb[0].mxu0
    %3084 = vdwg.mxu0
    %v3085 = vadd.f32 %v2704, %v3038
    %v3086 = vadd.f32 %v2706, %v3040
    %v3087 = vadd.f32 %v2765, %v3079
    %v3088 = vadd.f32 %v2767, %v3081
    %v3089 = vxor.u32 %v3085, 2147483648
    %v3090 = vxor.u32 %v3086, 2147483648
    %v3091 = vxor.u32 %v3087, 2147483648
    %v3092 = vmul.f32 %v3089, 1.442695
    %v3093 = vpow.pop %v3092
    %v3094 = vmul.f32 %v3090, 1.442695
    %v3095 = vpow.pop %v3094
    %v3096 = vmul.f32 %v3091, 1.442695
    %v3097 = vpow.pop %v3096
    %v3098 = vadd.f32 %v3093, 1.0
    %v3099 = vadd.f32 %v3095, 1.0
    %v3100 = vadd.f32 %v3097, 1.0
    %v3101 = vrcp.pop %v3098
    %v3102 = vmul.f32 1.0, %v3101
    %v3103 = vrcp.pop %v3099
    %v3104 = vmul.f32 1.0, %v3103
    %v3105 = vrcp.pop %v3100
    %v3106 = vmul.f32 1.0, %v3105
    %v3107 = vtanh.pop %v3088
    %v3108 = vmul.f32 %v3104, %v2999
    %v3109 = vmul.f32 %v3102, %v3107
    %v3110 = vadd.f32 %v3108, %v3109
    %v3111 = vtanh.pop %v3110
    %v3112 = vmul.f32 %v3106, %v3111
    %v3113 = vpack.c.bf16 %v3112, %v3112
    %3114 = vmatprep.subr.bf16.mxu0 %v2606
    %3115 = vmatpush1.bf16.msra.mxu0 %v2605
    %3116 = vmatprep.subr.bf16.mxu0 %v2610
    %3117 = vmatpush1.bf16.msra.mxu0 %v2609
    %3118 = vmatprep.subr.bf16.mxu0 %v2614
    %3119 = vmatpush1.bf16.msra.mxu0 %v2613
    %3120 = vmatprep.subr.bf16.mxu0 %v2618
    %3121 = vmatpush1.bf16.msra.mxu0 %v2617
    %3122 = vmatprep.subr.bf16.mxu0 %v2622
    %3123 = vmatpush1.bf16.msra.mxu0 %v2621
    %3124 = vmatprep.subr.bf16.mxu0 %v2626
    %3125 = vmatpush1.bf16.msra.mxu0 %v2625
    %3126 = vmatprep.subr.bf16.mxu0 %v2630
    %3127 = vmatpush1.bf16.msra.mxu0 %v2629
    %3128 = vmatprep.subr.bf16.mxu0 %v2634
    %3129 = vmatpush1.bf16.msra.mxu0 %v2633
    %3130 = vmatprep.subr.bf16.mxu0 0
    %3131 = vmatpush1.bf16.msra.mxu0 0
    %3132 = vmatprep.subr.bf16.mxu0 0
    %3133 = vmatpush1.bf16.msra.mxu0 0
    %3134 = vmatprep.subr.bf16.mxu0 0
    %3135 = vmatpush1.bf16.msra.mxu0 0
    %3136 = vmatprep.subr.bf16.mxu0 0
    %3137 = vmatpush1.bf16.msra.mxu0 0
    %3138 = vmatprep.subr.bf16.mxu0 0
    %3139 = vmatpush1.bf16.msra.mxu0 0
    %3140 = vmatprep.subr.bf16.mxu0 0
    %3141 = vmatpush1.bf16.msra.mxu0 0
    %3142 = vmatprep.subr.bf16.mxu0 0
    %3143 = vmatpush1.bf16.msra.mxu0 0
    %3144 = vmatprep.subr.bf16.mxu0 0
    %3145 = vmatpush1.bf16.msra.mxu0 0
    %3146 = vmatprep.mubr.bf16.mxu0 0
    %3147 = vmatmul.mubr.bf16.gmra.mrb[0].mxu0 %v3113
    %v3148 = vpop.f32.mrb[0].mxu0
    %v3149 = vadd.f32 0.0, %v3148
    %v3150 = vpop.f32.mrb[0].mxu0
    %v3151 = vadd.f32 0.0, %v3150
    %v3152 = vpop.f32.mrb[0].mxu0
    %v3153 = vpop.f32.mrb[0].mxu0
    %3154 = vdwg.mxu0
    %3155 = vmatprep.subr.bf16.mxu0 %v2608
    %3156 = vmatpush1.bf16.msra.mxu0 %v2607
    %3157 = vmatprep.subr.bf16.mxu0 %v2612
    %3158 = vmatpush1.bf16.msra.mxu0 %v2611
    %3159 = vmatprep.subr.bf16.mxu0 %v2616
    %3160 = vmatpush1.bf16.msra.mxu0 %v2615
    %3161 = vmatprep.subr.bf16.mxu0 %v2620
    %3162 = vmatpush1.bf16.msra.mxu0 %v2619
    %3163 = vmatprep.subr.bf16.mxu0 %v2624
    %3164 = vmatpush1.bf16.msra.mxu0 %v2623
    %3165 = vmatprep.subr.bf16.mxu0 %v2628
    %3166 = vmatpush1.bf16.msra.mxu0 %v2627
    %3167 = vmatprep.subr.bf16.mxu0 %v2632
    %3168 = vmatpush1.bf16.msra.mxu0 %v2631
    %3169 = vmatprep.subr.bf16.mxu0 %v2636
    %3170 = vmatpush1.bf16.msra.mxu0 %v2635
    %3171 = vmatprep.subr.bf16.mxu0 0
    %3172 = vmatpush1.bf16.msra.mxu0 0
    %3173 = vmatprep.subr.bf16.mxu0 0
    %3174 = vmatpush1.bf16.msra.mxu0 0
    %3175 = vmatprep.subr.bf16.mxu0 0
    %3176 = vmatpush1.bf16.msra.mxu0 0
    %3177 = vmatprep.subr.bf16.mxu0 0
    %3178 = vmatpush1.bf16.msra.mxu0 0
    %3179 = vmatprep.subr.bf16.mxu0 0
    %3180 = vmatpush1.bf16.msra.mxu0 0
    %3181 = vmatprep.subr.bf16.mxu0 0
    %3182 = vmatpush1.bf16.msra.mxu0 0
    %3183 = vmatprep.subr.bf16.mxu0 0
    %3184 = vmatpush1.bf16.msra.mxu0 0
    %3185 = vmatprep.subr.bf16.mxu0 0
    %3186 = vmatpush1.bf16.msra.mxu0 0
    %3187 = vmatprep.mubr.bf16.mxu0 0
    %3188 = vmatmul.mubr.bf16.gmra.mrb[0].mxu0 %v3113
    %v3189 = vpop.f32.mrb[0].mxu0
    %v3190 = vadd.f32 0.0, %v3189
    %v3191 = vpop.f32.mrb[0].mxu0
    %v3192 = vadd.f32 0.0, %v3191
    %v3193 = vpop.f32.mrb[0].mxu0
    %v3194 = vpop.f32.mrb[0].mxu0
    %3195 = vdwg.mxu0
    %v3196 = vadd.f32 %v2708, %v3149
    %v3197 = vadd.f32 %v2710, %v3151
    %v3198 = vadd.f32 %v2769, %v3190
    %v3199 = vadd.f32 %v2771, %v3192
    %v3200 = vxor.u32 %v3196, 2147483648
    %v3201 = vxor.u32 %v3197, 2147483648
    %v3202 = vxor.u32 %v3198, 2147483648
    %v3203 = vmul.f32 %v3200, 1.442695
    %v3204 = vpow.pop %v3203
    %v3205 = vmul.f32 %v3201, 1.442695
    %v3206 = vpow.pop %v3205
    %v3207 = vmul.f32 %v3202, 1.442695
    %v3208 = vpow.pop %v3207
    %v3209 = vadd.f32 %v3204, 1.0
    %v3210 = vadd.f32 %v3206, 1.0
    %v3211 = vadd.f32 %v3208, 1.0
    %v3212 = vrcp.pop %v3209
    %v3213 = vmul.f32 1.0, %v3212
    %v3214 = vrcp.pop %v3210
    %v3215 = vmul.f32 1.0, %v3214
    %v3216 = vrcp.pop %v3211
    %v3217 = vmul.f32 1.0, %v3216
    %v3218 = vtanh.pop %v3199
    %v3219 = vmul.f32 %v3215, %v3110
    %v3220 = vmul.f32 %v3213, %v3218
    %v3221 = vadd.f32 %v3219, %v3220
    %v3222 = vtanh.pop %v3221
    %v3223 = vmul.f32 %v3217, %v3222
    %v3224 = vpack.c.bf16 %v3223, %v3223
    %3225 = vmatprep.subr.bf16.mxu0 %v2606
    %3226 = vmatpush1.bf16.msra.mxu0 %v2605
    %3227 = vmatprep.subr.bf16.mxu0 %v2610
    %3228 = vmatpush1.bf16.msra.mxu0 %v2609
    %3229 = vmatprep.subr.bf16.mxu0 %v2614
    %3230 = vmatpush1.bf16.msra.mxu0 %v2613
    %3231 = vmatprep.subr.bf16.mxu0 %v2618
    %3232 = vmatpush1.bf16.msra.mxu0 %v2617
    %3233 = vmatprep.subr.bf16.mxu0 %v2622
    %3234 = vmatpush1.bf16.msra.mxu0 %v2621
    %3235 = vmatprep.subr.bf16.mxu0 %v2626
    %3236 = vmatpush1.bf16.msra.mxu0 %v2625
    %3237 = vmatprep.subr.bf16.mxu0 %v2630
    %3238 = vmatpush1.bf16.msra.mxu0 %v2629
    %3239 = vmatprep.subr.bf16.mxu0 %v2634
    %3240 = vmatpush1.bf16.msra.mxu0 %v2633
    %3241 = vmatprep.subr.bf16.mxu0 0
    %3242 = vmatpush1.bf16.msra.mxu0 0
    %3243 = vmatprep.subr.bf16.mxu0 0
    %3244 = vmatpush1.bf16.msra.mxu0 0
    %3245 = vmatprep.subr.bf16.mxu0 0
    %3246 = vmatpush1.bf16.msra.mxu0 0
    %3247 = vmatprep.subr.bf16.mxu0 0
    %3248 = vmatpush1.bf16.msra.mxu0 0
    %3249 = vmatprep.subr.bf16.mxu0 0
    %3250 = vmatpush1.bf16.msra.mxu0 0
    %3251 = vmatprep.subr.bf16.mxu0 0
    %3252 = vmatpush1.bf16.msra.mxu0 0
    %3253 = vmatprep.subr.bf16.mxu0 0
    %3254 = vmatpush1.bf16.msra.mxu0 0
    %3255 = vmatprep.subr.bf16.mxu0 0
    %3256 = vmatpush1.bf16.msra.mxu0 0
    %3257 = vmatprep.mubr.bf16.mxu0 0
    %3258 = vmatmul.mubr.bf16.gmra.mrb[0].mxu0 %v3224
    %v3259 = vpop.f32.mrb[0].mxu0
    %v3260 = vadd.f32 0.0, %v3259
    %v3261 = vpop.f32.mrb[0].mxu0
    %v3262 = vadd.f32 0.0, %v3261
    %v3263 = vpop.f32.mrb[0].mxu0
    %v3264 = vpop.f32.mrb[0].mxu0
    %3265 = vdwg.mxu0
    %3266 = vmatprep.subr.bf16.mxu0 %v2608
    %3267 = vmatpush1.bf16.msra.mxu0 %v2607
    %3268 = vmatprep.subr.bf16.mxu0 %v2612
    %3269 = vmatpush1.bf16.msra.mxu0 %v2611
    %3270 = vmatprep.subr.bf16.mxu0 %v2616
    %3271 = vmatpush1.bf16.msra.mxu0 %v2615
    %3272 = vmatprep.subr.bf16.mxu0 %v2620
    %3273 = vmatpush1.bf16.msra.mxu0 %v2619
    %3274 = vmatprep.subr.bf16.mxu0 %v2624
    %3275 = vmatpush1.bf16.msra.mxu0 %v2623
    %3276 = vmatprep.subr.bf16.mxu0 %v2628
    %3277 = vmatpush1.bf16.msra.mxu0 %v2627
    %3278 = vmatprep.subr.bf16.mxu0 %v2632
    %3279 = vmatpush1.bf16.msra.mxu0 %v2631
    %3280 = vmatprep.subr.bf16.mxu0 %v2636
    %3281 = vmatpush1.bf16.msra.mxu0 %v2635
    %3282 = vmatprep.subr.bf16.mxu0 0
    %3283 = vmatpush1.bf16.msra.mxu0 0
    %3284 = vmatprep.subr.bf16.mxu0 0
    %3285 = vmatpush1.bf16.msra.mxu0 0
    %3286 = vmatprep.subr.bf16.mxu0 0
    %3287 = vmatpush1.bf16.msra.mxu0 0
    %3288 = vmatprep.subr.bf16.mxu0 0
    %3289 = vmatpush1.bf16.msra.mxu0 0
    %3290 = vmatprep.subr.bf16.mxu0 0
    %3291 = vmatpush1.bf16.msra.mxu0 0
    %3292 = vmatprep.subr.bf16.mxu0 0
    %3293 = vmatpush1.bf16.msra.mxu0 0
    %3294 = vmatprep.subr.bf16.mxu0 0
    %3295 = vmatpush1.bf16.msra.mxu0 0
    %3296 = vmatprep.subr.bf16.mxu0 0
    %3297 = vmatpush1.bf16.msra.mxu0 0
    %3298 = vmatprep.mubr.bf16.mxu0 0
    %3299 = vmatmul.mubr.bf16.gmra.mrb[0].mxu0 %v3224
    %v3300 = vpop.f32.mrb[0].mxu0
    %v3301 = vadd.f32 0.0, %v3300
    %v3302 = vpop.f32.mrb[0].mxu0
    %v3303 = vadd.f32 0.0, %v3302
    %v3304 = vpop.f32.mrb[0].mxu0
    %v3305 = vpop.f32.mrb[0].mxu0
    %3306 = vdwg.mxu0
    %v3307 = vadd.f32 %v2714, %v3260
    %v3308 = vadd.f32 %v2716, %v3262
    %v3309 = vadd.f32 %v2775, %v3301
    %v3310 = vadd.f32 %v2777, %v3303
    %v3311 = vxor.u32 %v3307, 2147483648
    %v3312 = vxor.u32 %v3308, 2147483648
    %v3313 = vxor.u32 %v3309, 2147483648
    %v3314 = vmul.f32 %v3311, 1.442695
    %v3315 = vpow.pop %v3314
    %v3316 = vmul.f32 %v3312, 1.442695
    %v3317 = vpow.pop %v3316
    %v3318 = vmul.f32 %v3313, 1.442695
    %v3319 = vpow.pop %v3318
    %v3320 = vadd.f32 %v3315, 1.0
    %v3321 = vadd.f32 %v3317, 1.0
    %v3322 = vadd.f32 %v3319, 1.0
    %v3323 = vrcp.pop %v3320
    %v3324 = vmul.f32 1.0, %v3323
    %v3325 = vrcp.pop %v3321
    %v3326 = vmul.f32 1.0, %v3325
    %v3327 = vrcp.pop %v3322
    %v3328 = vmul.f32 1.0, %v3327
    %v3329 = vtanh.pop %v3310
    %v3330 = vmul.f32 %v3326, %v3221
    %v3331 = vmul.f32 %v3324, %v3329
    %v3332 = vadd.f32 %v3330, %v3331
    %v3333 = vtanh.pop %v3332
    %v3334 = vmul.f32 %v3328, %v3333
    %s3335 = smul.u32 4, 80
    %s3336 = smul.u32 %s3335, 1
    %s3337 = sshll.u32 %s3336, 4
    %3338 = dma.done %s490, %s3337
    %v3339 = vpack.c.bf16 %v3334, %v3334
    %v3340 = vld [vmem:[#allocation6] sm:$0xff]
    %v3341 = vld [vmem:[#allocation6 + $0x8] sm:$0xff]
    %v3342 = vld [vmem:[#allocation6 + $0x10] sm:$0xff]
    %v3343 = vld [vmem:[#allocation6 + $0x18] sm:$0xff]
    %v3344 = vld [vmem:[#allocation6 + $0x20] sm:$0xff]
    %v3345 = vld [vmem:[#allocation6 + $0x28] sm:$0xff]
    %v3346 = vld [vmem:[#allocation6 + $0x30] sm:$0xff]
    %v3347 = vld [vmem:[#allocation6 + $0x38] sm:$0xff]
    %v3348 = vld [vmem:[#allocation6 + $0x40] sm:$0xff]
    %v3349 = vld [vmem:[#allocation6 + $0x48] sm:$0xff]
    %v3350 = vld [vmem:[#allocation6 + $0x50] sm:$0xff]
    %v3351 = vld [vmem:[#allocation6 + $0x58] sm:$0xff]
    %v3352 = vld [vmem:[#allocation6 + $0x60] sm:$0xff]
    %v3353 = vld [vmem:[#allocation6 + $0x68] sm:$0xff]
    %v3354 = vld [vmem:[#allocation6 + $0x70] sm:$0xff]
    %v3355 = vld [vmem:[#allocation6 + $0x78] sm:$0xff]
    %v3356 = vld [vmem:[#allocation6 + $0x80] sm:$0xff]
    %v3357 = vld [vmem:[#allocation6 + $0x88] sm:$0xff]
    %v3358 = vld [vmem:[#allocation6 + $0x90] sm:$0xff]
    %v3359 = vld [vmem:[#allocation6 + $0x98] sm:$0xff]
    %v3360 = vld [vmem:[#allocation6 + $0xa0] sm:$0xff]
    %v3361 = vld [vmem:[#allocation6 + $0xa8] sm:$0xff]
    %v3362 = vld [vmem:[#allocation6 + $0xb0] sm:$0xff]
    %v3363 = vld [vmem:[#allocation6 + $0xb8] sm:$0xff]
    %v3364 = vld [vmem:[#allocation6 + $0xc0] sm:$0xff]
    %v3365 = vld [vmem:[#allocation6 + $0xc8] sm:$0xff]
    %v3366 = vld [vmem:[#allocation6 + $0xd0] sm:$0xff]
    %v3367 = vld [vmem:[#allocation6 + $0xd8] sm:$0xff]
    %v3368 = vld [vmem:[#allocation6 + $0xe0] sm:$0xff]
    %v3369 = vld [vmem:[#allocation6 + $0xe8] sm:$0xff]
    %v3370 = vld [vmem:[#allocation6 + $0xf0] sm:$0xff]
    %v3371 = vld [vmem:[#allocation6 + $0xf8] sm:$0xff]
    %v3372 = vld [vmem:[#allocation6 + $0x100] sm:$0xff]
    %v3373 = vld [vmem:[#allocation6 + $0x108] sm:$0xff]
    %v3374 = vld [vmem:[#allocation6 + $0x110] sm:$0xff]
    %v3375 = vld [vmem:[#allocation6 + $0x118] sm:$0xff]
    %v3376 = vld [vmem:[#allocation6 + $0x120] sm:$0xff]
    %v3377 = vld [vmem:[#allocation6 + $0x128] sm:$0xff]
    %v3378 = vld [vmem:[#allocation6 + $0x130] sm:$0xff]
    %v3379 = vld [vmem:[#allocation6 + $0x138] sm:$0xff]
    %v3380 = vld [vmem:[%s14] sm:$0x1]
    %v3382 = vlaneseq
    %v3383 = vshrl.u32 %v3382, 7
    %v3384 = vsub.s32 0, %v3383
    %v3385 = vrot.slane %v3380, %v3384
    %3387 = vmatprep.subr.bf16.mxu0 0
    %3388 = vmatpush1.bf16.msra.mxu0 %v3340
    %3389 = vmatprep.subr.bf16.mxu0 0
    %3390 = vmatpush1.bf16.msra.mxu0 %v3341
    %3391 = vmatprep.subr.bf16.mxu0 0
    %3392 = vmatpush1.bf16.msra.mxu0 %v3342
    %3393 = vmatprep.subr.bf16.mxu0 0
    %3394 = vmatpush1.bf16.msra.mxu0 %v3343
    %3395 = vmatprep.subr.bf16.mxu0 0
    %3396 = vmatpush1.bf16.msra.mxu0 %v3344
    %3397 = vmatprep.subr.bf16.mxu0 0
    %3398 = vmatpush1.bf16.msra.mxu0 %v3345
    %3399 = vmatprep.subr.bf16.mxu0 0
    %3400 = vmatpush1.bf16.msra.mxu0 %v3346
    %3401 = vmatprep.subr.bf16.mxu0 0
    %3402 = vmatpush1.bf16.msra.mxu0 %v3347
    %3403 = vmatprep.subr.bf16.mxu0 0
    %3404 = vmatpush1.bf16.msra.mxu0 %v3348
    %3405 = vmatprep.subr.bf16.mxu0 0
    %3406 = vmatpush1.bf16.msra.mxu0 %v3349
    %3407 = vmatprep.subr.bf16.mxu0 0
    %3408 = vmatpush1.bf16.msra.mxu0 %v3350
    %3409 = vmatprep.subr.bf16.mxu0 0
    %3410 = vmatpush1.bf16.msra.mxu0 %v3351
    %3411 = vmatprep.subr.bf16.mxu0 0
    %3412 = vmatpush1.bf16.msra.mxu0 %v3352
    %3413 = vmatprep.subr.bf16.mxu0 0
    %3414 = vmatpush1.bf16.msra.mxu0 %v3353
    %3415 = vmatprep.subr.bf16.mxu0 0
    %3416 = vmatpush1.bf16.msra.mxu0 %v3354
    %3417 = vmatprep.subr.bf16.mxu0 0
    %3418 = vmatpush1.bf16.msra.mxu0 %v3355
    %3419 = vmatprep.mubr.bf16.mxu0 %v3002
    %3420 = vmatmul.mubr.bf16.gmra.mrb[0].mxu0 %v2891
    %v3421 = vpop.f32.mrb[0].mxu0
    %v3422 = vadd.f32 %v3385, %v3421
    %v3423 = vpop.f32.mrb[0].mxu0
    %v3424 = vpop.f32.mrb[0].mxu0
    %v3425 = vpop.f32.mrb[0].mxu0
    %3426 = vdwg.mxu0
    %3427 = vmatprep.subr.bf16.mxu0 0
    %3428 = vmatpush1.bf16.msra.mxu0 %v3356
    %3429 = vmatprep.subr.bf16.mxu0 0
    %3430 = vmatpush1.bf16.msra.mxu0 %v3357
    %3431 = vmatprep.subr.bf16.mxu0 0
    %3432 = vmatpush1.bf16.msra.mxu0 %v3358
    %3433 = vmatprep.subr.bf16.mxu0 0
    %3434 = vmatpush1.bf16.msra.mxu0 %v3359
    %3435 = vmatprep.subr.bf16.mxu0 0
    %3436 = vmatpush1.bf16.msra.mxu0 %v3360
    %3437 = vmatprep.subr.bf16.mxu0 0
    %3438 = vmatpush1.bf16.msra.mxu0 %v3361
    %3439 = vmatprep.subr.bf16.mxu0 0
    %3440 = vmatpush1.bf16.msra.mxu0 %v3362
    %3441 = vmatprep.subr.bf16.mxu0 0
    %3442 = vmatpush1.bf16.msra.mxu0 %v3363
    %3443 = vmatprep.subr.bf16.mxu0 0
    %3444 = vmatpush1.bf16.msra.mxu0 %v3364
    %3445 = vmatprep.subr.bf16.mxu0 0
    %3446 = vmatpush1.bf16.msra.mxu0 %v3365
    %3447 = vmatprep.subr.bf16.mxu0 0
    %3448 = vmatpush1.bf16.msra.mxu0 %v3366
    %3449 = vmatprep.subr.bf16.mxu0 0
    %3450 = vmatpush1.bf16.msra.mxu0 %v3367
    %3451 = vmatprep.subr.bf16.mxu0 0
    %3452 = vmatpush1.bf16.msra.mxu0 %v3368
    %3453 = vmatprep.subr.bf16.mxu0 0
    %3454 = vmatpush1.bf16.msra.mxu0 %v3369
    %3455 = vmatprep.subr.bf16.mxu0 0
    %3456 = vmatpush1.bf16.msra.mxu0 %v3370
    %3457 = vmatprep.subr.bf16.mxu0 0
    %3458 = vmatpush1.bf16.msra.mxu0 %v3371
    %3459 = vmatprep.mubr.bf16.mxu0 %v3224
    %3460 = vmatmul.mubr.bf16.gmra.mrb[0].mxu0 %v3113
    %v3461 = vpop.f32.mrb[0].mxu0
    %v3462 = vadd.f32 %v3422, %v3461
    %v3463 = vpop.f32.mrb[0].mxu0
    %v3464 = vpop.f32.mrb[0].mxu0
    %v3465 = vpop.f32.mrb[0].mxu0
    %3466 = vdwg.mxu0
    %3467 = vmatprep.subr.bf16.mxu0 0
    %3468 = vmatpush1.bf16.msra.mxu0 %v3372
    %3469 = vmatprep.subr.bf16.mxu0 0
    %3470 = vmatpush1.bf16.msra.mxu0 %v3373
    %3471 = vmatprep.subr.bf16.mxu0 0
    %3472 = vmatpush1.bf16.msra.mxu0 %v3374
    %3473 = vmatprep.subr.bf16.mxu0 0
    %3474 = vmatpush1.bf16.msra.mxu0 %v3375
    %3475 = vmatprep.subr.bf16.mxu0 0
    %3476 = vmatpush1.bf16.msra.mxu0 %v3376
    %3477 = vmatprep.subr.bf16.mxu0 0
    %3478 = vmatpush1.bf16.msra.mxu0 %v3377
    %3479 = vmatprep.subr.bf16.mxu0 0
    %3480 = vmatpush1.bf16.msra.mxu0 %v3378
    %3481 = vmatprep.subr.bf16.mxu0 0
    %3482 = vmatpush1.bf16.msra.mxu0 %v3379
    %3483 = vmatprep.subr.bf16.mxu0 0
    %3484 = vmatpush1.bf16.msra.mxu0 0
    %3485 = vmatprep.subr.bf16.mxu0 0
    %3486 = vmatpush1.bf16.msra.mxu0 0
    %3487 = vmatprep.subr.bf16.mxu0 0
    %3488 = vmatpush1.bf16.msra.mxu0 0
    %3489 = vmatprep.subr.bf16.mxu0 0
    %3490 = vmatpush1.bf16.msra.mxu0 0
    %3491 = vmatprep.subr.bf16.mxu0 0
    %3492 = vmatpush1.bf16.msra.mxu0 0
    %3493 = vmatprep.subr.bf16.mxu0 0
    %3494 = vmatpush1.bf16.msra.mxu0 0
    %3495 = vmatprep.subr.bf16.mxu0 0
    %3496 = vmatpush1.bf16.msra.mxu0 0
    %3497 = vmatprep.subr.bf16.mxu0 0
    %3498 = vmatpush1.bf16.msra.mxu0 0
    %3499 = vmatprep.mubr.bf16.mxu0 0
    %3500 = vmatmul.mubr.bf16.gmra.mrb[0].mxu0 %v3339
    %v3501 = vpop.f32.mrb[0].mxu0
    %v3502 = vadd.f32 %v3462, %v3501
    %v3503 = vpop.f32.mrb[0].mxu0
    %v3504 = vpop.f32.mrb[0].mxu0
    %v3505 = vpop.f32.mrb[0].mxu0
    %3506 = vdwg.mxu0
    %v3507 = vxor.u32 %v3502, 2147483648
    %v3508 = vmul.f32 %v3507, 1.442695
    %v3509 = vpow.pop %v3508
    %v3510 = vadd.f32 %v3509, 1.0
    %v3511 = vrcp.pop %v3510
    %v3512 = vmul.f32 1.0, %v3511
    %3513 = vst [vmem:[%s15] sm:$0xff] %v3512
    // Predicated region
    $region95: #{rnn_forward.1} parent=1 // pred_check
      _
    $region96: #{rnn_forward.1} parent=1 // pred_check_branch
      %3515 = sbr.rel (0) target = $region98
    $region97: #{rnn_forward.1} parent=1 // pred_region
      _
    $region98: #{rnn_forward.1} parent=1 // pred_fallthru
      _
    // Predicated region
    $region99: #{rnn_forward.1} parent=1 // pred_check
      _
    $region100: #{rnn_forward.1} parent=1 // pred_check_branch
      %3517 = sbr.rel (0) target = $region102
    $region101: #{rnn_forward.1} parent=1 // pred_region
      _
    $region102: #{rnn_forward.1} parent=1 // pred_fallthru
      _
    %3518 = vsyncpa [#allocation9], 1
    %3519 = vsyncpa [#allocation11], 1
  %3520 = vsyncmov [#allocation7]
  %s3521 = vpop.sfrf %3520
  %p3522 = scmp.eq.s32.totalorder %s3521, 0
  %p3523 = pneg %p3522
  %3525 = shalt.err (%p3523)
  %s3526 = scalar_lea.sflag [#allocation7], 1
  %3527 = vsyncmov %s3526
  %s3528 = vpop.sfrf %3527
  %p3529 = scmp.eq.s32.totalorder %s3528, 0
  %p3530 = pneg %p3529
  %3532 = shalt.err (%p3530)
  %s3533 = scalar_lea.sflag [#allocation7], 2
  %3534 = vsyncmov %s3533
  %s3535 = vpop.sfrf %3534
  %p3536 = scmp.eq.s32.totalorder %s3535, 0
  %p3537 = pneg %p3536
  %3539 = shalt.err (%p3537)
  %s3540 = scalar_lea.sflag [#allocation7], 3
  %3541 = vsyncmov %s3540
  %s3542 = vpop.sfrf %3541
  %p3543 = scmp.eq.s32.totalorder %s3542, 0
  %p3544 = pneg %p3543
  %3546 = shalt.err (%p3544)
  %s3547 = scalar_lea.sflag [#allocation7], 4
  %3548 = vsyncmov %s3547
  %s3549 = vpop.sfrf %3548
  %p3550 = scmp.eq.s32.totalorder %s3549, 0
  %p3551 = pneg %p3550
  %3553 = shalt.err (%p3551)

</llo_original>
